<compile_context>
chip_gen: v6e
topology: v6e:2x2x1
jax: 0.10.0
libtpu: 0.0.40
codegen_flags: <defaults>
</compile_context>

<pallas_src>
import functools
import math

import jax
import jax.numpy as jnp
from jax import lax
from jax.experimental import pallas as pl
from jax.experimental.pallas import tpu as pltpu
from jax.scipy.special import erf


# ----------------------------- config ---------------------------------------
class Config:
    vocab_size = 11
    block_size = 8            # T
    n_embd = 32               # D
    n_head = 4
    n_layer = 2
    mlp_expansion_ratio = 4
    bias = True
    dropout = 0.0             # eval mode -> dropout is identity
    n_input_cls = 32          # == n_embd (classifier consumes pooled embedding)
    n_hidden_cls = 16
    n_output_cls = 4


EPS = 1e-5
NEG_BIG = -1e9                # finite "minus infinity" for key-padding / cross-batch bias
LANE = 128


# ----------------------------- shared math -----------------------------------
def _layer_norm(v, w, b):
    mu = jnp.mean(v, axis=-1, keepdims=True)
    var = jnp.mean(jnp.square(v - mu), axis=-1, keepdims=True)
    return (v - mu) * jax.lax.rsqrt(var + EPS) * w + b


def _gelu_tanh(x):
    # tanh-approximate GELU: one EUP transcendental instead of a 12-op VALU erf.
    c = math.sqrt(2.0 / math.pi)
    return 0.5 * x * (1.0 + jnp.tanh(c * (x + 0.044715 * (x * x * x))))


def _gelu_exact(x):
    # exact erf GELU (PyTorch nn.GELU default) -- used only by the reference.
    return 0.5 * x * (1.0 + erf(x / math.sqrt(2.0)))


# ----------------------------- fused Pallas kernel ---------------------------
def fused_forward_kernel(n_hidden,
                         x_ref, bias_ref, watt_ref, batt_ref, vec_ref,
                         wfc_ref, wfc2_ref, hvec_ref, whead_ref,
                         logits_ref, att_ref):
    """Whole forward pass: L encoder blocks + ln_f + mean-pool + classifier.

    watt_ref : (L*nh*4, D, dh) bf16   per-head [wq | wk | wv | wproj_rows^T]
    batt_ref : (L*nh*3, 1, dh) f32    per-head [bq | bk | bv]
    vec_ref  : (L*7, 1, 128)   f32    [ln1_w, ln1_b, bproj, ln2_w, ln2_b, bfc2, bfc]
    wfc_ref  : (L, D, H) bf16, wfc2_ref : (L, H, D) bf16
    hvec_ref : (4, 1, 128) f32        [lnf_w, lnf_b, b1, b2]
    whead_ref: (2, D, 128) bf16       [w1 | w2] zero-padded
    """
    BT, D = x_ref.shape
    B, n_out = logits_ref.shape
    T = BT // B
    L = wfc_ref.shape[0]
    H = wfc_ref.shape[2]
    dh = watt_ref.shape[2]
    nh = watt_ref.shape[0] // (L * 4)
    scale = 1.0 / math.sqrt(dh)
    bf16 = jnp.bfloat16
    f32 = jnp.float32

    def att_w(l, hh, i):      # leading-dim indexing only -> no lane slices
        return watt_ref[(l * nh + hh) * 4 + i]

    def att_b(l, hh, i):
        return batt_ref[(l * nh + hh) * 3 + i]

    def vec(l, k):
        return vec_ref[l * 7 + k]

    x = x_ref[...]                            # (B*T, D) f32 residual stream
    bias2d = bias_ref[...]                    # (B*T, B*T) block-diag + key-pad bias

    for l in range(L):                        # static (n_layer = 2)
        # ---- attention sublayer: x = x + proj(MHSA(ln_1(x))) ----
        hb = _layer_norm(x, vec(l, 0)[:, :D], vec(l, 1)[:, :D]).astype(bf16)
        y = jnp.zeros((BT, D), f32)
        for hh in range(nh):                  # static head loop
            qh = (jnp.dot(hb, att_w(l, hh, 0), preferred_element_type=f32)
                  + att_b(l, hh, 0)).astype(bf16)                      # (BT, dh)
            kh = (jnp.dot(hb, att_w(l, hh, 1), preferred_element_type=f32)
                  + att_b(l, hh, 1)).astype(bf16)
            vh = (jnp.dot(hb, att_w(l, hh, 2), preferred_element_type=f32)
                  + att_b(l, hh, 2)).astype(bf16)
            # scores for ALL batch elements at once; cross-batch entries get
            # -1e9 from the block-diagonal bias and softmax to exactly 0.
            s = lax.dot_general(qh, kh, (((1,), (1,)), ((), ())),
                                preferred_element_type=f32) * scale + bias2d
            e = jnp.exp(s)                    # no max-subtract: small, bias-bounded
            p = e * pl.reciprocal(jnp.sum(e, axis=-1, keepdims=True), approx=True)
            if l == L - 1 and hh == 0:        # module returns att[:, :1, :, :]
                att_ref[...] = p
            yh = jnp.dot(p.astype(bf16), vh, preferred_element_type=f32).astype(bf16)
            # head-concat folded into the projection (wproj rows stored transposed)
            y = y + lax.dot_general(yh, att_w(l, hh, 3), (((1,), (1,)), ((), ())),
                                    preferred_element_type=f32)
        x = x + y + vec(l, 2)[:, :D]

        # ---- MLP sublayer: x = x + c_proj(gelu(c_fc(ln_2(x)))) ----
        h = _layer_norm(x, vec(l, 3)[:, :D], vec(l, 4)[:, :D]).astype(bf16)
        h = jnp.dot(h, wfc_ref[l], preferred_element_type=f32) + vec(l, 6)   # (BT, H)
        h = _gelu_tanh(h).astype(bf16)
        x = x + jnp.dot(h, wfc2_ref[l], preferred_element_type=f32) + vec(l, 5)[:, :D]

    # ---- head: ln_f -> mean over T -> Linear -> ReLU -> Linear -> softmax ----
    xn = _layer_norm(x, hvec_ref[0][:, :D], hvec_ref[1][:, :D]).astype(bf16)
    # mean-pool as one MXU op against a constant (B, B*T) averaging matrix
    row = lax.broadcasted_iota(jnp.int32, (B, BT), 0)
    col = lax.broadcasted_iota(jnp.int32, (B, BT), 1)
    pool = jnp.where((col >= row * T) & (col < (row + 1) * T),
                     1.0 / T, 0.0).astype(bf16)
    pooled = jnp.dot(pool, xn, preferred_element_type=f32)             # (B, D)

    w1 = whead_ref[0][:, :n_hidden]          # (D, n_hidden) bf16, lane offset 0
    w2 = whead_ref[1][:n_hidden, :n_out]     # (n_hidden, n_out) bf16
    b1 = hvec_ref[2][:, :n_hidden]
    b2 = hvec_ref[3][:, :n_out]
    hcl = jnp.maximum(
        jnp.dot(pooled.astype(bf16), w1, preferred_element_type=f32) + b1, 0.0)
    logits = jnp.dot(hcl.astype(bf16), w2, preferred_element_type=f32) + b2
    e = jnp.exp(logits - jnp.max(logits, axis=-1, keepdims=True))
    logits_ref[...] = e * pl.reciprocal(jnp.sum(e, axis=-1, keepdims=True),
                                        approx=True)


# ----------------------------- weight packing ---------------------------------
def pack_params(params, cfg):
    """Slice per-head weights / pre-transpose / lane-pad at trace time so the
    kernel only does leading-dim indexing and lane-offset-0 slices."""
    D = cfg.n_embd
    nh = cfg.n_head
    dh = D // nh

    def pad_lanes(v):                         # (1, n) -> (1, 128)
        return jnp.pad(v, ((0, 0), (0, LANE - v.shape[1])))

    watt, batt, vecs, wfc, wfc2 = [], [], [], [], []
    for bp in params['blocks']:
        wqkv, bqkv, wproj = bp['wqkv'], bp['bqkv'], bp['wproj']
        for h in range(nh):
            lo = h * dh
            watt += [wqkv[:, lo:lo + dh],                    # wq_h      (D, dh)
                     wqkv[:, D + lo:D + lo + dh],            # wk_h      (D, dh)
                     wqkv[:, 2 * D + lo:2 * D + lo + dh],    # wv_h      (D, dh)
                     wproj[lo:lo + dh, :].T]                 # wproj_h^T (D, dh)
            batt += [bqkv[:, lo:lo + dh],
                     bqkv[:, D + lo:D + lo + dh],
                     bqkv[:, 2 * D + lo:2 * D + lo + dh]]    # (1, dh) each
        vecs += [pad_lanes(bp['ln1_w']), pad_lanes(bp['ln1_b']),
                 pad_lanes(bp['bproj']), pad_lanes(bp['ln2_w']),
                 pad_lanes(bp['ln2_b']), pad_lanes(bp['bfc2']),
                 pad_lanes(bp['bfc'])]                       # (1, 128) each
        wfc.append(bp['wfc'])
        wfc2.append(bp['wfc2'])

    head_vec = jnp.stack([pad_lanes(params['lnf_w']), pad_lanes(params['lnf_b']),
                          pad_lanes(params['b1']), pad_lanes(params['b2'])])
    w1, w2 = params['w1'], params['w2']
    w_head = jnp.zeros((2, D, LANE), jnp.float32)
    w_head = w_head.at[0, :, :w1.shape[1]].set(w1)
    w_head = w_head.at[1, :w2.shape[0], :w2.shape[1]].set(w2)

    return {'wte': params['wte'], 'wpe': params['wpe'],
            'watt': jnp.stack(watt).astype(jnp.bfloat16),     # (L*nh*4, D, dh)
            'batt': jnp.stack(batt).astype(jnp.float32),      # (L*nh*3, 1, dh)
            'vecs': jnp.stack(vecs).astype(jnp.float32),      # (L*7, 1, 128)
            'wfc': jnp.stack(wfc).astype(jnp.bfloat16),       # (L, D, H)
            'wfc2': jnp.stack(wfc2).astype(jnp.bfloat16),     # (L, H, D)
            'head_vec': head_vec.astype(jnp.float32),         # (4, 1, 128)
            'w_head': w_head.astype(jnp.bfloat16)}            # (2, D, 128)


# ----------------------------- wrapper ----------------------------------------
def transformer_encoder_forward(packed, in_data, cfg):
    B, T = in_data.shape
    D = cfg.n_embd
    # Embedding gathers are data-dependent lookups -> plain-JAX glue.
    tok_emb = jnp.take(packed['wte'], in_data, axis=0)                  # (B, T, D)
    pos_emb = jnp.take(packed['wpe'],
                       jnp.arange(T, dtype=in_data.dtype) + 1, axis=0)[None]
    x = (tok_emb + pos_emb).astype(jnp.float32).reshape(B * T, D)       # drop = id

    # Block-diagonal additive bias: key-padding mask + cross-batch mask in one
    # (B*T, B*T) slab so attention runs over the fused batch in one matmul.
    key_pad = (in_data == 0).reshape(B * T)
    batch_id = jnp.repeat(jnp.arange(B), T)
    cross = batch_id[:, None] != batch_id[None, :]
    bias2d = jnp.where(cross | key_pad[None, :], NEG_BIG, 0.0).astype(jnp.float32)

    vmem = pl.BlockSpec(memory_space=pltpu.MemorySpace.VMEM)
    logits, att_full = pl.pallas_call(
        functools.partial(fused_forward_kernel, cfg.n_hidden_cls),
        out_shape=(jax.ShapeDtypeStruct((B, cfg.n_output_cls), jnp.float32),
                   jax.ShapeDtypeStruct((B * T, B * T), jnp.float32)),
        in_specs=[vmem] * 9,
        out_specs=(vmem, vmem),
    )(x, bias2d, packed['watt'], packed['batt'], packed['vecs'],
      packed['wfc'], packed['wfc2'], packed['head_vec'], packed['w_head'])

    # per-batch (T, T) diagonal blocks of the fused attention slab (head 0, last layer)
    att4 = att_full.reshape(B, T, B, T)
    att = jnp.stack([att4[b, :, b, :] for b in range(B)], axis=0)
    return logits, att[:, None, :, :]                                   # (B,1,T,T)


# ----------------------------- parameters -------------------------------------
def sinusoid_table(seq_len, n_embd):
    pos = jnp.arange(seq_len, dtype=jnp.float32)[:, None]
    i = jnp.arange(n_embd)
    angle = pos / jnp.power(10000.0, (2.0 * (i // 2)) / n_embd)
    return jnp.where(i % 2 == 0, jnp.sin(angle), jnp.cos(angle)).astype(jnp.float32)


def init_params(cfg, key):
    keys = iter(jax.random.split(key, 64))

    def lin(n_in, n_out):
        w = 0.02 * jax.random.normal(next(keys), (n_in, n_out), jnp.float32)
        b = jnp.zeros((1, n_out), jnp.float32)
        return w, b

    D = cfg.n_embd
    H = cfg.mlp_expansion_ratio * D
    params = {
        'wte': 0.02 * jax.random.normal(next(keys), (cfg.vocab_size, D), jnp.float32),
        'wpe': sinusoid_table(cfg.block_size + 1, D),
    }
    blocks = []
    for _ in range(cfg.n_layer):
        p = {'ln1_w': jnp.ones((1, D), jnp.float32),
             'ln1_b': jnp.zeros((1, D), jnp.float32),
             'ln2_w': jnp.ones((1, D), jnp.float32),
             'ln2_b': jnp.zeros((1, D), jnp.float32)}
        p['wqkv'], p['bqkv'] = lin(D, 3 * D)
        p['wproj'], p['bproj'] = lin(D, D)
        p['wfc'], p['bfc'] = lin(D, H)
        p['wfc2'], p['bfc2'] = lin(H, D)
        blocks.append(p)
    params['blocks'] = blocks
    params['lnf_w'] = jnp.ones((1, D), jnp.float32)
    params['lnf_b'] = jnp.zeros((1, D), jnp.float32)
    params['w1'], params['b1'] = lin(cfg.n_input_cls, cfg.n_hidden_cls)
    params['w2'], params['b2'] = lin(cfg.n_hidden_cls, cfg.n_output_cls)
    return params


# ----------------------------- pure-JAX reference (f32, exact erf GELU) -------
def reference_forward(params, in_data, cfg):
    B, T = in_data.shape
    D, nh = cfg.n_embd, cfg.n_head
    dh = D // nh
    x = (jnp.take(params['wte'], in_data, axis=0) +
         jnp.take(params['wpe'], jnp.arange(T) + 1, axis=0)[None])
    mask = jnp.broadcast_to((in_data == 0)[:, None, :], (B, T, T))
    att0 = None
    for p in params['blocks']:
        h = _layer_norm(x, p['ln1_w'][0], p['ln1_b'][0])
        qkv = h @ p['wqkv'] + p['bqkv'][0]
        q, k, v = jnp.split(qkv, 3, axis=-1)
        q = q.reshape(B, T, nh, dh).transpose(0, 2, 1, 3)
        k = k.reshape(B, T, nh, dh).transpose(0, 2, 1, 3)
        v = v.reshape(B, T, nh, dh).transpose(0, 2, 1, 3)
        att = jnp.einsum('bhtd,bhsd->bhts', q, k) / math.sqrt(dh)
        att = jnp.where(mask[:, None], -jnp.inf, att)
        att = jax.nn.softmax(att, axis=-1)
        y = jnp.einsum('bhts,bhsd->bhtd', att, v)
        y = y.transpose(0, 2, 1, 3).reshape(B, T, D)
        x = x + y @ p['wproj'] + p['bproj'][0]
        h = _layer_norm(x, p['ln2_w'][0], p['ln2_b'][0])
        x = x + _gelu_exact(h @ p['wfc'] + p['bfc'][0]) @ p['wfc2'] + p['bfc2'][0]
        att0 = att[:, :1]
    xn = _layer_norm(x, params['lnf_w'][0], params['lnf_b'][0])
    pooled = jnp.mean(xn, axis=1)
    h = jnp.maximum(pooled @ params['w1'] + params['b1'][0], 0.0)
    logits = h @ params['w2'] + params['b2'][0]
    return jax.nn.softmax(logits, axis=-1), att0


# ----------------------------- main --------------------------------------------
if __name__ == "__main__":
    cfg = Config()
    key = jax.random.PRNGKey(0)
    pkey, dkey = jax.random.split(key)
    params = init_params(cfg, pkey)
    packed = pack_params(params, cfg)

    B, T = 2, cfg.block_size
    in_data = jax.random.randint(dkey, (B, T), 1, cfg.vocab_size, dtype=jnp.int32)
    in_data = in_data.at[0, -2:].set(0).at[1, -1:].set(0)   # add some padding tokens

    fwd = jax.jit(lambda p, d: transformer_encoder_forward(p, d, cfg))
    logits, att = fwd(packed, in_data)
    logits = jax.block_until_ready(logits)
    att = jax.block_until_ready(att)

    ref_logits, ref_att = reference_forward(params, in_data, cfg)
    assert logits.shape == (B, cfg.n_output_cls)
    assert att.shape == (B, 1, T, T)
    # bf16 MXU operands + tanh-GELU + approx reciprocal -> loosened tolerance
    assert jnp.allclose(logits, ref_logits, atol=1e-2, rtol=1e-2)
    assert jnp.allclose(att, ref_att, atol=1e-2, rtol=1e-2)
    print("KERNEL_OK")
</pallas_src>

<mosaic_0001>
module attributes {stable_mosaic.version = 11 : i64} {
  func.func @fused_forward_kernel(%arg0: memref<16x32xf32, #tpu.memory_space<vmem>>, %arg1: memref<16x16xf32, #tpu.memory_space<vmem>>, %arg2: memref<32x32x8xbf16, #tpu.memory_space<vmem>>, %arg3: memref<24x1x8xf32, #tpu.memory_space<vmem>>, %arg4: memref<14x1x128xf32, #tpu.memory_space<vmem>>, %arg5: memref<2x32x128xbf16, #tpu.memory_space<vmem>>, %arg6: memref<2x128x32xbf16, #tpu.memory_space<vmem>>, %arg7: memref<4x1x128xf32, #tpu.memory_space<vmem>>, %arg8: memref<2x32x128xbf16, #tpu.memory_space<vmem>>, %arg9: memref<2x4xf32, #tpu.memory_space<vmem>>, %arg10: memref<16x16xf32, #tpu.memory_space<vmem>>) attributes {dimension_semantics = [], scalar_prefetch = 0 : i64, scratch_operands = 0 : i64, tpu.core_type = #tpu.core_type<tc>} {
    %c0 = arith.constant 0 : index
    %c0_0 = arith.constant 0 : index
    %0 = vector.load %arg0[%c0, %c0_0] : memref<16x32xf32, #tpu.memory_space<vmem>>, vector<16x32xf32>
    %c0_1 = arith.constant 0 : index
    %c0_2 = arith.constant 0 : index
    %1 = vector.load %arg1[%c0_1, %c0_2] : memref<16x16xf32, #tpu.memory_space<vmem>>, vector<16x16xf32>
    %c0_3 = arith.constant 0 : index
    %c0_4 = arith.constant 0 : index
    %c0_5 = arith.constant 0 : index
    %2 = vector.load %arg4[%c0_3, %c0_4, %c0_5] : memref<14x1x128xf32, #tpu.memory_space<vmem>>, vector<1x1x128xf32>
    %3 = vector.shape_cast %2 : vector<1x1x128xf32> to vector<1x128xf32>
    %4 = vector.extract_strided_slice %3 {offsets = [0, 0], sizes = [1, 32], strides = [1, 1]} : vector<1x128xf32> to vector<1x32xf32>
    %c1 = arith.constant 1 : index
    %c0_6 = arith.constant 0 : index
    %c0_7 = arith.constant 0 : index
    %5 = vector.load %arg4[%c1, %c0_6, %c0_7] : memref<14x1x128xf32, #tpu.memory_space<vmem>>, vector<1x1x128xf32>
    %6 = vector.shape_cast %5 : vector<1x1x128xf32> to vector<1x128xf32>
    %7 = vector.extract_strided_slice %6 {offsets = [0, 0], sizes = [1, 32], strides = [1, 1]} : vector<1x128xf32> to vector<1x32xf32>
    %cst = arith.constant dense<0.000000e+00> : vector<16xf32>
    %8 = vector.multi_reduction <add>, %0, %cst [1] : vector<16x32xf32> to vector<16xf32>
    %9 = vector.shape_cast %8 : vector<16xf32> to vector<16x1xf32>
    %cst_8 = arith.constant 3.200000e+01 : f32
    %10 = vector.broadcast %cst_8 : f32 to vector<16x1xf32>
    %11 = arith.divf %9, %10 : vector<16x1xf32>
    %12 = vector.broadcast %11 : vector<16x1xf32> to vector<16x32xf32>
    %13 = arith.subf %0, %12 : vector<16x32xf32>
    %14 = arith.mulf %13, %13 : vector<16x32xf32>
    %cst_9 = arith.constant dense<0.000000e+00> : vector<16xf32>
    %15 = vector.multi_reduction <add>, %14, %cst_9 [1] : vector<16x32xf32> to vector<16xf32>
    %16 = vector.shape_cast %15 : vector<16xf32> to vector<16x1xf32>
    %cst_10 = arith.constant 3.200000e+01 : f32
    %17 = vector.broadcast %cst_10 : f32 to vector<16x1xf32>
    %18 = arith.divf %16, %17 : vector<16x1xf32>
    %19 = vector.broadcast %11 : vector<16x1xf32> to vector<16x32xf32>
    %20 = arith.subf %0, %19 : vector<16x32xf32>
    %cst_11 = arith.constant 9.99999974E-6 : f32
    %21 = vector.broadcast %cst_11 : f32 to vector<16x1xf32>
    %22 = arith.addf %18, %21 : vector<16x1xf32>
    %23 = math.rsqrt %22 : vector<16x1xf32>
    %24 = vector.broadcast %23 : vector<16x1xf32> to vector<16x32xf32>
    %25 = arith.mulf %20, %24 : vector<16x32xf32>
    %26 = vector.broadcast %4 : vector<1x32xf32> to vector<16x32xf32>
    %27 = arith.mulf %25, %26 : vector<16x32xf32>
    %28 = vector.broadcast %7 : vector<1x32xf32> to vector<16x32xf32>
    %29 = arith.addf %27, %28 : vector<16x32xf32>
    %30 = arith.truncf %29 : vector<16x32xf32> to vector<16x32xbf16>
    %cst_12 = arith.constant 0.000000e+00 : f32
    %31 = vector.broadcast %cst_12 : f32 to vector<16x32xf32>
    %c0_13 = arith.constant 0 : index
    %c0_14 = arith.constant 0 : index
    %c0_15 = arith.constant 0 : index
    %32 = vector.load %arg2[%c0_13, %c0_14, %c0_15] : memref<32x32x8xbf16, #tpu.memory_space<vmem>>, vector<1x32x8xbf16>
    %33 = vector.shape_cast %32 : vector<1x32x8xbf16> to vector<32x8xbf16>
    %cst_16 = arith.constant dense<0.000000e+00> : vector<16x8xf32>
    %34 = tpu.matmul %30, %33, %cst_16 {dimension_numbers = #tpu.dot_dimension_numbers<[1], [0], [0], [1], [0, 0, 1, 1], [], []>} : vector<16x32xbf16>, vector<32x8xbf16>, vector<16x8xf32> -> vector<16x8xf32>
    %c0_17 = arith.constant 0 : index
    %c0_18 = arith.constant 0 : index
    %c0_19 = arith.constant 0 : index
    %35 = vector.load %arg3[%c0_17, %c0_18, %c0_19] : memref<24x1x8xf32, #tpu.memory_space<vmem>>, vector<1x1x8xf32>
    %36 = vector.shape_cast %35 : vector<1x1x8xf32> to vector<1x8xf32>
    %37 = vector.broadcast %36 : vector<1x8xf32> to vector<16x8xf32>
    %38 = arith.addf %34, %37 : vector<16x8xf32>
    %39 = arith.truncf %38 : vector<16x8xf32> to vector<16x8xbf16>
    %c1_20 = arith.constant 1 : index
    %c0_21 = arith.constant 0 : index
    %c0_22 = arith.constant 0 : index
    %40 = vector.load %arg2[%c1_20, %c0_21, %c0_22] : memref<32x32x8xbf16, #tpu.memory_space<vmem>>, vector<1x32x8xbf16>
    %41 = vector.shape_cast %40 : vector<1x32x8xbf16> to vector<32x8xbf16>
    %cst_23 = arith.constant dense<0.000000e+00> : vector<16x8xf32>
    %42 = tpu.matmul %30, %41, %cst_23 {dimension_numbers = #tpu.dot_dimension_numbers<[1], [0], [0], [1], [0, 0, 1, 1], [], []>} : vector<16x32xbf16>, vector<32x8xbf16>, vector<16x8xf32> -> vector<16x8xf32>
    %c1_24 = arith.constant 1 : index
    %c0_25 = arith.constant 0 : index
    %c0_26 = arith.constant 0 : index
    %43 = vector.load %arg3[%c1_24, %c0_25, %c0_26] : memref<24x1x8xf32, #tpu.memory_space<vmem>>, vector<1x1x8xf32>
    %44 = vector.shape_cast %43 : vector<1x1x8xf32> to vector<1x8xf32>
    %45 = vector.broadcast %44 : vector<1x8xf32> to vector<16x8xf32>
    %46 = arith.addf %42, %45 : vector<16x8xf32>
    %47 = arith.truncf %46 : vector<16x8xf32> to vector<16x8xbf16>
    %c2 = arith.constant 2 : index
    %c0_27 = arith.constant 0 : index
    %c0_28 = arith.constant 0 : index
    %48 = vector.load %arg2[%c2, %c0_27, %c0_28] : memref<32x32x8xbf16, #tpu.memory_space<vmem>>, vector<1x32x8xbf16>
    %49 = vector.shape_cast %48 : vector<1x32x8xbf16> to vector<32x8xbf16>
    %cst_29 = arith.constant dense<0.000000e+00> : vector<16x8xf32>
    %50 = tpu.matmul %30, %49, %cst_29 {dimension_numbers = #tpu.dot_dimension_numbers<[1], [0], [0], [1], [0, 0, 1, 1], [], []>} : vector<16x32xbf16>, vector<32x8xbf16>, vector<16x8xf32> -> vector<16x8xf32>
    %c2_30 = arith.constant 2 : index
    %c0_31 = arith.constant 0 : index
    %c0_32 = arith.constant 0 : index
    %51 = vector.load %arg3[%c2_30, %c0_31, %c0_32] : memref<24x1x8xf32, #tpu.memory_space<vmem>>, vector<1x1x8xf32>
    %52 = vector.shape_cast %51 : vector<1x1x8xf32> to vector<1x8xf32>
    %53 = vector.broadcast %52 : vector<1x8xf32> to vector<16x8xf32>
    %54 = arith.addf %50, %53 : vector<16x8xf32>
    %55 = arith.truncf %54 : vector<16x8xf32> to vector<16x8xbf16>
    %cst_33 = arith.constant dense<0.000000e+00> : vector<16x16xf32>
    %56 = tpu.matmul %39, %47, %cst_33 {dimension_numbers = #tpu.dot_dimension_numbers<[1], [1], [0], [0], [0, 0, 1, 0], [], []>} : vector<16x8xbf16>, vector<16x8xbf16>, vector<16x16xf32> -> vector<16x16xf32>
    %cst_34 = arith.constant 0.353553385 : f32
    %57 = vector.broadcast %cst_34 : f32 to vector<16x16xf32>
    %58 = arith.mulf %56, %57 : vector<16x16xf32>
    %59 = arith.addf %58, %1 : vector<16x16xf32>
    %60 = math.exp %59 : vector<16x16xf32>
    %cst_35 = arith.constant dense<0.000000e+00> : vector<16xf32>
    %61 = vector.multi_reduction <add>, %60, %cst_35 [1] : vector<16x16xf32> to vector<16xf32>
    %62 = vector.shape_cast %61 : vector<16xf32> to vector<16x1xf32>
    %63 = tpu.reciprocal %62 {approx = true} : vector<16x1xf32> -> vector<16x1xf32>
    %64 = vector.broadcast %63 : vector<16x1xf32> to vector<16x16xf32>
    %65 = arith.mulf %60, %64 : vector<16x16xf32>
    %66 = arith.truncf %65 : vector<16x16xf32> to vector<16x16xbf16>
    %cst_36 = arith.constant dense<0.000000e+00> : vector<16x8xf32>
    %67 = tpu.matmul %66, %55, %cst_36 {dimension_numbers = #tpu.dot_dimension_numbers<[1], [0], [0], [1], [0, 0, 1, 1], [], []>} : vector<16x16xbf16>, vector<16x8xbf16>, vector<16x8xf32> -> vector<16x8xf32>
    %68 = arith.truncf %67 : vector<16x8xf32> to vector<16x8xbf16>
    %c3 = arith.constant 3 : index
    %c0_37 = arith.constant 0 : index
    %c0_38 = arith.constant 0 : index
    %69 = vector.load %arg2[%c3, %c0_37, %c0_38] : memref<32x32x8xbf16, #tpu.memory_space<vmem>>, vector<1x32x8xbf16>
    %70 = vector.shape_cast %69 : vector<1x32x8xbf16> to vector<32x8xbf16>
    %cst_39 = arith.constant dense<0.000000e+00> : vector<16x32xf32>
    %71 = tpu.matmul %68, %70, %cst_39 {dimension_numbers = #tpu.dot_dimension_numbers<[1], [1], [0], [0], [0, 0, 1, 0], [], []>} : vector<16x8xbf16>, vector<32x8xbf16>, vector<16x32xf32> -> vector<16x32xf32>
    %72 = arith.addf %31, %71 : vector<16x32xf32>
    %c4 = arith.constant 4 : index
    %c0_40 = arith.constant 0 : index
    %c0_41 = arith.constant 0 : index
    %73 = vector.load %arg2[%c4, %c0_40, %c0_41] : memref<32x32x8xbf16, #tpu.memory_space<vmem>>, vector<1x32x8xbf16>
    %74 = vector.shape_cast %73 : vector<1x32x8xbf16> to vector<32x8xbf16>
    %cst_42 = arith.constant dense<0.000000e+00> : vector<16x8xf32>
    %75 = tpu.matmul %30, %74, %cst_42 {dimension_numbers = #tpu.dot_dimension_numbers<[1], [0], [0], [1], [0, 0, 1, 1], [], []>} : vector<16x32xbf16>, vector<32x8xbf16>, vector<16x8xf32> -> vector<16x8xf32>
    %c3_43 = arith.constant 3 : index
    %c0_44 = arith.constant 0 : index
    %c0_45 = arith.constant 0 : index
    %76 = vector.load %arg3[%c3_43, %c0_44, %c0_45] : memref<24x1x8xf32, #tpu.memory_space<vmem>>, vector<1x1x8xf32>
    %77 = vector.shape_cast %76 : vector<1x1x8xf32> to vector<1x8xf32>
    %78 = vector.broadcast %77 : vector<1x8xf32> to vector<16x8xf32>
    %79 = arith.addf %75, %78 : vector<16x8xf32>
    %80 = arith.truncf %79 : vector<16x8xf32> to vector<16x8xbf16>
    %c5 = arith.constant 5 : index
    %c0_46 = arith.constant 0 : index
    %c0_47 = arith.constant 0 : index
    %81 = vector.load %arg2[%c5, %c0_46, %c0_47] : memref<32x32x8xbf16, #tpu.memory_space<vmem>>, vector<1x32x8xbf16>
    %82 = vector.shape_cast %81 : vector<1x32x8xbf16> to vector<32x8xbf16>
    %cst_48 = arith.constant dense<0.000000e+00> : vector<16x8xf32>
    %83 = tpu.matmul %30, %82, %cst_48 {dimension_numbers = #tpu.dot_dimension_numbers<[1], [0], [0], [1], [0, 0, 1, 1], [], []>} : vector<16x32xbf16>, vector<32x8xbf16>, vector<16x8xf32> -> vector<16x8xf32>
    %c4_49 = arith.constant 4 : index
    %c0_50 = arith.constant 0 : index
    %c0_51 = arith.constant 0 : index
    %84 = vector.load %arg3[%c4_49, %c0_50, %c0_51] : memref<24x1x8xf32, #tpu.memory_space<vmem>>, vector<1x1x8xf32>
    %85 = vector.shape_cast %84 : vector<1x1x8xf32> to vector<1x8xf32>
    %86 = vector.broadcast %85 : vector<1x8xf32> to vector<16x8xf32>
    %87 = arith.addf %83, %86 : vector<16x8xf32>
    %88 = arith.truncf %87 : vector<16x8xf32> to vector<16x8xbf16>
    %c6 = arith.constant 6 : index
    %c0_52 = arith.constant 0 : index
    %c0_53 = arith.constant 0 : index
    %89 = vector.load %arg2[%c6, %c0_52, %c0_53] : memref<32x32x8xbf16, #tpu.memory_space<vmem>>, vector<1x32x8xbf16>
    %90 = vector.shape_cast %89 : vector<1x32x8xbf16> to vector<32x8xbf16>
    %cst_54 = arith.constant dense<0.000000e+00> : vector<16x8xf32>
    %91 = tpu.matmul %30, %90, %cst_54 {dimension_numbers = #tpu.dot_dimension_numbers<[1], [0], [0], [1], [0, 0, 1, 1], [], []>} : vector<16x32xbf16>, vector<32x8xbf16>, vector<16x8xf32> -> vector<16x8xf32>
    %c5_55 = arith.constant 5 : index
    %c0_56 = arith.constant 0 : index
    %c0_57 = arith.constant 0 : index
    %92 = vector.load %arg3[%c5_55, %c0_56, %c0_57] : memref<24x1x8xf32, #tpu.memory_space<vmem>>, vector<1x1x8xf32>
    %93 = vector.shape_cast %92 : vector<1x1x8xf32> to vector<1x8xf32>
    %94 = vector.broadcast %93 : vector<1x8xf32> to vector<16x8xf32>
    %95 = arith.addf %91, %94 : vector<16x8xf32>
    %96 = arith.truncf %95 : vector<16x8xf32> to vector<16x8xbf16>
    %cst_58 = arith.constant dense<0.000000e+00> : vector<16x16xf32>
    %97 = tpu.matmul %80, %88, %cst_58 {dimension_numbers = #tpu.dot_dimension_numbers<[1], [1], [0], [0], [0, 0, 1, 0], [], []>} : vector<16x8xbf16>, vector<16x8xbf16>, vector<16x16xf32> -> vector<16x16xf32>
    %cst_59 = arith.constant 0.353553385 : f32
    %98 = vector.broadcast %cst_59 : f32 to vector<16x16xf32>
    %99 = arith.mulf %97, %98 : vector<16x16xf32>
    %100 = arith.addf %99, %1 : vector<16x16xf32>
    %101 = math.exp %100 : vector<16x16xf32>
    %cst_60 = arith.constant dense<0.000000e+00> : vector<16xf32>
    %102 = vector.multi_reduction <add>, %101, %cst_60 [1] : vector<16x16xf32> to vector<16xf32>
    %103 = vector.shape_cast %102 : vector<16xf32> to vector<16x1xf32>
    %104 = tpu.reciprocal %103 {approx = true} : vector<16x1xf32> -> vector<16x1xf32>
    %105 = vector.broadcast %104 : vector<16x1xf32> to vector<16x16xf32>
    %106 = arith.mulf %101, %105 : vector<16x16xf32>
    %107 = arith.truncf %106 : vector<16x16xf32> to vector<16x16xbf16>
    %cst_61 = arith.constant dense<0.000000e+00> : vector<16x8xf32>
    %108 = tpu.matmul %107, %96, %cst_61 {dimension_numbers = #tpu.dot_dimension_numbers<[1], [0], [0], [1], [0, 0, 1, 1], [], []>} : vector<16x16xbf16>, vector<16x8xbf16>, vector<16x8xf32> -> vector<16x8xf32>
    %109 = arith.truncf %108 : vector<16x8xf32> to vector<16x8xbf16>
    %c7 = arith.constant 7 : index
    %c0_62 = arith.constant 0 : index
    %c0_63 = arith.constant 0 : index
    %110 = vector.load %arg2[%c7, %c0_62, %c0_63] : memref<32x32x8xbf16, #tpu.memory_space<vmem>>, vector<1x32x8xbf16>
    %111 = vector.shape_cast %110 : vector<1x32x8xbf16> to vector<32x8xbf16>
    %cst_64 = arith.constant dense<0.000000e+00> : vector<16x32xf32>
    %112 = tpu.matmul %109, %111, %cst_64 {dimension_numbers = #tpu.dot_dimension_numbers<[1], [1], [0], [0], [0, 0, 1, 0], [], []>} : vector<16x8xbf16>, vector<32x8xbf16>, vector<16x32xf32> -> vector<16x32xf32>
    %113 = arith.addf %72, %112 : vector<16x32xf32>
    %c8 = arith.constant 8 : index
    %c0_65 = arith.constant 0 : index
    %c0_66 = arith.constant 0 : index
    %114 = vector.load %arg2[%c8, %c0_65, %c0_66] : memref<32x32x8xbf16, #tpu.memory_space<vmem>>, vector<1x32x8xbf16>
    %115 = vector.shape_cast %114 : vector<1x32x8xbf16> to vector<32x8xbf16>
    %cst_67 = arith.constant dense<0.000000e+00> : vector<16x8xf32>
    %116 = tpu.matmul %30, %115, %cst_67 {dimension_numbers = #tpu.dot_dimension_numbers<[1], [0], [0], [1], [0, 0, 1, 1], [], []>} : vector<16x32xbf16>, vector<32x8xbf16>, vector<16x8xf32> -> vector<16x8xf32>
    %c6_68 = arith.constant 6 : index
    %c0_69 = arith.constant 0 : index
    %c0_70 = arith.constant 0 : index
    %117 = vector.load %arg3[%c6_68, %c0_69, %c0_70] : memref<24x1x8xf32, #tpu.memory_space<vmem>>, vector<1x1x8xf32>
    %118 = vector.shape_cast %117 : vector<1x1x8xf32> to vector<1x8xf32>
    %119 = vector.broadcast %118 : vector<1x8xf32> to vector<16x8xf32>
    %120 = arith.addf %116, %119 : vector<16x8xf32>
    %121 = arith.truncf %120 : vector<16x8xf32> to vector<16x8xbf16>
    %c9 = arith.constant 9 : index
    %c0_71 = arith.constant 0 : index
    %c0_72 = arith.constant 0 : index
    %122 = vector.load %arg2[%c9, %c0_71, %c0_72] : memref<32x32x8xbf16, #tpu.memory_space<vmem>>, vector<1x32x8xbf16>
    %123 = vector.shape_cast %122 : vector<1x32x8xbf16> to vector<32x8xbf16>
    %cst_73 = arith.constant dense<0.000000e+00> : vector<16x8xf32>
    %124 = tpu.matmul %30, %123, %cst_73 {dimension_numbers = #tpu.dot_dimension_numbers<[1], [0], [0], [1], [0, 0, 1, 1], [], []>} : vector<16x32xbf16>, vector<32x8xbf16>, vector<16x8xf32> -> vector<16x8xf32>
    %c7_74 = arith.constant 7 : index
    %c0_75 = arith.constant 0 : index
    %c0_76 = arith.constant 0 : index
    %125 = vector.load %arg3[%c7_74, %c0_75, %c0_76] : memref<24x1x8xf32, #tpu.memory_space<vmem>>, vector<1x1x8xf32>
    %126 = vector.shape_cast %125 : vector<1x1x8xf32> to vector<1x8xf32>
    %127 = vector.broadcast %126 : vector<1x8xf32> to vector<16x8xf32>
    %128 = arith.addf %124, %127 : vector<16x8xf32>
    %129 = arith.truncf %128 : vector<16x8xf32> to vector<16x8xbf16>
    %c10 = arith.constant 10 : index
    %c0_77 = arith.constant 0 : index
    %c0_78 = arith.constant 0 : index
    %130 = vector.load %arg2[%c10, %c0_77, %c0_78] : memref<32x32x8xbf16, #tpu.memory_space<vmem>>, vector<1x32x8xbf16>
    %131 = vector.shape_cast %130 : vector<1x32x8xbf16> to vector<32x8xbf16>
    %cst_79 = arith.constant dense<0.000000e+00> : vector<16x8xf32>
    %132 = tpu.matmul %30, %131, %cst_79 {dimension_numbers = #tpu.dot_dimension_numbers<[1], [0], [0], [1], [0, 0, 1, 1], [], []>} : vector<16x32xbf16>, vector<32x8xbf16>, vector<16x8xf32> -> vector<16x8xf32>
    %c8_80 = arith.constant 8 : index
    %c0_81 = arith.constant 0 : index
    %c0_82 = arith.constant 0 : index
    %133 = vector.load %arg3[%c8_80, %c0_81, %c0_82] : memref<24x1x8xf32, #tpu.memory_space<vmem>>, vector<1x1x8xf32>
    %134 = vector.shape_cast %133 : vector<1x1x8xf32> to vector<1x8xf32>
    %135 = vector.broadcast %134 : vector<1x8xf32> to vector<16x8xf32>
    %136 = arith.addf %132, %135 : vector<16x8xf32>
    %137 = arith.truncf %136 : vector<16x8xf32> to vector<16x8xbf16>
    %cst_83 = arith.constant dense<0.000000e+00> : vector<16x16xf32>
    %138 = tpu.matmul %121, %129, %cst_83 {dimension_numbers = #tpu.dot_dimension_numbers<[1], [1], [0], [0], [0, 0, 1, 0], [], []>} : vector<16x8xbf16>, vector<16x8xbf16>, vector<16x16xf32> -> vector<16x16xf32>
    %cst_84 = arith.constant 0.353553385 : f32
    %139 = vector.broadcast %cst_84 : f32 to vector<16x16xf32>
    %140 = arith.mulf %138, %139 : vector<16x16xf32>
    %141 = arith.addf %140, %1 : vector<16x16xf32>
    %142 = math.exp %141 : vector<16x16xf32>
    %cst_85 = arith.constant dense<0.000000e+00> : vector<16xf32>
    %143 = vector.multi_reduction <add>, %142, %cst_85 [1] : vector<16x16xf32> to vector<16xf32>
    %144 = vector.shape_cast %143 : vector<16xf32> to vector<16x1xf32>
    %145 = tpu.reciprocal %144 {approx = true} : vector<16x1xf32> -> vector<16x1xf32>
    %146 = vector.broadcast %145 : vector<16x1xf32> to vector<16x16xf32>
    %147 = arith.mulf %142, %146 : vector<16x16xf32>
    %148 = arith.truncf %147 : vector<16x16xf32> to vector<16x16xbf16>
    %cst_86 = arith.constant dense<0.000000e+00> : vector<16x8xf32>
    %149 = tpu.matmul %148, %137, %cst_86 {dimension_numbers = #tpu.dot_dimension_numbers<[1], [0], [0], [1], [0, 0, 1, 1], [], []>} : vector<16x16xbf16>, vector<16x8xbf16>, vector<16x8xf32> -> vector<16x8xf32>
    %150 = arith.truncf %149 : vector<16x8xf32> to vector<16x8xbf16>
    %c11 = arith.constant 11 : index
    %c0_87 = arith.constant 0 : index
    %c0_88 = arith.constant 0 : index
    %151 = vector.load %arg2[%c11, %c0_87, %c0_88] : memref<32x32x8xbf16, #tpu.memory_space<vmem>>, vector<1x32x8xbf16>
    %152 = vector.shape_cast %151 : vector<1x32x8xbf16> to vector<32x8xbf16>
    %cst_89 = arith.constant dense<0.000000e+00> : vector<16x32xf32>
    %153 = tpu.matmul %150, %152, %cst_89 {dimension_numbers = #tpu.dot_dimension_numbers<[1], [1], [0], [0], [0, 0, 1, 0], [], []>} : vector<16x8xbf16>, vector<32x8xbf16>, vector<16x32xf32> -> vector<16x32xf32>
    %154 = arith.addf %113, %153 : vector<16x32xf32>
    %c12 = arith.constant 12 : index
    %c0_90 = arith.constant 0 : index
    %c0_91 = arith.constant 0 : index
    %155 = vector.load %arg2[%c12, %c0_90, %c0_91] : memref<32x32x8xbf16, #tpu.memory_space<vmem>>, vector<1x32x8xbf16>
    %156 = vector.shape_cast %155 : vector<1x32x8xbf16> to vector<32x8xbf16>
    %cst_92 = arith.constant dense<0.000000e+00> : vector<16x8xf32>
    %157 = tpu.matmul %30, %156, %cst_92 {dimension_numbers = #tpu.dot_dimension_numbers<[1], [0], [0], [1], [0, 0, 1, 1], [], []>} : vector<16x32xbf16>, vector<32x8xbf16>, vector<16x8xf32> -> vector<16x8xf32>
    %c9_93 = arith.constant 9 : index
    %c0_94 = arith.constant 0 : index
    %c0_95 = arith.constant 0 : index
    %158 = vector.load %arg3[%c9_93, %c0_94, %c0_95] : memref<24x1x8xf32, #tpu.memory_space<vmem>>, vector<1x1x8xf32>
    %159 = vector.shape_cast %158 : vector<1x1x8xf32> to vector<1x8xf32>
    %160 = vector.broadcast %159 : vector<1x8xf32> to vector<16x8xf32>
    %161 = arith.addf %157, %160 : vector<16x8xf32>
    %162 = arith.truncf %161 : vector<16x8xf32> to vector<16x8xbf16>
    %c13 = arith.constant 13 : index
    %c0_96 = arith.constant 0 : index
    %c0_97 = arith.constant 0 : index
    %163 = vector.load %arg2[%c13, %c0_96, %c0_97] : memref<32x32x8xbf16, #tpu.memory_space<vmem>>, vector<1x32x8xbf16>
    %164 = vector.shape_cast %163 : vector<1x32x8xbf16> to vector<32x8xbf16>
    %cst_98 = arith.constant dense<0.000000e+00> : vector<16x8xf32>
    %165 = tpu.matmul %30, %164, %cst_98 {dimension_numbers = #tpu.dot_dimension_numbers<[1], [0], [0], [1], [0, 0, 1, 1], [], []>} : vector<16x32xbf16>, vector<32x8xbf16>, vector<16x8xf32> -> vector<16x8xf32>
    %c10_99 = arith.constant 10 : index
    %c0_100 = arith.constant 0 : index
    %c0_101 = arith.constant 0 : index
    %166 = vector.load %arg3[%c10_99, %c0_100, %c0_101] : memref<24x1x8xf32, #tpu.memory_space<vmem>>, vector<1x1x8xf32>
    %167 = vector.shape_cast %166 : vector<1x1x8xf32> to vector<1x8xf32>
    %168 = vector.broadcast %167 : vector<1x8xf32> to vector<16x8xf32>
    %169 = arith.addf %165, %168 : vector<16x8xf32>
    %170 = arith.truncf %169 : vector<16x8xf32> to vector<16x8xbf16>
    %c14 = arith.constant 14 : index
    %c0_102 = arith.constant 0 : index
    %c0_103 = arith.constant 0 : index
    %171 = vector.load %arg2[%c14, %c0_102, %c0_103] : memref<32x32x8xbf16, #tpu.memory_space<vmem>>, vector<1x32x8xbf16>
    %172 = vector.shape_cast %171 : vector<1x32x8xbf16> to vector<32x8xbf16>
    %cst_104 = arith.constant dense<0.000000e+00> : vector<16x8xf32>
    %173 = tpu.matmul %30, %172, %cst_104 {dimension_numbers = #tpu.dot_dimension_numbers<[1], [0], [0], [1], [0, 0, 1, 1], [], []>} : vector<16x32xbf16>, vector<32x8xbf16>, vector<16x8xf32> -> vector<16x8xf32>
    %c11_105 = arith.constant 11 : index
    %c0_106 = arith.constant 0 : index
    %c0_107 = arith.constant 0 : index
    %174 = vector.load %arg3[%c11_105, %c0_106, %c0_107] : memref<24x1x8xf32, #tpu.memory_space<vmem>>, vector<1x1x8xf32>
    %175 = vector.shape_cast %174 : vector<1x1x8xf32> to vector<1x8xf32>
    %176 = vector.broadcast %175 : vector<1x8xf32> to vector<16x8xf32>
    %177 = arith.addf %173, %176 : vector<16x8xf32>
    %178 = arith.truncf %177 : vector<16x8xf32> to vector<16x8xbf16>
    %cst_108 = arith.constant dense<0.000000e+00> : vector<16x16xf32>
    %179 = tpu.matmul %162, %170, %cst_108 {dimension_numbers = #tpu.dot_dimension_numbers<[1], [1], [0], [0], [0, 0, 1, 0], [], []>} : vector<16x8xbf16>, vector<16x8xbf16>, vector<16x16xf32> -> vector<16x16xf32>
    %cst_109 = arith.constant 0.353553385 : f32
    %180 = vector.broadcast %cst_109 : f32 to vector<16x16xf32>
    %181 = arith.mulf %179, %180 : vector<16x16xf32>
    %182 = arith.addf %181, %1 : vector<16x16xf32>
    %183 = math.exp %182 : vector<16x16xf32>
    %cst_110 = arith.constant dense<0.000000e+00> : vector<16xf32>
    %184 = vector.multi_reduction <add>, %183, %cst_110 [1] : vector<16x16xf32> to vector<16xf32>
    %185 = vector.shape_cast %184 : vector<16xf32> to vector<16x1xf32>
    %186 = tpu.reciprocal %185 {approx = true} : vector<16x1xf32> -> vector<16x1xf32>
    %187 = vector.broadcast %186 : vector<16x1xf32> to vector<16x16xf32>
    %188 = arith.mulf %183, %187 : vector<16x16xf32>
    %189 = arith.truncf %188 : vector<16x16xf32> to vector<16x16xbf16>
    %cst_111 = arith.constant dense<0.000000e+00> : vector<16x8xf32>
    %190 = tpu.matmul %189, %178, %cst_111 {dimension_numbers = #tpu.dot_dimension_numbers<[1], [0], [0], [1], [0, 0, 1, 1], [], []>} : vector<16x16xbf16>, vector<16x8xbf16>, vector<16x8xf32> -> vector<16x8xf32>
    %191 = arith.truncf %190 : vector<16x8xf32> to vector<16x8xbf16>
    %c15 = arith.constant 15 : index
    %c0_112 = arith.constant 0 : index
    %c0_113 = arith.constant 0 : index
    %192 = vector.load %arg2[%c15, %c0_112, %c0_113] : memref<32x32x8xbf16, #tpu.memory_space<vmem>>, vector<1x32x8xbf16>
    %193 = vector.shape_cast %192 : vector<1x32x8xbf16> to vector<32x8xbf16>
    %cst_114 = arith.constant dense<0.000000e+00> : vector<16x32xf32>
    %194 = tpu.matmul %191, %193, %cst_114 {dimension_numbers = #tpu.dot_dimension_numbers<[1], [1], [0], [0], [0, 0, 1, 0], [], []>} : vector<16x8xbf16>, vector<32x8xbf16>, vector<16x32xf32> -> vector<16x32xf32>
    %195 = arith.addf %154, %194 : vector<16x32xf32>
    %196 = arith.addf %0, %195 : vector<16x32xf32>
    %c2_115 = arith.constant 2 : index
    %c0_116 = arith.constant 0 : index
    %c0_117 = arith.constant 0 : index
    %197 = vector.load %arg4[%c2_115, %c0_116, %c0_117] : memref<14x1x128xf32, #tpu.memory_space<vmem>>, vector<1x1x128xf32>
    %198 = vector.shape_cast %197 : vector<1x1x128xf32> to vector<1x128xf32>
    %199 = vector.extract_strided_slice %198 {offsets = [0, 0], sizes = [1, 32], strides = [1, 1]} : vector<1x128xf32> to vector<1x32xf32>
    %200 = vector.broadcast %199 : vector<1x32xf32> to vector<16x32xf32>
    %201 = arith.addf %196, %200 : vector<16x32xf32>
    %c3_118 = arith.constant 3 : index
    %c0_119 = arith.constant 0 : index
    %c0_120 = arith.constant 0 : index
    %202 = vector.load %arg4[%c3_118, %c0_119, %c0_120] : memref<14x1x128xf32, #tpu.memory_space<vmem>>, vector<1x1x128xf32>
    %203 = vector.shape_cast %202 : vector<1x1x128xf32> to vector<1x128xf32>
    %204 = vector.extract_strided_slice %203 {offsets = [0, 0], sizes = [1, 32], strides = [1, 1]} : vector<1x128xf32> to vector<1x32xf32>
    %c4_121 = arith.constant 4 : index
    %c0_122 = arith.constant 0 : index
    %c0_123 = arith.constant 0 : index
    %205 = vector.load %arg4[%c4_121, %c0_122, %c0_123] : memref<14x1x128xf32, #tpu.memory_space<vmem>>, vector<1x1x128xf32>
    %206 = vector.shape_cast %205 : vector<1x1x128xf32> to vector<1x128xf32>
    %207 = vector.extract_strided_slice %206 {offsets = [0, 0], sizes = [1, 32], strides = [1, 1]} : vector<1x128xf32> to vector<1x32xf32>
    %cst_124 = arith.constant dense<0.000000e+00> : vector<16xf32>
    %208 = vector.multi_reduction <add>, %201, %cst_124 [1] : vector<16x32xf32> to vector<16xf32>
    %209 = vector.shape_cast %208 : vector<16xf32> to vector<16x1xf32>
    %cst_125 = arith.constant 3.200000e+01 : f32
    %210 = vector.broadcast %cst_125 : f32 to vector<16x1xf32>
    %211 = arith.divf %209, %210 : vector<16x1xf32>
    %212 = vector.broadcast %211 : vector<16x1xf32> to vector<16x32xf32>
    %213 = arith.subf %201, %212 : vector<16x32xf32>
    %214 = arith.mulf %213, %213 : vector<16x32xf32>
    %cst_126 = arith.constant dense<0.000000e+00> : vector<16xf32>
    %215 = vector.multi_reduction <add>, %214, %cst_126 [1] : vector<16x32xf32> to vector<16xf32>
    %216 = vector.shape_cast %215 : vector<16xf32> to vector<16x1xf32>
    %cst_127 = arith.constant 3.200000e+01 : f32
    %217 = vector.broadcast %cst_127 : f32 to vector<16x1xf32>
    %218 = arith.divf %216, %217 : vector<16x1xf32>
    %219 = vector.broadcast %211 : vector<16x1xf32> to vector<16x32xf32>
    %220 = arith.subf %201, %219 : vector<16x32xf32>
    %cst_128 = arith.constant 9.99999974E-6 : f32
    %221 = vector.broadcast %cst_128 : f32 to vector<16x1xf32>
    %222 = arith.addf %218, %221 : vector<16x1xf32>
    %223 = math.rsqrt %222 : vector<16x1xf32>
    %224 = vector.broadcast %223 : vector<16x1xf32> to vector<16x32xf32>
    %225 = arith.mulf %220, %224 : vector<16x32xf32>
    %226 = vector.broadcast %204 : vector<1x32xf32> to vector<16x32xf32>
    %227 = arith.mulf %225, %226 : vector<16x32xf32>
    %228 = vector.broadcast %207 : vector<1x32xf32> to vector<16x32xf32>
    %229 = arith.addf %227, %228 : vector<16x32xf32>
    %230 = arith.truncf %229 : vector<16x32xf32> to vector<16x32xbf16>
    %c0_129 = arith.constant 0 : index
    %c0_130 = arith.constant 0 : index
    %c0_131 = arith.constant 0 : index
    %231 = vector.load %arg5[%c0_129, %c0_130, %c0_131] : memref<2x32x128xbf16, #tpu.memory_space<vmem>>, vector<1x32x128xbf16>
    %232 = vector.shape_cast %231 : vector<1x32x128xbf16> to vector<32x128xbf16>
    %cst_132 = arith.constant dense<0.000000e+00> : vector<16x128xf32>
    %233 = tpu.matmul %230, %232, %cst_132 {dimension_numbers = #tpu.dot_dimension_numbers<[1], [0], [0], [1], [0, 0, 1, 1], [], []>} : vector<16x32xbf16>, vector<32x128xbf16>, vector<16x128xf32> -> vector<16x128xf32>
    %c6_133 = arith.constant 6 : index
    %c0_134 = arith.constant 0 : index
    %c0_135 = arith.constant 0 : index
    %234 = vector.load %arg4[%c6_133, %c0_134, %c0_135] : memref<14x1x128xf32, #tpu.memory_space<vmem>>, vector<1x1x128xf32>
    %235 = vector.shape_cast %234 : vector<1x1x128xf32> to vector<1x128xf32>
    %236 = vector.broadcast %235 : vector<1x128xf32> to vector<16x128xf32>
    %237 = arith.addf %233, %236 : vector<16x128xf32>
    %cst_136 = arith.constant 5.000000e-01 : f32
    %238 = vector.broadcast %cst_136 : f32 to vector<16x128xf32>
    %239 = arith.mulf %238, %237 : vector<16x128xf32>
    %240 = arith.mulf %237, %237 : vector<16x128xf32>
    %241 = arith.mulf %240, %237 : vector<16x128xf32>
    %cst_137 = arith.constant 4.471500e-02 : f32
    %242 = vector.broadcast %cst_137 : f32 to vector<16x128xf32>
    %243 = arith.mulf %242, %241 : vector<16x128xf32>
    %244 = arith.addf %237, %243 : vector<16x128xf32>
    %cst_138 = arith.constant 0.797884583 : f32
    %245 = vector.broadcast %cst_138 : f32 to vector<16x128xf32>
    %246 = arith.mulf %245, %244 : vector<16x128xf32>
    %247 = math.tanh %246 : vector<16x128xf32>
    %cst_139 = arith.constant 1.000000e+00 : f32
    %248 = vector.broadcast %cst_139 : f32 to vector<16x128xf32>
    %249 = arith.addf %248, %247 : vector<16x128xf32>
    %250 = arith.mulf %239, %249 : vector<16x128xf32>
    %251 = arith.truncf %250 : vector<16x128xf32> to vector<16x128xbf16>
    %c0_140 = arith.constant 0 : index
    %c0_141 = arith.constant 0 : index
    %c0_142 = arith.constant 0 : index
    %252 = vector.load %arg6[%c0_140, %c0_141, %c0_142] : memref<2x128x32xbf16, #tpu.memory_space<vmem>>, vector<1x128x32xbf16>
    %253 = vector.shape_cast %252 : vector<1x128x32xbf16> to vector<128x32xbf16>
    %cst_143 = arith.constant dense<0.000000e+00> : vector<16x32xf32>
    %254 = tpu.matmul %251, %253, %cst_143 {dimension_numbers = #tpu.dot_dimension_numbers<[1], [0], [0], [1], [0, 0, 1, 1], [], []>} : vector<16x128xbf16>, vector<128x32xbf16>, vector<16x32xf32> -> vector<16x32xf32>
    %255 = arith.addf %201, %254 : vector<16x32xf32>
    %c5_144 = arith.constant 5 : index
    %c0_145 = arith.constant 0 : index
    %c0_146 = arith.constant 0 : index
    %256 = vector.load %arg4[%c5_144, %c0_145, %c0_146] : memref<14x1x128xf32, #tpu.memory_space<vmem>>, vector<1x1x128xf32>
    %257 = vector.shape_cast %256 : vector<1x1x128xf32> to vector<1x128xf32>
    %258 = vector.extract_strided_slice %257 {offsets = [0, 0], sizes = [1, 32], strides = [1, 1]} : vector<1x128xf32> to vector<1x32xf32>
    %259 = vector.broadcast %258 : vector<1x32xf32> to vector<16x32xf32>
    %260 = arith.addf %255, %259 : vector<16x32xf32>
    %c7_147 = arith.constant 7 : index
    %c0_148 = arith.constant 0 : index
    %c0_149 = arith.constant 0 : index
    %261 = vector.load %arg4[%c7_147, %c0_148, %c0_149] : memref<14x1x128xf32, #tpu.memory_space<vmem>>, vector<1x1x128xf32>
    %262 = vector.shape_cast %261 : vector<1x1x128xf32> to vector<1x128xf32>
    %263 = vector.extract_strided_slice %262 {offsets = [0, 0], sizes = [1, 32], strides = [1, 1]} : vector<1x128xf32> to vector<1x32xf32>
    %c8_150 = arith.constant 8 : index
    %c0_151 = arith.constant 0 : index
    %c0_152 = arith.constant 0 : index
    %264 = vector.load %arg4[%c8_150, %c0_151, %c0_152] : memref<14x1x128xf32, #tpu.memory_space<vmem>>, vector<1x1x128xf32>
    %265 = vector.shape_cast %264 : vector<1x1x128xf32> to vector<1x128xf32>
    %266 = vector.extract_strided_slice %265 {offsets = [0, 0], sizes = [1, 32], strides = [1, 1]} : vector<1x128xf32> to vector<1x32xf32>
    %cst_153 = arith.constant dense<0.000000e+00> : vector<16xf32>
    %267 = vector.multi_reduction <add>, %260, %cst_153 [1] : vector<16x32xf32> to vector<16xf32>
    %268 = vector.shape_cast %267 : vector<16xf32> to vector<16x1xf32>
    %cst_154 = arith.constant 3.200000e+01 : f32
    %269 = vector.broadcast %cst_154 : f32 to vector<16x1xf32>
    %270 = arith.divf %268, %269 : vector<16x1xf32>
    %271 = vector.broadcast %270 : vector<16x1xf32> to vector<16x32xf32>
    %272 = arith.subf %260, %271 : vector<16x32xf32>
    %273 = arith.mulf %272, %272 : vector<16x32xf32>
    %cst_155 = arith.constant dense<0.000000e+00> : vector<16xf32>
    %274 = vector.multi_reduction <add>, %273, %cst_155 [1] : vector<16x32xf32> to vector<16xf32>
    %275 = vector.shape_cast %274 : vector<16xf32> to vector<16x1xf32>
    %cst_156 = arith.constant 3.200000e+01 : f32
    %276 = vector.broadcast %cst_156 : f32 to vector<16x1xf32>
    %277 = arith.divf %275, %276 : vector<16x1xf32>
    %278 = vector.broadcast %270 : vector<16x1xf32> to vector<16x32xf32>
    %279 = arith.subf %260, %278 : vector<16x32xf32>
    %cst_157 = arith.constant 9.99999974E-6 : f32
    %280 = vector.broadcast %cst_157 : f32 to vector<16x1xf32>
    %281 = arith.addf %277, %280 : vector<16x1xf32>
    %282 = math.rsqrt %281 : vector<16x1xf32>
    %283 = vector.broadcast %282 : vector<16x1xf32> to vector<16x32xf32>
    %284 = arith.mulf %279, %283 : vector<16x32xf32>
    %285 = vector.broadcast %263 : vector<1x32xf32> to vector<16x32xf32>
    %286 = arith.mulf %284, %285 : vector<16x32xf32>
    %287 = vector.broadcast %266 : vector<1x32xf32> to vector<16x32xf32>
    %288 = arith.addf %286, %287 : vector<16x32xf32>
    %289 = arith.truncf %288 : vector<16x32xf32> to vector<16x32xbf16>
    %cst_158 = arith.constant 0.000000e+00 : f32
    %290 = vector.broadcast %cst_158 : f32 to vector<16x32xf32>
    %c16 = arith.constant 16 : index
    %c0_159 = arith.constant 0 : index
    %c0_160 = arith.constant 0 : index
    %291 = vector.load %arg2[%c16, %c0_159, %c0_160] : memref<32x32x8xbf16, #tpu.memory_space<vmem>>, vector<1x32x8xbf16>
    %292 = vector.shape_cast %291 : vector<1x32x8xbf16> to vector<32x8xbf16>
    %cst_161 = arith.constant dense<0.000000e+00> : vector<16x8xf32>
    %293 = tpu.matmul %289, %292, %cst_161 {dimension_numbers = #tpu.dot_dimension_numbers<[1], [0], [0], [1], [0, 0, 1, 1], [], []>} : vector<16x32xbf16>, vector<32x8xbf16>, vector<16x8xf32> -> vector<16x8xf32>
    %c12_162 = arith.constant 12 : index
    %c0_163 = arith.constant 0 : index
    %c0_164 = arith.constant 0 : index
    %294 = vector.load %arg3[%c12_162, %c0_163, %c0_164] : memref<24x1x8xf32, #tpu.memory_space<vmem>>, vector<1x1x8xf32>
    %295 = vector.shape_cast %294 : vector<1x1x8xf32> to vector<1x8xf32>
    %296 = vector.broadcast %295 : vector<1x8xf32> to vector<16x8xf32>
    %297 = arith.addf %293, %296 : vector<16x8xf32>
    %298 = arith.truncf %297 : vector<16x8xf32> to vector<16x8xbf16>
    %c17 = arith.constant 17 : index
    %c0_165 = arith.constant 0 : index
    %c0_166 = arith.constant 0 : index
    %299 = vector.load %arg2[%c17, %c0_165, %c0_166] : memref<32x32x8xbf16, #tpu.memory_space<vmem>>, vector<1x32x8xbf16>
    %300 = vector.shape_cast %299 : vector<1x32x8xbf16> to vector<32x8xbf16>
    %cst_167 = arith.constant dense<0.000000e+00> : vector<16x8xf32>
    %301 = tpu.matmul %289, %300, %cst_167 {dimension_numbers = #tpu.dot_dimension_numbers<[1], [0], [0], [1], [0, 0, 1, 1], [], []>} : vector<16x32xbf16>, vector<32x8xbf16>, vector<16x8xf32> -> vector<16x8xf32>
    %c13_168 = arith.constant 13 : index
    %c0_169 = arith.constant 0 : index
    %c0_170 = arith.constant 0 : index
    %302 = vector.load %arg3[%c13_168, %c0_169, %c0_170] : memref<24x1x8xf32, #tpu.memory_space<vmem>>, vector<1x1x8xf32>
    %303 = vector.shape_cast %302 : vector<1x1x8xf32> to vector<1x8xf32>
    %304 = vector.broadcast %303 : vector<1x8xf32> to vector<16x8xf32>
    %305 = arith.addf %301, %304 : vector<16x8xf32>
    %306 = arith.truncf %305 : vector<16x8xf32> to vector<16x8xbf16>
    %c18 = arith.constant 18 : index
    %c0_171 = arith.constant 0 : index
    %c0_172 = arith.constant 0 : index
    %307 = vector.load %arg2[%c18, %c0_171, %c0_172] : memref<32x32x8xbf16, #tpu.memory_space<vmem>>, vector<1x32x8xbf16>
    %308 = vector.shape_cast %307 : vector<1x32x8xbf16> to vector<32x8xbf16>
    %cst_173 = arith.constant dense<0.000000e+00> : vector<16x8xf32>
    %309 = tpu.matmul %289, %308, %cst_173 {dimension_numbers = #tpu.dot_dimension_numbers<[1], [0], [0], [1], [0, 0, 1, 1], [], []>} : vector<16x32xbf16>, vector<32x8xbf16>, vector<16x8xf32> -> vector<16x8xf32>
    %c14_174 = arith.constant 14 : index
    %c0_175 = arith.constant 0 : index
    %c0_176 = arith.constant 0 : index
    %310 = vector.load %arg3[%c14_174, %c0_175, %c0_176] : memref<24x1x8xf32, #tpu.memory_space<vmem>>, vector<1x1x8xf32>
    %311 = vector.shape_cast %310 : vector<1x1x8xf32> to vector<1x8xf32>
    %312 = vector.broadcast %311 : vector<1x8xf32> to vector<16x8xf32>
    %313 = arith.addf %309, %312 : vector<16x8xf32>
    %314 = arith.truncf %313 : vector<16x8xf32> to vector<16x8xbf16>
    %cst_177 = arith.constant dense<0.000000e+00> : vector<16x16xf32>
    %315 = tpu.matmul %298, %306, %cst_177 {dimension_numbers = #tpu.dot_dimension_numbers<[1], [1], [0], [0], [0, 0, 1, 0], [], []>} : vector<16x8xbf16>, vector<16x8xbf16>, vector<16x16xf32> -> vector<16x16xf32>
    %cst_178 = arith.constant 0.353553385 : f32
    %316 = vector.broadcast %cst_178 : f32 to vector<16x16xf32>
    %317 = arith.mulf %315, %316 : vector<16x16xf32>
    %318 = arith.addf %317, %1 : vector<16x16xf32>
    %319 = math.exp %318 : vector<16x16xf32>
    %cst_179 = arith.constant dense<0.000000e+00> : vector<16xf32>
    %320 = vector.multi_reduction <add>, %319, %cst_179 [1] : vector<16x16xf32> to vector<16xf32>
    %321 = vector.shape_cast %320 : vector<16xf32> to vector<16x1xf32>
    %322 = tpu.reciprocal %321 {approx = true} : vector<16x1xf32> -> vector<16x1xf32>
    %323 = vector.broadcast %322 : vector<16x1xf32> to vector<16x16xf32>
    %324 = arith.mulf %319, %323 : vector<16x16xf32>
    %c0_180 = arith.constant 0 : index
    %c0_181 = arith.constant 0 : index
    %325 = vector.load %arg10[%c0_180, %c0_181] : memref<16x16xf32, #tpu.memory_space<vmem>>, vector<16x16xf32>
    tpu.vector_store %arg10[%c0_180, %c0_181], %324 {strides = array<i32>} : memref<16x16xf32, #tpu.memory_space<vmem>>, vector<16x16xf32>,
    %326 = arith.truncf %324 : vector<16x16xf32> to vector<16x16xbf16>
    %cst_182 = arith.constant dense<0.000000e+00> : vector<16x8xf32>
    %327 = tpu.matmul %326, %314, %cst_182 {dimension_numbers = #tpu.dot_dimension_numbers<[1], [0], [0], [1], [0, 0, 1, 1], [], []>} : vector<16x16xbf16>, vector<16x8xbf16>, vector<16x8xf32> -> vector<16x8xf32>
    %328 = arith.truncf %327 : vector<16x8xf32> to vector<16x8xbf16>
    %c19 = arith.constant 19 : index
    %c0_183 = arith.constant 0 : index
    %c0_184 = arith.constant 0 : index
    %329 = vector.load %arg2[%c19, %c0_183, %c0_184] : memref<32x32x8xbf16, #tpu.memory_space<vmem>>, vector<1x32x8xbf16>
    %330 = vector.shape_cast %329 : vector<1x32x8xbf16> to vector<32x8xbf16>
    %cst_185 = arith.constant dense<0.000000e+00> : vector<16x32xf32>
    %331 = tpu.matmul %328, %330, %cst_185 {dimension_numbers = #tpu.dot_dimension_numbers<[1], [1], [0], [0], [0, 0, 1, 0], [], []>} : vector<16x8xbf16>, vector<32x8xbf16>, vector<16x32xf32> -> vector<16x32xf32>
    %332 = arith.addf %290, %331 : vector<16x32xf32>
    %c20 = arith.constant 20 : index
    %c0_186 = arith.constant 0 : index
    %c0_187 = arith.constant 0 : index
    %333 = vector.load %arg2[%c20, %c0_186, %c0_187] : memref<32x32x8xbf16, #tpu.memory_space<vmem>>, vector<1x32x8xbf16>
    %334 = vector.shape_cast %333 : vector<1x32x8xbf16> to vector<32x8xbf16>
    %cst_188 = arith.constant dense<0.000000e+00> : vector<16x8xf32>
    %335 = tpu.matmul %289, %334, %cst_188 {dimension_numbers = #tpu.dot_dimension_numbers<[1], [0], [0], [1], [0, 0, 1, 1], [], []>} : vector<16x32xbf16>, vector<32x8xbf16>, vector<16x8xf32> -> vector<16x8xf32>
    %c15_189 = arith.constant 15 : index
    %c0_190 = arith.constant 0 : index
    %c0_191 = arith.constant 0 : index
    %336 = vector.load %arg3[%c15_189, %c0_190, %c0_191] : memref<24x1x8xf32, #tpu.memory_space<vmem>>, vector<1x1x8xf32>
    %337 = vector.shape_cast %336 : vector<1x1x8xf32> to vector<1x8xf32>
    %338 = vector.broadcast %337 : vector<1x8xf32> to vector<16x8xf32>
    %339 = arith.addf %335, %338 : vector<16x8xf32>
    %340 = arith.truncf %339 : vector<16x8xf32> to vector<16x8xbf16>
    %c21 = arith.constant 21 : index
    %c0_192 = arith.constant 0 : index
    %c0_193 = arith.constant 0 : index
    %341 = vector.load %arg2[%c21, %c0_192, %c0_193] : memref<32x32x8xbf16, #tpu.memory_space<vmem>>, vector<1x32x8xbf16>
    %342 = vector.shape_cast %341 : vector<1x32x8xbf16> to vector<32x8xbf16>
    %cst_194 = arith.constant dense<0.000000e+00> : vector<16x8xf32>
    %343 = tpu.matmul %289, %342, %cst_194 {dimension_numbers = #tpu.dot_dimension_numbers<[1], [0], [0], [1], [0, 0, 1, 1], [], []>} : vector<16x32xbf16>, vector<32x8xbf16>, vector<16x8xf32> -> vector<16x8xf32>
    %c16_195 = arith.constant 16 : index
    %c0_196 = arith.constant 0 : index
    %c0_197 = arith.constant 0 : index
    %344 = vector.load %arg3[%c16_195, %c0_196, %c0_197] : memref<24x1x8xf32, #tpu.memory_space<vmem>>, vector<1x1x8xf32>
    %345 = vector.shape_cast %344 : vector<1x1x8xf32> to vector<1x8xf32>
    %346 = vector.broadcast %345 : vector<1x8xf32> to vector<16x8xf32>
    %347 = arith.addf %343, %346 : vector<16x8xf32>
    %348 = arith.truncf %347 : vector<16x8xf32> to vector<16x8xbf16>
    %c22 = arith.constant 22 : index
    %c0_198 = arith.constant 0 : index
    %c0_199 = arith.constant 0 : index
    %349 = vector.load %arg2[%c22, %c0_198, %c0_199] : memref<32x32x8xbf16, #tpu.memory_space<vmem>>, vector<1x32x8xbf16>
    %350 = vector.shape_cast %349 : vector<1x32x8xbf16> to vector<32x8xbf16>
    %cst_200 = arith.constant dense<0.000000e+00> : vector<16x8xf32>
    %351 = tpu.matmul %289, %350, %cst_200 {dimension_numbers = #tpu.dot_dimension_numbers<[1], [0], [0], [1], [0, 0, 1, 1], [], []>} : vector<16x32xbf16>, vector<32x8xbf16>, vector<16x8xf32> -> vector<16x8xf32>
    %c17_201 = arith.constant 17 : index
    %c0_202 = arith.constant 0 : index
    %c0_203 = arith.constant 0 : index
    %352 = vector.load %arg3[%c17_201, %c0_202, %c0_203] : memref<24x1x8xf32, #tpu.memory_space<vmem>>, vector<1x1x8xf32>
    %353 = vector.shape_cast %352 : vector<1x1x8xf32> to vector<1x8xf32>
    %354 = vector.broadcast %353 : vector<1x8xf32> to vector<16x8xf32>
    %355 = arith.addf %351, %354 : vector<16x8xf32>
    %356 = arith.truncf %355 : vector<16x8xf32> to vector<16x8xbf16>
    %cst_204 = arith.constant dense<0.000000e+00> : vector<16x16xf32>
    %357 = tpu.matmul %340, %348, %cst_204 {dimension_numbers = #tpu.dot_dimension_numbers<[1], [1], [0], [0], [0, 0, 1, 0], [], []>} : vector<16x8xbf16>, vector<16x8xbf16>, vector<16x16xf32> -> vector<16x16xf32>
    %cst_205 = arith.constant 0.353553385 : f32
    %358 = vector.broadcast %cst_205 : f32 to vector<16x16xf32>
    %359 = arith.mulf %357, %358 : vector<16x16xf32>
    %360 = arith.addf %359, %1 : vector<16x16xf32>
    %361 = math.exp %360 : vector<16x16xf32>
    %cst_206 = arith.constant dense<0.000000e+00> : vector<16xf32>
    %362 = vector.multi_reduction <add>, %361, %cst_206 [1] : vector<16x16xf32> to vector<16xf32>
    %363 = vector.shape_cast %362 : vector<16xf32> to vector<16x1xf32>
    %364 = tpu.reciprocal %363 {approx = true} : vector<16x1xf32> -> vector<16x1xf32>
    %365 = vector.broadcast %364 : vector<16x1xf32> to vector<16x16xf32>
    %366 = arith.mulf %361, %365 : vector<16x16xf32>
    %367 = arith.truncf %366 : vector<16x16xf32> to vector<16x16xbf16>
    %cst_207 = arith.constant dense<0.000000e+00> : vector<16x8xf32>
    %368 = tpu.matmul %367, %356, %cst_207 {dimension_numbers = #tpu.dot_dimension_numbers<[1], [0], [0], [1], [0, 0, 1, 1], [], []>} : vector<16x16xbf16>, vector<16x8xbf16>, vector<16x8xf32> -> vector<16x8xf32>
    %369 = arith.truncf %368 : vector<16x8xf32> to vector<16x8xbf16>
    %c23 = arith.constant 23 : index
    %c0_208 = arith.constant 0 : index
    %c0_209 = arith.constant 0 : index
    %370 = vector.load %arg2[%c23, %c0_208, %c0_209] : memref<32x32x8xbf16, #tpu.memory_space<vmem>>, vector<1x32x8xbf16>
    %371 = vector.shape_cast %370 : vector<1x32x8xbf16> to vector<32x8xbf16>
    %cst_210 = arith.constant dense<0.000000e+00> : vector<16x32xf32>
    %372 = tpu.matmul %369, %371, %cst_210 {dimension_numbers = #tpu.dot_dimension_numbers<[1], [1], [0], [0], [0, 0, 1, 0], [], []>} : vector<16x8xbf16>, vector<32x8xbf16>, vector<16x32xf32> -> vector<16x32xf32>
    %373 = arith.addf %332, %372 : vector<16x32xf32>
    %c24 = arith.constant 24 : index
    %c0_211 = arith.constant 0 : index
    %c0_212 = arith.constant 0 : index
    %374 = vector.load %arg2[%c24, %c0_211, %c0_212] : memref<32x32x8xbf16, #tpu.memory_space<vmem>>, vector<1x32x8xbf16>
    %375 = vector.shape_cast %374 : vector<1x32x8xbf16> to vector<32x8xbf16>
    %cst_213 = arith.constant dense<0.000000e+00> : vector<16x8xf32>
    %376 = tpu.matmul %289, %375, %cst_213 {dimension_numbers = #tpu.dot_dimension_numbers<[1], [0], [0], [1], [0, 0, 1, 1], [], []>} : vector<16x32xbf16>, vector<32x8xbf16>, vector<16x8xf32> -> vector<16x8xf32>
    %c18_214 = arith.constant 18 : index
    %c0_215 = arith.constant 0 : index
    %c0_216 = arith.constant 0 : index
    %377 = vector.load %arg3[%c18_214, %c0_215, %c0_216] : memref<24x1x8xf32, #tpu.memory_space<vmem>>, vector<1x1x8xf32>
    %378 = vector.shape_cast %377 : vector<1x1x8xf32> to vector<1x8xf32>
    %379 = vector.broadcast %378 : vector<1x8xf32> to vector<16x8xf32>
    %380 = arith.addf %376, %379 : vector<16x8xf32>
    %381 = arith.truncf %380 : vector<16x8xf32> to vector<16x8xbf16>
    %c25 = arith.constant 25 : index
    %c0_217 = arith.constant 0 : index
    %c0_218 = arith.constant 0 : index
    %382 = vector.load %arg2[%c25, %c0_217, %c0_218] : memref<32x32x8xbf16, #tpu.memory_space<vmem>>, vector<1x32x8xbf16>
    %383 = vector.shape_cast %382 : vector<1x32x8xbf16> to vector<32x8xbf16>
    %cst_219 = arith.constant dense<0.000000e+00> : vector<16x8xf32>
    %384 = tpu.matmul %289, %383, %cst_219 {dimension_numbers = #tpu.dot_dimension_numbers<[1], [0], [0], [1], [0, 0, 1, 1], [], []>} : vector<16x32xbf16>, vector<32x8xbf16>, vector<16x8xf32> -> vector<16x8xf32>
    %c19_220 = arith.constant 19 : index
    %c0_221 = arith.constant 0 : index
    %c0_222 = arith.constant 0 : index
    %385 = vector.load %arg3[%c19_220, %c0_221, %c0_222] : memref<24x1x8xf32, #tpu.memory_space<vmem>>, vector<1x1x8xf32>
    %386 = vector.shape_cast %385 : vector<1x1x8xf32> to vector<1x8xf32>
    %387 = vector.broadcast %386 : vector<1x8xf32> to vector<16x8xf32>
    %388 = arith.addf %384, %387 : vector<16x8xf32>
    %389 = arith.truncf %388 : vector<16x8xf32> to vector<16x8xbf16>
    %c26 = arith.constant 26 : index
    %c0_223 = arith.constant 0 : index
    %c0_224 = arith.constant 0 : index
    %390 = vector.load %arg2[%c26, %c0_223, %c0_224] : memref<32x32x8xbf16, #tpu.memory_space<vmem>>, vector<1x32x8xbf16>
    %391 = vector.shape_cast %390 : vector<1x32x8xbf16> to vector<32x8xbf16>
    %cst_225 = arith.constant dense<0.000000e+00> : vector<16x8xf32>
    %392 = tpu.matmul %289, %391, %cst_225 {dimension_numbers = #tpu.dot_dimension_numbers<[1], [0], [0], [1], [0, 0, 1, 1], [], []>} : vector<16x32xbf16>, vector<32x8xbf16>, vector<16x8xf32> -> vector<16x8xf32>
    %c20_226 = arith.constant 20 : index
    %c0_227 = arith.constant 0 : index
    %c0_228 = arith.constant 0 : index
    %393 = vector.load %arg3[%c20_226, %c0_227, %c0_228] : memref<24x1x8xf32, #tpu.memory_space<vmem>>, vector<1x1x8xf32>
    %394 = vector.shape_cast %393 : vector<1x1x8xf32> to vector<1x8xf32>
    %395 = vector.broadcast %394 : vector<1x8xf32> to vector<16x8xf32>
    %396 = arith.addf %392, %395 : vector<16x8xf32>
    %397 = arith.truncf %396 : vector<16x8xf32> to vector<16x8xbf16>
    %cst_229 = arith.constant dense<0.000000e+00> : vector<16x16xf32>
    %398 = tpu.matmul %381, %389, %cst_229 {dimension_numbers = #tpu.dot_dimension_numbers<[1], [1], [0], [0], [0, 0, 1, 0], [], []>} : vector<16x8xbf16>, vector<16x8xbf16>, vector<16x16xf32> -> vector<16x16xf32>
    %cst_230 = arith.constant 0.353553385 : f32
    %399 = vector.broadcast %cst_230 : f32 to vector<16x16xf32>
    %400 = arith.mulf %398, %399 : vector<16x16xf32>
    %401 = arith.addf %400, %1 : vector<16x16xf32>
    %402 = math.exp %401 : vector<16x16xf32>
    %cst_231 = arith.constant dense<0.000000e+00> : vector<16xf32>
    %403 = vector.multi_reduction <add>, %402, %cst_231 [1] : vector<16x16xf32> to vector<16xf32>
    %404 = vector.shape_cast %403 : vector<16xf32> to vector<16x1xf32>
    %405 = tpu.reciprocal %404 {approx = true} : vector<16x1xf32> -> vector<16x1xf32>
    %406 = vector.broadcast %405 : vector<16x1xf32> to vector<16x16xf32>
    %407 = arith.mulf %402, %406 : vector<16x16xf32>
    %408 = arith.truncf %407 : vector<16x16xf32> to vector<16x16xbf16>
    %cst_232 = arith.constant dense<0.000000e+00> : vector<16x8xf32>
    %409 = tpu.matmul %408, %397, %cst_232 {dimension_numbers = #tpu.dot_dimension_numbers<[1], [0], [0], [1], [0, 0, 1, 1], [], []>} : vector<16x16xbf16>, vector<16x8xbf16>, vector<16x8xf32> -> vector<16x8xf32>
    %410 = arith.truncf %409 : vector<16x8xf32> to vector<16x8xbf16>
    %c27 = arith.constant 27 : index
    %c0_233 = arith.constant 0 : index
    %c0_234 = arith.constant 0 : index
    %411 = vector.load %arg2[%c27, %c0_233, %c0_234] : memref<32x32x8xbf16, #tpu.memory_space<vmem>>, vector<1x32x8xbf16>
    %412 = vector.shape_cast %411 : vector<1x32x8xbf16> to vector<32x8xbf16>
    %cst_235 = arith.constant dense<0.000000e+00> : vector<16x32xf32>
    %413 = tpu.matmul %410, %412, %cst_235 {dimension_numbers = #tpu.dot_dimension_numbers<[1], [1], [0], [0], [0, 0, 1, 0], [], []>} : vector<16x8xbf16>, vector<32x8xbf16>, vector<16x32xf32> -> vector<16x32xf32>
    %414 = arith.addf %373, %413 : vector<16x32xf32>
    %c28 = arith.constant 28 : index
    %c0_236 = arith.constant 0 : index
    %c0_237 = arith.constant 0 : index
    %415 = vector.load %arg2[%c28, %c0_236, %c0_237] : memref<32x32x8xbf16, #tpu.memory_space<vmem>>, vector<1x32x8xbf16>
    %416 = vector.shape_cast %415 : vector<1x32x8xbf16> to vector<32x8xbf16>
    %cst_238 = arith.constant dense<0.000000e+00> : vector<16x8xf32>
    %417 = tpu.matmul %289, %416, %cst_238 {dimension_numbers = #tpu.dot_dimension_numbers<[1], [0], [0], [1], [0, 0, 1, 1], [], []>} : vector<16x32xbf16>, vector<32x8xbf16>, vector<16x8xf32> -> vector<16x8xf32>
    %c21_239 = arith.constant 21 : index
    %c0_240 = arith.constant 0 : index
    %c0_241 = arith.constant 0 : index
    %418 = vector.load %arg3[%c21_239, %c0_240, %c0_241] : memref<24x1x8xf32, #tpu.memory_space<vmem>>, vector<1x1x8xf32>
    %419 = vector.shape_cast %418 : vector<1x1x8xf32> to vector<1x8xf32>
    %420 = vector.broadcast %419 : vector<1x8xf32> to vector<16x8xf32>
    %421 = arith.addf %417, %420 : vector<16x8xf32>
    %422 = arith.truncf %421 : vector<16x8xf32> to vector<16x8xbf16>
    %c29 = arith.constant 29 : index
    %c0_242 = arith.constant 0 : index
    %c0_243 = arith.constant 0 : index
    %423 = vector.load %arg2[%c29, %c0_242, %c0_243] : memref<32x32x8xbf16, #tpu.memory_space<vmem>>, vector<1x32x8xbf16>
    %424 = vector.shape_cast %423 : vector<1x32x8xbf16> to vector<32x8xbf16>
    %cst_244 = arith.constant dense<0.000000e+00> : vector<16x8xf32>
    %425 = tpu.matmul %289, %424, %cst_244 {dimension_numbers = #tpu.dot_dimension_numbers<[1], [0], [0], [1], [0, 0, 1, 1], [], []>} : vector<16x32xbf16>, vector<32x8xbf16>, vector<16x8xf32> -> vector<16x8xf32>
    %c22_245 = arith.constant 22 : index
    %c0_246 = arith.constant 0 : index
    %c0_247 = arith.constant 0 : index
    %426 = vector.load %arg3[%c22_245, %c0_246, %c0_247] : memref<24x1x8xf32, #tpu.memory_space<vmem>>, vector<1x1x8xf32>
    %427 = vector.shape_cast %426 : vector<1x1x8xf32> to vector<1x8xf32>
    %428 = vector.broadcast %427 : vector<1x8xf32> to vector<16x8xf32>
    %429 = arith.addf %425, %428 : vector<16x8xf32>
    %430 = arith.truncf %429 : vector<16x8xf32> to vector<16x8xbf16>
    %c30 = arith.constant 30 : index
    %c0_248 = arith.constant 0 : index
    %c0_249 = arith.constant 0 : index
    %431 = vector.load %arg2[%c30, %c0_248, %c0_249] : memref<32x32x8xbf16, #tpu.memory_space<vmem>>, vector<1x32x8xbf16>
    %432 = vector.shape_cast %431 : vector<1x32x8xbf16> to vector<32x8xbf16>
    %cst_250 = arith.constant dense<0.000000e+00> : vector<16x8xf32>
    %433 = tpu.matmul %289, %432, %cst_250 {dimension_numbers = #tpu.dot_dimension_numbers<[1], [0], [0], [1], [0, 0, 1, 1], [], []>} : vector<16x32xbf16>, vector<32x8xbf16>, vector<16x8xf32> -> vector<16x8xf32>
    %c23_251 = arith.constant 23 : index
    %c0_252 = arith.constant 0 : index
    %c0_253 = arith.constant 0 : index
    %434 = vector.load %arg3[%c23_251, %c0_252, %c0_253] : memref<24x1x8xf32, #tpu.memory_space<vmem>>, vector<1x1x8xf32>
    %435 = vector.shape_cast %434 : vector<1x1x8xf32> to vector<1x8xf32>
    %436 = vector.broadcast %435 : vector<1x8xf32> to vector<16x8xf32>
    %437 = arith.addf %433, %436 : vector<16x8xf32>
    %438 = arith.truncf %437 : vector<16x8xf32> to vector<16x8xbf16>
    %cst_254 = arith.constant dense<0.000000e+00> : vector<16x16xf32>
    %439 = tpu.matmul %422, %430, %cst_254 {dimension_numbers = #tpu.dot_dimension_numbers<[1], [1], [0], [0], [0, 0, 1, 0], [], []>} : vector<16x8xbf16>, vector<16x8xbf16>, vector<16x16xf32> -> vector<16x16xf32>
    %cst_255 = arith.constant 0.353553385 : f32
    %440 = vector.broadcast %cst_255 : f32 to vector<16x16xf32>
    %441 = arith.mulf %439, %440 : vector<16x16xf32>
    %442 = arith.addf %441, %1 : vector<16x16xf32>
    %443 = math.exp %442 : vector<16x16xf32>
    %cst_256 = arith.constant dense<0.000000e+00> : vector<16xf32>
    %444 = vector.multi_reduction <add>, %443, %cst_256 [1] : vector<16x16xf32> to vector<16xf32>
    %445 = vector.shape_cast %444 : vector<16xf32> to vector<16x1xf32>
    %446 = tpu.reciprocal %445 {approx = true} : vector<16x1xf32> -> vector<16x1xf32>
    %447 = vector.broadcast %446 : vector<16x1xf32> to vector<16x16xf32>
    %448 = arith.mulf %443, %447 : vector<16x16xf32>
    %449 = arith.truncf %448 : vector<16x16xf32> to vector<16x16xbf16>
    %cst_257 = arith.constant dense<0.000000e+00> : vector<16x8xf32>
    %450 = tpu.matmul %449, %438, %cst_257 {dimension_numbers = #tpu.dot_dimension_numbers<[1], [0], [0], [1], [0, 0, 1, 1], [], []>} : vector<16x16xbf16>, vector<16x8xbf16>, vector<16x8xf32> -> vector<16x8xf32>
    %451 = arith.truncf %450 : vector<16x8xf32> to vector<16x8xbf16>
    %c31 = arith.constant 31 : index
    %c0_258 = arith.constant 0 : index
    %c0_259 = arith.constant 0 : index
    %452 = vector.load %arg2[%c31, %c0_258, %c0_259] : memref<32x32x8xbf16, #tpu.memory_space<vmem>>, vector<1x32x8xbf16>
    %453 = vector.shape_cast %452 : vector<1x32x8xbf16> to vector<32x8xbf16>
    %cst_260 = arith.constant dense<0.000000e+00> : vector<16x32xf32>
    %454 = tpu.matmul %451, %453, %cst_260 {dimension_numbers = #tpu.dot_dimension_numbers<[1], [1], [0], [0], [0, 0, 1, 0], [], []>} : vector<16x8xbf16>, vector<32x8xbf16>, vector<16x32xf32> -> vector<16x32xf32>
    %455 = arith.addf %414, %454 : vector<16x32xf32>
    %456 = arith.addf %260, %455 : vector<16x32xf32>
    %c9_261 = arith.constant 9 : index
    %c0_262 = arith.constant 0 : index
    %c0_263 = arith.constant 0 : index
    %457 = vector.load %arg4[%c9_261, %c0_262, %c0_263] : memref<14x1x128xf32, #tpu.memory_space<vmem>>, vector<1x1x128xf32>
    %458 = vector.shape_cast %457 : vector<1x1x128xf32> to vector<1x128xf32>
    %459 = vector.extract_strided_slice %458 {offsets = [0, 0], sizes = [1, 32], strides = [1, 1]} : vector<1x128xf32> to vector<1x32xf32>
    %460 = vector.broadcast %459 : vector<1x32xf32> to vector<16x32xf32>
    %461 = arith.addf %456, %460 : vector<16x32xf32>
    %c10_264 = arith.constant 10 : index
    %c0_265 = arith.constant 0 : index
    %c0_266 = arith.constant 0 : index
    %462 = vector.load %arg4[%c10_264, %c0_265, %c0_266] : memref<14x1x128xf32, #tpu.memory_space<vmem>>, vector<1x1x128xf32>
    %463 = vector.shape_cast %462 : vector<1x1x128xf32> to vector<1x128xf32>
    %464 = vector.extract_strided_slice %463 {offsets = [0, 0], sizes = [1, 32], strides = [1, 1]} : vector<1x128xf32> to vector<1x32xf32>
    %c11_267 = arith.constant 11 : index
    %c0_268 = arith.constant 0 : index
    %c0_269 = arith.constant 0 : index
    %465 = vector.load %arg4[%c11_267, %c0_268, %c0_269] : memref<14x1x128xf32, #tpu.memory_space<vmem>>, vector<1x1x128xf32>
    %466 = vector.shape_cast %465 : vector<1x1x128xf32> to vector<1x128xf32>
    %467 = vector.extract_strided_slice %466 {offsets = [0, 0], sizes = [1, 32], strides = [1, 1]} : vector<1x128xf32> to vector<1x32xf32>
    %cst_270 = arith.constant dense<0.000000e+00> : vector<16xf32>
    %468 = vector.multi_reduction <add>, %461, %cst_270 [1] : vector<16x32xf32> to vector<16xf32>
    %469 = vector.shape_cast %468 : vector<16xf32> to vector<16x1xf32>
    %cst_271 = arith.constant 3.200000e+01 : f32
    %470 = vector.broadcast %cst_271 : f32 to vector<16x1xf32>
    %471 = arith.divf %469, %470 : vector<16x1xf32>
    %472 = vector.broadcast %471 : vector<16x1xf32> to vector<16x32xf32>
    %473 = arith.subf %461, %472 : vector<16x32xf32>
    %474 = arith.mulf %473, %473 : vector<16x32xf32>
    %cst_272 = arith.constant dense<0.000000e+00> : vector<16xf32>
    %475 = vector.multi_reduction <add>, %474, %cst_272 [1] : vector<16x32xf32> to vector<16xf32>
    %476 = vector.shape_cast %475 : vector<16xf32> to vector<16x1xf32>
    %cst_273 = arith.constant 3.200000e+01 : f32
    %477 = vector.broadcast %cst_273 : f32 to vector<16x1xf32>
    %478 = arith.divf %476, %477 : vector<16x1xf32>
    %479 = vector.broadcast %471 : vector<16x1xf32> to vector<16x32xf32>
    %480 = arith.subf %461, %479 : vector<16x32xf32>
    %cst_274 = arith.constant 9.99999974E-6 : f32
    %481 = vector.broadcast %cst_274 : f32 to vector<16x1xf32>
    %482 = arith.addf %478, %481 : vector<16x1xf32>
    %483 = math.rsqrt %482 : vector<16x1xf32>
    %484 = vector.broadcast %483 : vector<16x1xf32> to vector<16x32xf32>
    %485 = arith.mulf %480, %484 : vector<16x32xf32>
    %486 = vector.broadcast %464 : vector<1x32xf32> to vector<16x32xf32>
    %487 = arith.mulf %485, %486 : vector<16x32xf32>
    %488 = vector.broadcast %467 : vector<1x32xf32> to vector<16x32xf32>
    %489 = arith.addf %487, %488 : vector<16x32xf32>
    %490 = arith.truncf %489 : vector<16x32xf32> to vector<16x32xbf16>
    %c1_275 = arith.constant 1 : index
    %c0_276 = arith.constant 0 : index
    %c0_277 = arith.constant 0 : index
    %491 = vector.load %arg5[%c1_275, %c0_276, %c0_277] : memref<2x32x128xbf16, #tpu.memory_space<vmem>>, vector<1x32x128xbf16>
    %492 = vector.shape_cast %491 : vector<1x32x128xbf16> to vector<32x128xbf16>
    %cst_278 = arith.constant dense<0.000000e+00> : vector<16x128xf32>
    %493 = tpu.matmul %490, %492, %cst_278 {dimension_numbers = #tpu.dot_dimension_numbers<[1], [0], [0], [1], [0, 0, 1, 1], [], []>} : vector<16x32xbf16>, vector<32x128xbf16>, vector<16x128xf32> -> vector<16x128xf32>
    %c13_279 = arith.constant 13 : index
    %c0_280 = arith.constant 0 : index
    %c0_281 = arith.constant 0 : index
    %494 = vector.load %arg4[%c13_279, %c0_280, %c0_281] : memref<14x1x128xf32, #tpu.memory_space<vmem>>, vector<1x1x128xf32>
    %495 = vector.shape_cast %494 : vector<1x1x128xf32> to vector<1x128xf32>
    %496 = vector.broadcast %495 : vector<1x128xf32> to vector<16x128xf32>
    %497 = arith.addf %493, %496 : vector<16x128xf32>
    %cst_282 = arith.constant 5.000000e-01 : f32
    %498 = vector.broadcast %cst_282 : f32 to vector<16x128xf32>
    %499 = arith.mulf %498, %497 : vector<16x128xf32>
    %500 = arith.mulf %497, %497 : vector<16x128xf32>
    %501 = arith.mulf %500, %497 : vector<16x128xf32>
    %cst_283 = arith.constant 4.471500e-02 : f32
    %502 = vector.broadcast %cst_283 : f32 to vector<16x128xf32>
    %503 = arith.mulf %502, %501 : vector<16x128xf32>
    %504 = arith.addf %497, %503 : vector<16x128xf32>
    %cst_284 = arith.constant 0.797884583 : f32
    %505 = vector.broadcast %cst_284 : f32 to vector<16x128xf32>
    %506 = arith.mulf %505, %504 : vector<16x128xf32>
    %507 = math.tanh %506 : vector<16x128xf32>
    %cst_285 = arith.constant 1.000000e+00 : f32
    %508 = vector.broadcast %cst_285 : f32 to vector<16x128xf32>
    %509 = arith.addf %508, %507 : vector<16x128xf32>
    %510 = arith.mulf %499, %509 : vector<16x128xf32>
    %511 = arith.truncf %510 : vector<16x128xf32> to vector<16x128xbf16>
    %c1_286 = arith.constant 1 : index
    %c0_287 = arith.constant 0 : index
    %c0_288 = arith.constant 0 : index
    %512 = vector.load %arg6[%c1_286, %c0_287, %c0_288] : memref<2x128x32xbf16, #tpu.memory_space<vmem>>, vector<1x128x32xbf16>
    %513 = vector.shape_cast %512 : vector<1x128x32xbf16> to vector<128x32xbf16>
    %cst_289 = arith.constant dense<0.000000e+00> : vector<16x32xf32>
    %514 = tpu.matmul %511, %513, %cst_289 {dimension_numbers = #tpu.dot_dimension_numbers<[1], [0], [0], [1], [0, 0, 1, 1], [], []>} : vector<16x128xbf16>, vector<128x32xbf16>, vector<16x32xf32> -> vector<16x32xf32>
    %515 = arith.addf %461, %514 : vector<16x32xf32>
    %c12_290 = arith.constant 12 : index
    %c0_291 = arith.constant 0 : index
    %c0_292 = arith.constant 0 : index
    %516 = vector.load %arg4[%c12_290, %c0_291, %c0_292] : memref<14x1x128xf32, #tpu.memory_space<vmem>>, vector<1x1x128xf32>
    %517 = vector.shape_cast %516 : vector<1x1x128xf32> to vector<1x128xf32>
    %518 = vector.extract_strided_slice %517 {offsets = [0, 0], sizes = [1, 32], strides = [1, 1]} : vector<1x128xf32> to vector<1x32xf32>
    %519 = vector.broadcast %518 : vector<1x32xf32> to vector<16x32xf32>
    %520 = arith.addf %515, %519 : vector<16x32xf32>
    %c0_293 = arith.constant 0 : index
    %c0_294 = arith.constant 0 : index
    %c0_295 = arith.constant 0 : index
    %521 = vector.load %arg7[%c0_293, %c0_294, %c0_295] : memref<4x1x128xf32, #tpu.memory_space<vmem>>, vector<1x1x128xf32>
    %522 = vector.shape_cast %521 : vector<1x1x128xf32> to vector<1x128xf32>
    %523 = vector.extract_strided_slice %522 {offsets = [0, 0], sizes = [1, 32], strides = [1, 1]} : vector<1x128xf32> to vector<1x32xf32>
    %c1_296 = arith.constant 1 : index
    %c0_297 = arith.constant 0 : index
    %c0_298 = arith.constant 0 : index
    %524 = vector.load %arg7[%c1_296, %c0_297, %c0_298] : memref<4x1x128xf32, #tpu.memory_space<vmem>>, vector<1x1x128xf32>
    %525 = vector.shape_cast %524 : vector<1x1x128xf32> to vector<1x128xf32>
    %526 = vector.extract_strided_slice %525 {offsets = [0, 0], sizes = [1, 32], strides = [1, 1]} : vector<1x128xf32> to vector<1x32xf32>
    %cst_299 = arith.constant dense<0.000000e+00> : vector<16xf32>
    %527 = vector.multi_reduction <add>, %520, %cst_299 [1] : vector<16x32xf32> to vector<16xf32>
    %528 = vector.shape_cast %527 : vector<16xf32> to vector<16x1xf32>
    %cst_300 = arith.constant 3.200000e+01 : f32
    %529 = vector.broadcast %cst_300 : f32 to vector<16x1xf32>
    %530 = arith.divf %528, %529 : vector<16x1xf32>
    %531 = vector.broadcast %530 : vector<16x1xf32> to vector<16x32xf32>
    %532 = arith.subf %520, %531 : vector<16x32xf32>
    %533 = arith.mulf %532, %532 : vector<16x32xf32>
    %cst_301 = arith.constant dense<0.000000e+00> : vector<16xf32>
    %534 = vector.multi_reduction <add>, %533, %cst_301 [1] : vector<16x32xf32> to vector<16xf32>
    %535 = vector.shape_cast %534 : vector<16xf32> to vector<16x1xf32>
    %cst_302 = arith.constant 3.200000e+01 : f32
    %536 = vector.broadcast %cst_302 : f32 to vector<16x1xf32>
    %537 = arith.divf %535, %536 : vector<16x1xf32>
    %538 = vector.broadcast %530 : vector<16x1xf32> to vector<16x32xf32>
    %539 = arith.subf %520, %538 : vector<16x32xf32>
    %cst_303 = arith.constant 9.99999974E-6 : f32
    %540 = vector.broadcast %cst_303 : f32 to vector<16x1xf32>
    %541 = arith.addf %537, %540 : vector<16x1xf32>
    %542 = math.rsqrt %541 : vector<16x1xf32>
    %543 = vector.broadcast %542 : vector<16x1xf32> to vector<16x32xf32>
    %544 = arith.mulf %539, %543 : vector<16x32xf32>
    %545 = vector.broadcast %523 : vector<1x32xf32> to vector<16x32xf32>
    %546 = arith.mulf %544, %545 : vector<16x32xf32>
    %547 = vector.broadcast %526 : vector<1x32xf32> to vector<16x32xf32>
    %548 = arith.addf %546, %547 : vector<16x32xf32>
    %549 = arith.truncf %548 : vector<16x32xf32> to vector<16x32xbf16>
    %550 = tpu.iota {dimensions = array<i32: 0>} : vector<2x16xi32>
    %551 = tpu.iota {dimensions = array<i32: 1>} : vector<2x16xi32>
    %c8_i32 = arith.constant 8 : i32
    %552 = vector.broadcast %c8_i32 : i32 to vector<2x16xi32>
    %553 = arith.muli %550, %552 : vector<2x16xi32>
    %554 = arith.cmpi sge, %551, %553 : vector<2x16xi32>
    %c1_i32 = arith.constant 1 : i32
    %555 = vector.broadcast %c1_i32 : i32 to vector<2x16xi32>
    %556 = arith.addi %550, %555 : vector<2x16xi32>
    %c8_i32_304 = arith.constant 8 : i32
    %557 = vector.broadcast %c8_i32_304 : i32 to vector<2x16xi32>
    %558 = arith.muli %556, %557 : vector<2x16xi32>
    %559 = arith.cmpi slt, %551, %558 : vector<2x16xi32>
    %560 = arith.andi %554, %559 : vector<2x16xi1>
    %cst_305 = arith.constant 1.250000e-01 : f32
    %cst_306 = arith.constant 0.000000e+00 : f32
    %561 = vector.broadcast %cst_305 : f32 to vector<2x16xf32>
    %562 = vector.broadcast %cst_306 : f32 to vector<2x16xf32>
    %563 = arith.select %560, %561, %562 : vector<2x16xi1>, vector<2x16xf32>
    %564 = arith.truncf %563 : vector<2x16xf32> to vector<2x16xbf16>
    %cst_307 = arith.constant dense<0.000000e+00> : vector<2x32xf32>
    %565 = tpu.matmul %564, %549, %cst_307 {dimension_numbers = #tpu.dot_dimension_numbers<[1], [0], [0], [1], [0, 0, 1, 1], [], []>} : vector<2x16xbf16>, vector<16x32xbf16>, vector<2x32xf32> -> vector<2x32xf32>
    %c0_308 = arith.constant 0 : index
    %c0_309 = arith.constant 0 : index
    %c0_310 = arith.constant 0 : index
    %566 = vector.load %arg8[%c0_308, %c0_309, %c0_310] : memref<2x32x128xbf16, #tpu.memory_space<vmem>>, vector<1x32x128xbf16>
    %567 = vector.shape_cast %566 : vector<1x32x128xbf16> to vector<32x128xbf16>
    %568 = vector.extract_strided_slice %567 {offsets = [0, 0], sizes = [32, 16], strides = [1, 1]} : vector<32x128xbf16> to vector<32x16xbf16>
    %c1_311 = arith.constant 1 : index
    %c0_312 = arith.constant 0 : index
    %c0_313 = arith.constant 0 : index
    %569 = vector.load %arg8[%c1_311, %c0_312, %c0_313] : memref<2x32x128xbf16, #tpu.memory_space<vmem>>, vector<1x32x128xbf16>
    %570 = vector.shape_cast %569 : vector<1x32x128xbf16> to vector<32x128xbf16>
    %571 = vector.extract_strided_slice %570 {offsets = [0, 0], sizes = [16, 4], strides = [1, 1]} : vector<32x128xbf16> to vector<16x4xbf16>
    %c2_314 = arith.constant 2 : index
    %c0_315 = arith.constant 0 : index
    %c0_316 = arith.constant 0 : index
    %572 = vector.load %arg7[%c2_314, %c0_315, %c0_316] : memref<4x1x128xf32, #tpu.memory_space<vmem>>, vector<1x1x128xf32>
    %573 = vector.shape_cast %572 : vector<1x1x128xf32> to vector<1x128xf32>
    %574 = vector.extract_strided_slice %573 {offsets = [0, 0], sizes = [1, 16], strides = [1, 1]} : vector<1x128xf32> to vector<1x16xf32>
    %c3_317 = arith.constant 3 : index
    %c0_318 = arith.constant 0 : index
    %c0_319 = arith.constant 0 : index
    %575 = vector.load %arg7[%c3_317, %c0_318, %c0_319] : memref<4x1x128xf32, #tpu.memory_space<vmem>>, vector<1x1x128xf32>
    %576 = vector.shape_cast %575 : vector<1x1x128xf32> to vector<1x128xf32>
    %577 = vector.extract_strided_slice %576 {offsets = [0, 0], sizes = [1, 4], strides = [1, 1]} : vector<1x128xf32> to vector<1x4xf32>
    %578 = arith.truncf %565 : vector<2x32xf32> to vector<2x32xbf16>
    %cst_320 = arith.constant dense<0.000000e+00> : vector<2x16xf32>
    %579 = tpu.matmul %578, %568, %cst_320 {dimension_numbers = #tpu.dot_dimension_numbers<[1], [0], [0], [1], [0, 0, 1, 1], [], []>} : vector<2x32xbf16>, vector<32x16xbf16>, vector<2x16xf32> -> vector<2x16xf32>
    %580 = vector.broadcast %574 : vector<1x16xf32> to vector<2x16xf32>
    %581 = arith.addf %579, %580 : vector<2x16xf32>
    %cst_321 = arith.constant 0.000000e+00 : f32
    %582 = vector.broadcast %cst_321 : f32 to vector<2x16xf32>
    %583 = arith.maximumf %581, %582 : vector<2x16xf32>
    %584 = arith.truncf %583 : vector<2x16xf32> to vector<2x16xbf16>
    %cst_322 = arith.constant dense<0.000000e+00> : vector<2x4xf32>
    %585 = tpu.matmul %584, %571, %cst_322 {dimension_numbers = #tpu.dot_dimension_numbers<[1], [0], [0], [1], [0, 0, 1, 1], [], []>} : vector<2x16xbf16>, vector<16x4xbf16>, vector<2x4xf32> -> vector<2x4xf32>
    %586 = vector.broadcast %577 : vector<1x4xf32> to vector<2x4xf32>
    %587 = arith.addf %585, %586 : vector<2x4xf32>
    %cst_323 = arith.constant dense<0xFF800000> : vector<2xf32>
    %588 = vector.multi_reduction <maximumf>, %587, %cst_323 [1] : vector<2x4xf32> to vector<2xf32>
    %589 = vector.shape_cast %588 : vector<2xf32> to vector<2x1xf32>
    %590 = vector.broadcast %589 : vector<2x1xf32> to vector<2x4xf32>
    %591 = arith.subf %587, %590 : vector<2x4xf32>
    %592 = math.exp %591 : vector<2x4xf32>
    %cst_324 = arith.constant dense<0.000000e+00> : vector<2xf32>
    %593 = vector.multi_reduction <add>, %592, %cst_324 [1] : vector<2x4xf32> to vector<2xf32>
    %594 = vector.shape_cast %593 : vector<2xf32> to vector<2x1xf32>
    %595 = tpu.reciprocal %594 {approx = true} : vector<2x1xf32> -> vector<2x1xf32>
    %596 = vector.broadcast %595 : vector<2x1xf32> to vector<2x4xf32>
    %597 = arith.mulf %592, %596 : vector<2x4xf32>
    %c0_325 = arith.constant 0 : index
    %c0_326 = arith.constant 0 : index
    %598 = vector.load %arg9[%c0_325, %c0_326] : memref<2x4xf32, #tpu.memory_space<vmem>>, vector<2x4xf32>
    tpu.vector_store %arg9[%c0_325, %c0_326], %597 {strides = array<i32>} : memref<2x4xf32, #tpu.memory_space<vmem>>, vector<2x4xf32>,
    return
  }
}

</mosaic_0001>

<llo_original>
// kernel: _lambda_.1
$region0: #{_lambda_.1}
  #allocation0 [shape = 'u32[]', space=smem, size = 0x4, offset = 0x4, fixed_abs, tag = 'smem constant byte address 0x4 - core index']
  #allocation1 [shape = 'u32[144,128]{1,0:T(1,128)}', space=vmem, size = 0x12000, scoped, tag = 'internal scratch']
  %s0 = inlined_call_operand.vmem [shape: f32[16,32], index: 0, kind: input, shape index: {}]
  %s1 = inlined_call_operand.vmem [shape: f32[16,16], index: 1, kind: input, shape index: {}]
  %s2 = inlined_call_operand.vmem [shape: bf16[32,32,8], index: 2, kind: input, shape index: {}]
  %s3 = inlined_call_operand.vmem [shape: f32[24,1,8], index: 3, kind: input, shape index: {}]
  %s4 = inlined_call_operand.vmem [shape: f32[14,1,128], index: 4, kind: input, shape index: {}]
  %s5 = inlined_call_operand.vmem [shape: bf16[2,32,128], index: 5, kind: input, shape index: {}]
  %s6 = inlined_call_operand.vmem [shape: bf16[2,128,32], index: 6, kind: input, shape index: {}]
  %s7 = inlined_call_operand.vmem [shape: f32[4,1,128], index: 7, kind: input, shape index: {}]
  %s8 = inlined_call_operand.vmem [shape: bf16[2,32,128], index: 8, kind: input, shape index: {}]
  %s9 = inlined_call_operand.hbm [shape: f32[2,4], index: 9, kind: output, shape index: {0}]
  %s10 = inlined_call_operand.vmem [shape: f32[16,16], index: 10, kind: output, shape index: {1}]
  %11 = xla_tuple %s9, %s10
  %s12 = sld [smem:[#allocation0]]
  $region54: #{_lambda_.1} parent=0
    _
  %s14 = ssub.s32 1, %s12
  %s15 = scalar_select 0, %s14, %s12
  $region1: #{_lambda_.1} parent=0
    #allocation2 [shape = 'u8[1024]{0}', space=vmem, size = 0x400, scoped, tag = 'output window, operand 0, single buffered']
    #allocation3 [shape = 's32[1]{0}', space=sflag, size = 0x4, scoped, tag = 'scoped memory for _lambda_.1']
    %16 = vsyncpa [#allocation3], 0
    // Predicated region
    $region2: #{_lambda_.1} parent=1 // pred_check
      _
    $region3: #{_lambda_.1} parent=1 // pred_check_branch
      %18 = sbr.rel (0) target = $region5
    $region4: #{_lambda_.1} parent=1 // pred_region
      _
    $region5: #{_lambda_.1} parent=1 // pred_fallthru
      _
    // Predicated region
    $region6: #{_lambda_.1} parent=1 // pred_check
      _
    $region7: #{_lambda_.1} parent=1 // pred_check_branch
      %20 = sbr.rel (0) target = $region9
    $region8: #{_lambda_.1} parent=1 // pred_region
      _
    $region9: #{_lambda_.1} parent=1 // pred_fallthru
      _
    // Predicated region
    $region10: #{_lambda_.1} parent=1 // pred_check
      _
    $region11: #{_lambda_.1} parent=1 // pred_check_branch
      %22 = sbr.rel (0) target = $region13
    $region12: #{_lambda_.1} parent=1 // pred_region
      _
    $region13: #{_lambda_.1} parent=1 // pred_fallthru
      _
    // Predicated region
    $region14: #{_lambda_.1} parent=1 // pred_check
      _
    $region15: #{_lambda_.1} parent=1 // pred_check_branch
      %24 = sbr.rel (0) target = $region17
    $region16: #{_lambda_.1} parent=1 // pred_region
      _
    $region17: #{_lambda_.1} parent=1 // pred_fallthru
      _
    // Predicated region
    $region18: #{_lambda_.1} parent=1 // pred_check
      _
    $region19: #{_lambda_.1} parent=1 // pred_check_branch
      %26 = sbr.rel (0) target = $region21
    $region20: #{_lambda_.1} parent=1 // pred_region
      _
    $region21: #{_lambda_.1} parent=1 // pred_fallthru
      _
    // Predicated region
    $region22: #{_lambda_.1} parent=1 // pred_check
      _
    $region23: #{_lambda_.1} parent=1 // pred_check_branch
      %28 = sbr.rel (0) target = $region25
    $region24: #{_lambda_.1} parent=1 // pred_region
      _
    $region25: #{_lambda_.1} parent=1 // pred_fallthru
      _
    // Predicated region
    $region26: #{_lambda_.1} parent=1 // pred_check
      _
    $region27: #{_lambda_.1} parent=1 // pred_check_branch
      %30 = sbr.rel (0) target = $region29
    $region28: #{_lambda_.1} parent=1 // pred_region
      _
    $region29: #{_lambda_.1} parent=1 // pred_fallthru
      _
    // Predicated region
    $region30: #{_lambda_.1} parent=1 // pred_check
      _
    $region31: #{_lambda_.1} parent=1 // pred_check_branch
      %32 = sbr.rel (0) target = $region33
    $region32: #{_lambda_.1} parent=1 // pred_region
      _
    $region33: #{_lambda_.1} parent=1 // pred_fallthru
      _
    // Predicated region
    $region34: #{_lambda_.1} parent=1 // pred_check
      _
    $region35: #{_lambda_.1} parent=1 // pred_check_branch
      %34 = sbr.rel (0) target = $region37
    $region36: #{_lambda_.1} parent=1 // pred_region
      _
    $region37: #{_lambda_.1} parent=1 // pred_fallthru
      _
    %v36 = vld [vmem:[%s0] sm:$0xff]
    %v37 = vld [vmem:[%s0 + $0x8] sm:$0xff]
    %v38 = vld [vmem:[%s1] sm:$0xff]
    %v39 = vld [vmem:[%s1 + $0x8] sm:$0xff]
    %v40 = vld [vmem:[%s4] sm:$0x1]
    %s41 = scalar_lea.vmem %s4, 1
    %v42 = vld [vmem:[%s41] sm:$0x1]
    %vm43 = vcmask 261120
    %v44 = vsel %vm43, %v36, 0.0
    %45 = vadd.xlane.f32.xlu0 %v44
    %v46 = vpop.xlane.xlu0 %45
    %v47 = vsel %vm43, %v37, 0.0
    %48 = vadd.xlane.f32.xlu0 %v47
    %v49 = vpop.xlane.xlu0 %48
    %v50 = vrcp.pop 32.0
    %v51 = vmul.f32 %v46, %v50
    %v52 = vmul.f32 %v49, %v50
    %v53 = vsub.f32 %v36, %v51
    %v54 = vsub.f32 %v37, %v52
    %v55 = vmul.f32 %v53, %v53
    %v56 = vmul.f32 %v54, %v54
    %v57 = vsel %vm43, %v55, 0.0
    %58 = vadd.xlane.f32.xlu0 %v57
    %v59 = vpop.xlane.xlu0 %58
    %v60 = vsel %vm43, %v56, 0.0
    %61 = vadd.xlane.f32.xlu0 %v60
    %v62 = vpop.xlane.xlu0 %61
    %v63 = vmul.f32 %v59, %v50
    %v64 = vmul.f32 %v62, %v50
    %v65 = vadd.f32 %v63, 1e-05
    %v66 = vadd.f32 %v64, 1e-05
    %v67 = vrsqrt.pop %v65
    %v68 = vrsqrt.pop %v66
    %v69 = vmul.f32 %v53, %v67
    %v70 = vmul.f32 %v54, %v68
    %v72 = vlaneseq
    %v73 = vshrl.u32 %v72, 7
    %v74 = vsub.s32 0, %v73
    %v75 = vrot.slane %v40, %v74
    %v77 = vmul.f32 %v69, %v75
    %v78 = vmul.f32 %v70, %v75
    %v80 = vlaneseq
    %v81 = vshrl.u32 %v80, 7
    %v82 = vsub.s32 0, %v81
    %v83 = vrot.slane %v42, %v82
    %v85 = vadd.f32 %v77, %v83
    %v86 = vadd.f32 %v78, %v83
    %v87 = vpack.c.bf16 %v86, %v85
    %v88 = vld [vmem:[%s2] sm:$0xf]
    %v89 = vld [vmem:[%s2 + $0x4] sm:$0xf]
    %v90 = vld [vmem:[%s2 + $0x8] sm:$0xf]
    %v91 = vld [vmem:[%s2 + $0xc] sm:$0xf]
    %v92 = vld [vmem:[%s3] sm:$0x1]
    %v94 = vlaneseq
    %v95 = vshrl.u32 %v94, 7
    %v96 = vsub.s32 0, %v95
    %v97 = vrot.slane %v92, %v96
    %v103 = vunpack.c.l.b16 %v88
    %v104 = vunpack.c.l.b16 %v89
    %v105 = vunpack.c.l.b16 %v90
    %v106 = vunpack.c.l.b16 %v91
    %v107 = vpack.c.b16 %v104, %v103
    %v108 = vpack.c.b16 %v106, %v105
    %v112 = vsel %vm43, %v87, 0
    %114 = vmatprep.subr.bf16.mxu0 0
    %115 = vmatpush1.bf16.msra.mxu0 0
    %116 = vmatprep.subr.bf16.mxu0 0
    %117 = vmatpush1.bf16.msra.mxu0 0
    %118 = vmatprep.subr.bf16.mxu0 0
    %119 = vmatpush1.bf16.msra.mxu0 0
    %120 = vmatprep.subr.bf16.mxu0 0
    %121 = vmatpush1.bf16.msra.mxu0 0
    %122 = vmatprep.subr.bf16.mxu0 0
    %123 = vmatpush1.bf16.msra.mxu0 0
    %124 = vmatprep.subr.bf16.mxu0 0
    %125 = vmatpush1.bf16.msra.mxu0 0
    %126 = vmatprep.subr.bf16.mxu0 0
    %127 = vmatpush1.bf16.msra.mxu0 %v108
    %128 = vmatprep.subr.bf16.mxu0 0
    %129 = vmatpush1.bf16.msra.mxu0 %v107
    %130 = vmatprep.subr.bf16.mxu0 0
    %131 = vmatpush2.bf16.msra.mxu0 0
    %132 = vmatprep.subr.bf16.mxu0 0
    %133 = vmatpush2.bf16.msra.mxu0 0
    %134 = vmatprep.subr.bf16.mxu0 0
    %135 = vmatpush2.bf16.msra.mxu0 0
    %136 = vmatprep.subr.bf16.mxu0 0
    %137 = vmatpush2.bf16.msra.mxu0 0
    %138 = vmatprep.subr.bf16.mxu0 0
    %139 = vmatpush2.bf16.msra.mxu0 0
    %140 = vmatprep.subr.bf16.mxu0 0
    %141 = vmatpush2.bf16.msra.mxu0 0
    %142 = vmatprep.subr.bf16.mxu0 0
    %143 = vmatpush2.bf16.msra.mxu0 0
    %144 = vmatprep.subr.bf16.mxu0 0
    %145 = vmatpush2.bf16.msra.mxu0 0
    %146 = vmatprep.mubr.bf16.mxu0 0
    %147 = vmatmul.mubr.bf16.gmra.mxu0 %v112
    %v148 = vpop.f32.mrf.mxu0
    %v149 = vadd.f32 %v97, %v148
    %v150 = vpop.f32.mrf.mxu0
    %v151 = vpop.f32.mrf.mxu0
    %v152 = vadd.f32 %v97, %v151
    %v153 = vpop.f32.mrf.mxu0
    %154 = vdwg.mxu0
    %v155 = vpack.c.bf16 %v152, %v149
    %s156 = scalar_lea.vmem %s2, 16
    %v157 = vld [vmem:[%s156] sm:$0xf]
    %v158 = vld [vmem:[%s156 + $0x4] sm:$0xf]
    %v159 = vld [vmem:[%s156 + $0x8] sm:$0xf]
    %v160 = vld [vmem:[%s156 + $0xc] sm:$0xf]
    %s161 = scalar_lea.vmem %s3, 1
    %v162 = vld [vmem:[%s161] sm:$0x1]
    %v164 = vlaneseq
    %v165 = vshrl.u32 %v164, 7
    %v166 = vsub.s32 0, %v165
    %v167 = vrot.slane %v162, %v166
    %v173 = vunpack.c.l.b16 %v157
    %v174 = vunpack.c.l.b16 %v158
    %v175 = vunpack.c.l.b16 %v159
    %v176 = vunpack.c.l.b16 %v160
    %v177 = vpack.c.b16 %v174, %v173
    %v178 = vpack.c.b16 %v176, %v175
    %181 = vmatprep.subr.bf16.mxu0 0
    %182 = vmatpush1.bf16.msra.mxu0 0
    %183 = vmatprep.subr.bf16.mxu0 0
    %184 = vmatpush1.bf16.msra.mxu0 0
    %185 = vmatprep.subr.bf16.mxu0 0
    %186 = vmatpush1.bf16.msra.mxu0 0
    %187 = vmatprep.subr.bf16.mxu0 0
    %188 = vmatpush1.bf16.msra.mxu0 0
    %189 = vmatprep.subr.bf16.mxu0 0
    %190 = vmatpush1.bf16.msra.mxu0 0
    %191 = vmatprep.subr.bf16.mxu0 0
    %192 = vmatpush1.bf16.msra.mxu0 0
    %193 = vmatprep.subr.bf16.mxu0 0
    %194 = vmatpush1.bf16.msra.mxu0 %v178
    %195 = vmatprep.subr.bf16.mxu0 0
    %196 = vmatpush1.bf16.msra.mxu0 %v177
    %197 = vmatprep.subr.bf16.mxu0 0
    %198 = vmatpush2.bf16.msra.mxu0 0
    %199 = vmatprep.subr.bf16.mxu0 0
    %200 = vmatpush2.bf16.msra.mxu0 0
    %201 = vmatprep.subr.bf16.mxu0 0
    %202 = vmatpush2.bf16.msra.mxu0 0
    %203 = vmatprep.subr.bf16.mxu0 0
    %204 = vmatpush2.bf16.msra.mxu0 0
    %205 = vmatprep.subr.bf16.mxu0 0
    %206 = vmatpush2.bf16.msra.mxu0 0
    %207 = vmatprep.subr.bf16.mxu0 0
    %208 = vmatpush2.bf16.msra.mxu0 0
    %209 = vmatprep.subr.bf16.mxu0 0
    %210 = vmatpush2.bf16.msra.mxu0 0
    %211 = vmatprep.subr.bf16.mxu0 0
    %212 = vmatpush2.bf16.msra.mxu0 0
    %213 = vmatprep.mubr.bf16.mxu0 0
    %214 = vmatmul.mubr.bf16.gmra.mxu0 %v112
    %v215 = vpop.f32.mrf.mxu0
    %v216 = vadd.f32 %v167, %v215
    %v217 = vpop.f32.mrf.mxu0
    %v218 = vpop.f32.mrf.mxu0
    %v219 = vadd.f32 %v167, %v218
    %v220 = vpop.f32.mrf.mxu0
    %221 = vdwg.mxu0
    %v222 = vpack.c.bf16 %v219, %v216
    %s223 = scalar_lea.vmem %s2, 32
    %v224 = vld [vmem:[%s223] sm:$0xf]
    %v225 = vld [vmem:[%s223 + $0x4] sm:$0xf]
    %v226 = vld [vmem:[%s223 + $0x8] sm:$0xf]
    %v227 = vld [vmem:[%s223 + $0xc] sm:$0xf]
    %s228 = scalar_lea.vmem %s3, 2
    %v229 = vld [vmem:[%s228] sm:$0x1]
    %v231 = vlaneseq
    %v232 = vshrl.u32 %v231, 7
    %v233 = vsub.s32 0, %v232
    %v234 = vrot.slane %v229, %v233
    %v240 = vunpack.c.l.b16 %v224
    %v241 = vunpack.c.l.b16 %v225
    %v242 = vunpack.c.l.b16 %v226
    %v243 = vunpack.c.l.b16 %v227
    %v244 = vpack.c.b16 %v241, %v240
    %v245 = vpack.c.b16 %v243, %v242
    %248 = vmatprep.subr.bf16.mxu0 0
    %249 = vmatpush1.bf16.msra.mxu0 0
    %250 = vmatprep.subr.bf16.mxu0 0
    %251 = vmatpush1.bf16.msra.mxu0 0
    %252 = vmatprep.subr.bf16.mxu0 0
    %253 = vmatpush1.bf16.msra.mxu0 0
    %254 = vmatprep.subr.bf16.mxu0 0
    %255 = vmatpush1.bf16.msra.mxu0 0
    %256 = vmatprep.subr.bf16.mxu0 0
    %257 = vmatpush1.bf16.msra.mxu0 0
    %258 = vmatprep.subr.bf16.mxu0 0
    %259 = vmatpush1.bf16.msra.mxu0 0
    %260 = vmatprep.subr.bf16.mxu0 0
    %261 = vmatpush1.bf16.msra.mxu0 %v245
    %262 = vmatprep.subr.bf16.mxu0 0
    %263 = vmatpush1.bf16.msra.mxu0 %v244
    %264 = vmatprep.subr.bf16.mxu0 0
    %265 = vmatpush2.bf16.msra.mxu0 0
    %266 = vmatprep.subr.bf16.mxu0 0
    %267 = vmatpush2.bf16.msra.mxu0 0
    %268 = vmatprep.subr.bf16.mxu0 0
    %269 = vmatpush2.bf16.msra.mxu0 0
    %270 = vmatprep.subr.bf16.mxu0 0
    %271 = vmatpush2.bf16.msra.mxu0 0
    %272 = vmatprep.subr.bf16.mxu0 0
    %273 = vmatpush2.bf16.msra.mxu0 0
    %274 = vmatprep.subr.bf16.mxu0 0
    %275 = vmatpush2.bf16.msra.mxu0 0
    %276 = vmatprep.subr.bf16.mxu0 0
    %277 = vmatpush2.bf16.msra.mxu0 0
    %278 = vmatprep.subr.bf16.mxu0 0
    %279 = vmatpush2.bf16.msra.mxu0 0
    %280 = vmatprep.mubr.bf16.mxu0 0
    %281 = vmatmul.mubr.bf16.gmra.mxu0 %v112
    %v282 = vpop.f32.mrf.mxu0
    %v283 = vadd.f32 %v234, %v282
    %v284 = vpop.f32.mrf.mxu0
    %v285 = vpop.f32.mrf.mxu0
    %v286 = vadd.f32 %v234, %v285
    %v287 = vpop.f32.mrf.mxu0
    %288 = vdwg.mxu0
    %v289 = vpack.c.bf16 %v286, %v283
    %vm290 = vcmask 64512
    %v292 = vsel %vm290, %v155, 0
    %v295 = vsel %vm290, %v222, 0
    %297 = vmatprep.subr.bf16.mxu0 0
    %298 = vmatpush1.bf16.xpose.msra.mxu0 0
    %299 = vmatprep.subr.bf16.mxu0 0
    %300 = vmatpush1.bf16.xpose.msra.mxu0 0
    %301 = vmatprep.subr.bf16.mxu0 0
    %302 = vmatpush1.bf16.xpose.msra.mxu0 0
    %303 = vmatprep.subr.bf16.mxu0 0
    %304 = vmatpush1.bf16.xpose.msra.mxu0 0
    %305 = vmatprep.subr.bf16.mxu0 0
    %306 = vmatpush1.bf16.xpose.msra.mxu0 0
    %307 = vmatprep.subr.bf16.mxu0 0
    %308 = vmatpush1.bf16.xpose.msra.mxu0 0
    %309 = vmatprep.subr.bf16.mxu0 0
    %310 = vmatpush1.bf16.xpose.msra.mxu0 0
    %311 = vmatprep.subr.bf16.mxu0 0
    %312 = vmatpush1.bf16.xpose.msra.mxu0 %v295
    %313 = vmatprep.subr.bf16.mxu0 0
    %314 = vmatpush2.bf16.xpose.msra.mxu0 0
    %315 = vmatprep.subr.bf16.mxu0 0
    %316 = vmatpush2.bf16.xpose.msra.mxu0 0
    %317 = vmatprep.subr.bf16.mxu0 0
    %318 = vmatpush2.bf16.xpose.msra.mxu0 0
    %319 = vmatprep.subr.bf16.mxu0 0
    %320 = vmatpush2.bf16.xpose.msra.mxu0 0
    %321 = vmatprep.subr.bf16.mxu0 0
    %322 = vmatpush2.bf16.xpose.msra.mxu0 0
    %323 = vmatprep.subr.bf16.mxu0 0
    %324 = vmatpush2.bf16.xpose.msra.mxu0 0
    %325 = vmatprep.subr.bf16.mxu0 0
    %326 = vmatpush2.bf16.xpose.msra.mxu0 0
    %327 = vmatprep.subr.bf16.mxu0 0
    %328 = vmatpush2.bf16.xpose.msra.mxu0 0
    %329 = vmatprep.mubr.bf16.mxu0 0
    %330 = vmatmul.mubr.bf16.gmra.mxu0 %v292
    %v331 = vpop.f32.mrf.mxu0
    %v332 = vadd.f32 0.0, %v331
    %v333 = vpop.f32.mrf.mxu0
    %v334 = vpop.f32.mrf.mxu0
    %v335 = vadd.f32 0.0, %v334
    %v336 = vpop.f32.mrf.mxu0
    %337 = vdwg.mxu0
    %v338 = vmul.f32 %v332, 0.35355338
    %v339 = vmul.f32 %v335, 0.35355338
    %v340 = vadd.f32 %v338, %v38
    %v341 = vadd.f32 %v339, %v39
    %v342 = vmul.f32 %v340, 1.442695
    %v343 = vpow.pop %v342
    %v344 = vmul.f32 %v341, 1.442695
    %v345 = vpow.pop %v344
    %vm346 = vcmask 130048
    %v347 = vsel %vm346, %v343, 0.0
    %348 = vadd.xlane.f32.xlu0 %v347
    %v349 = vpop.xlane.xlu0 %348
    %v350 = vsel %vm346, %v345, 0.0
    %351 = vadd.xlane.f32.xlu0 %v350
    %v352 = vpop.xlane.xlu0 %351
    %v353 = vrcp.pop %v349
    %v354 = vrcp.pop %v352
    %v355 = vmul.f32 %v343, %v353
    %v356 = vmul.f32 %v345, %v354
    %v357 = vpack.c.bf16 %v356, %v355
    %v359 = vsel %vm346, %v357, 0
    %361 = vmatprep.subr.bf16.mxu0 0
    %362 = vmatpush1.bf16.msra.mxu0 0
    %363 = vmatprep.subr.bf16.mxu0 0
    %364 = vmatpush1.bf16.msra.mxu0 0
    %365 = vmatprep.subr.bf16.mxu0 0
    %366 = vmatpush1.bf16.msra.mxu0 0
    %367 = vmatprep.subr.bf16.mxu0 0
    %368 = vmatpush1.bf16.msra.mxu0 0
    %369 = vmatprep.subr.bf16.mxu0 0
    %370 = vmatpush1.bf16.msra.mxu0 0
    %371 = vmatprep.subr.bf16.mxu0 0
    %372 = vmatpush1.bf16.msra.mxu0 0
    %373 = vmatprep.subr.bf16.mxu0 0
    %374 = vmatpush1.bf16.msra.mxu0 0
    %375 = vmatprep.subr.bf16.mxu0 0
    %376 = vmatpush1.bf16.msra.mxu0 %v289
    %377 = vmatprep.subr.bf16.mxu0 0
    %378 = vmatpush2.bf16.msra.mxu0 0
    %379 = vmatprep.subr.bf16.mxu0 0
    %380 = vmatpush2.bf16.msra.mxu0 0
    %381 = vmatprep.subr.bf16.mxu0 0
    %382 = vmatpush2.bf16.msra.mxu0 0
    %383 = vmatprep.subr.bf16.mxu0 0
    %384 = vmatpush2.bf16.msra.mxu0 0
    %385 = vmatprep.subr.bf16.mxu0 0
    %386 = vmatpush2.bf16.msra.mxu0 0
    %387 = vmatprep.subr.bf16.mxu0 0
    %388 = vmatpush2.bf16.msra.mxu0 0
    %389 = vmatprep.subr.bf16.mxu0 0
    %390 = vmatpush2.bf16.msra.mxu0 0
    %391 = vmatprep.subr.bf16.mxu0 0
    %392 = vmatpush2.bf16.msra.mxu0 0
    %393 = vmatprep.mubr.bf16.mxu0 0
    %394 = vmatmul.mubr.bf16.gmra.mxu0 %v359
    %v395 = vpop.f32.mrf.mxu0
    %v396 = vadd.f32 0.0, %v395
    %v397 = vpop.f32.mrf.mxu0
    %v398 = vpop.f32.mrf.mxu0
    %v399 = vadd.f32 0.0, %v398
    %v400 = vpop.f32.mrf.mxu0
    %401 = vdwg.mxu0
    %v402 = vpack.c.bf16 %v399, %v396
    %s403 = scalar_lea.vmem %s2, 48
    %v404 = vld [vmem:[%s403] sm:$0xf]
    %v405 = vld [vmem:[%s403 + $0x4] sm:$0xf]
    %v406 = vld [vmem:[%s403 + $0x8] sm:$0xf]
    %v407 = vld [vmem:[%s403 + $0xc] sm:$0xf]
    %s408 = scalar_lea.vmem %s2, 64
    %v409 = vld [vmem:[%s408] sm:$0xf]
    %v410 = vld [vmem:[%s408 + $0x4] sm:$0xf]
    %v411 = vld [vmem:[%s408 + $0x8] sm:$0xf]
    %v412 = vld [vmem:[%s408 + $0xc] sm:$0xf]
    %s413 = scalar_lea.vmem %s3, 3
    %v414 = vld [vmem:[%s413] sm:$0x1]
    %v416 = vlaneseq
    %v417 = vshrl.u32 %v416, 7
    %v418 = vsub.s32 0, %v417
    %v419 = vrot.slane %v414, %v418
    %v425 = vunpack.c.l.b16 %v409
    %v426 = vunpack.c.l.b16 %v410
    %v427 = vunpack.c.l.b16 %v411
    %v428 = vunpack.c.l.b16 %v412
    %v429 = vpack.c.b16 %v426, %v425
    %v430 = vpack.c.b16 %v428, %v427
    %433 = vmatprep.subr.bf16.mxu0 0
    %434 = vmatpush1.bf16.msra.mxu0 0
    %435 = vmatprep.subr.bf16.mxu0 0
    %436 = vmatpush1.bf16.msra.mxu0 0
    %437 = vmatprep.subr.bf16.mxu0 0
    %438 = vmatpush1.bf16.msra.mxu0 0
    %439 = vmatprep.subr.bf16.mxu0 0
    %440 = vmatpush1.bf16.msra.mxu0 0
    %441 = vmatprep.subr.bf16.mxu0 0
    %442 = vmatpush1.bf16.msra.mxu0 0
    %443 = vmatprep.subr.bf16.mxu0 0
    %444 = vmatpush1.bf16.msra.mxu0 0
    %445 = vmatprep.subr.bf16.mxu0 0
    %446 = vmatpush1.bf16.msra.mxu0 %v430
    %447 = vmatprep.subr.bf16.mxu0 0
    %448 = vmatpush1.bf16.msra.mxu0 %v429
    %449 = vmatprep.subr.bf16.mxu0 0
    %450 = vmatpush2.bf16.msra.mxu0 0
    %451 = vmatprep.subr.bf16.mxu0 0
    %452 = vmatpush2.bf16.msra.mxu0 0
    %453 = vmatprep.subr.bf16.mxu0 0
    %454 = vmatpush2.bf16.msra.mxu0 0
    %455 = vmatprep.subr.bf16.mxu0 0
    %456 = vmatpush2.bf16.msra.mxu0 0
    %457 = vmatprep.subr.bf16.mxu0 0
    %458 = vmatpush2.bf16.msra.mxu0 0
    %459 = vmatprep.subr.bf16.mxu0 0
    %460 = vmatpush2.bf16.msra.mxu0 0
    %461 = vmatprep.subr.bf16.mxu0 0
    %462 = vmatpush2.bf16.msra.mxu0 0
    %463 = vmatprep.subr.bf16.mxu0 0
    %464 = vmatpush2.bf16.msra.mxu0 0
    %465 = vmatprep.mubr.bf16.mxu0 0
    %466 = vmatmul.mubr.bf16.gmra.mxu0 %v112
    %v467 = vpop.f32.mrf.mxu0
    %v468 = vadd.f32 %v419, %v467
    %v469 = vpop.f32.mrf.mxu0
    %v470 = vpop.f32.mrf.mxu0
    %v471 = vadd.f32 %v419, %v470
    %v472 = vpop.f32.mrf.mxu0
    %473 = vdwg.mxu0
    %v474 = vpack.c.bf16 %v471, %v468
    %s475 = scalar_lea.vmem %s2, 80
    %v476 = vld [vmem:[%s475] sm:$0xf]
    %v477 = vld [vmem:[%s475 + $0x4] sm:$0xf]
    %v478 = vld [vmem:[%s475 + $0x8] sm:$0xf]
    %v479 = vld [vmem:[%s475 + $0xc] sm:$0xf]
    %s480 = scalar_lea.vmem %s3, 4
    %v481 = vld [vmem:[%s480] sm:$0x1]
    %v483 = vlaneseq
    %v484 = vshrl.u32 %v483, 7
    %v485 = vsub.s32 0, %v484
    %v486 = vrot.slane %v481, %v485
    %v492 = vunpack.c.l.b16 %v476
    %v493 = vunpack.c.l.b16 %v477
    %v494 = vunpack.c.l.b16 %v478
    %v495 = vunpack.c.l.b16 %v479
    %v496 = vpack.c.b16 %v493, %v492
    %v497 = vpack.c.b16 %v495, %v494
    %500 = vmatprep.subr.bf16.mxu0 0
    %501 = vmatpush1.bf16.msra.mxu0 0
    %502 = vmatprep.subr.bf16.mxu0 0
    %503 = vmatpush1.bf16.msra.mxu0 0
    %504 = vmatprep.subr.bf16.mxu0 0
    %505 = vmatpush1.bf16.msra.mxu0 0
    %506 = vmatprep.subr.bf16.mxu0 0
    %507 = vmatpush1.bf16.msra.mxu0 0
    %508 = vmatprep.subr.bf16.mxu0 0
    %509 = vmatpush1.bf16.msra.mxu0 0
    %510 = vmatprep.subr.bf16.mxu0 0
    %511 = vmatpush1.bf16.msra.mxu0 0
    %512 = vmatprep.subr.bf16.mxu0 0
    %513 = vmatpush1.bf16.msra.mxu0 %v497
    %514 = vmatprep.subr.bf16.mxu0 0
    %515 = vmatpush1.bf16.msra.mxu0 %v496
    %516 = vmatprep.subr.bf16.mxu0 0
    %517 = vmatpush2.bf16.msra.mxu0 0
    %518 = vmatprep.subr.bf16.mxu0 0
    %519 = vmatpush2.bf16.msra.mxu0 0
    %520 = vmatprep.subr.bf16.mxu0 0
    %521 = vmatpush2.bf16.msra.mxu0 0
    %522 = vmatprep.subr.bf16.mxu0 0
    %523 = vmatpush2.bf16.msra.mxu0 0
    %524 = vmatprep.subr.bf16.mxu0 0
    %525 = vmatpush2.bf16.msra.mxu0 0
    %526 = vmatprep.subr.bf16.mxu0 0
    %527 = vmatpush2.bf16.msra.mxu0 0
    %528 = vmatprep.subr.bf16.mxu0 0
    %529 = vmatpush2.bf16.msra.mxu0 0
    %530 = vmatprep.subr.bf16.mxu0 0
    %531 = vmatpush2.bf16.msra.mxu0 0
    %532 = vmatprep.mubr.bf16.mxu0 0
    %533 = vmatmul.mubr.bf16.gmra.mxu0 %v112
    %v534 = vpop.f32.mrf.mxu0
    %v535 = vadd.f32 %v486, %v534
    %v536 = vpop.f32.mrf.mxu0
    %v537 = vpop.f32.mrf.mxu0
    %v538 = vadd.f32 %v486, %v537
    %v539 = vpop.f32.mrf.mxu0
    %540 = vdwg.mxu0
    %v541 = vpack.c.bf16 %v538, %v535
    %s542 = scalar_lea.vmem %s2, 96
    %v543 = vld [vmem:[%s542] sm:$0xf]
    %v544 = vld [vmem:[%s542 + $0x4] sm:$0xf]
    %v545 = vld [vmem:[%s542 + $0x8] sm:$0xf]
    %v546 = vld [vmem:[%s542 + $0xc] sm:$0xf]
    %s547 = scalar_lea.vmem %s3, 5
    %v548 = vld [vmem:[%s547] sm:$0x1]
    %v550 = vlaneseq
    %v551 = vshrl.u32 %v550, 7
    %v552 = vsub.s32 0, %v551
    %v553 = vrot.slane %v548, %v552
    %v559 = vunpack.c.l.b16 %v543
    %v560 = vunpack.c.l.b16 %v544
    %v561 = vunpack.c.l.b16 %v545
    %v562 = vunpack.c.l.b16 %v546
    %v563 = vpack.c.b16 %v560, %v559
    %v564 = vpack.c.b16 %v562, %v561
    %567 = vmatprep.subr.bf16.mxu0 0
    %568 = vmatpush1.bf16.msra.mxu0 0
    %569 = vmatprep.subr.bf16.mxu0 0
    %570 = vmatpush1.bf16.msra.mxu0 0
    %571 = vmatprep.subr.bf16.mxu0 0
    %572 = vmatpush1.bf16.msra.mxu0 0
    %573 = vmatprep.subr.bf16.mxu0 0
    %574 = vmatpush1.bf16.msra.mxu0 0
    %575 = vmatprep.subr.bf16.mxu0 0
    %576 = vmatpush1.bf16.msra.mxu0 0
    %577 = vmatprep.subr.bf16.mxu0 0
    %578 = vmatpush1.bf16.msra.mxu0 0
    %579 = vmatprep.subr.bf16.mxu0 0
    %580 = vmatpush1.bf16.msra.mxu0 %v564
    %581 = vmatprep.subr.bf16.mxu0 0
    %582 = vmatpush1.bf16.msra.mxu0 %v563
    %583 = vmatprep.subr.bf16.mxu0 0
    %584 = vmatpush2.bf16.msra.mxu0 0
    %585 = vmatprep.subr.bf16.mxu0 0
    %586 = vmatpush2.bf16.msra.mxu0 0
    %587 = vmatprep.subr.bf16.mxu0 0
    %588 = vmatpush2.bf16.msra.mxu0 0
    %589 = vmatprep.subr.bf16.mxu0 0
    %590 = vmatpush2.bf16.msra.mxu0 0
    %591 = vmatprep.subr.bf16.mxu0 0
    %592 = vmatpush2.bf16.msra.mxu0 0
    %593 = vmatprep.subr.bf16.mxu0 0
    %594 = vmatpush2.bf16.msra.mxu0 0
    %595 = vmatprep.subr.bf16.mxu0 0
    %596 = vmatpush2.bf16.msra.mxu0 0
    %597 = vmatprep.subr.bf16.mxu0 0
    %598 = vmatpush2.bf16.msra.mxu0 0
    %599 = vmatprep.mubr.bf16.mxu0 0
    %600 = vmatmul.mubr.bf16.gmra.mxu0 %v112
    %v601 = vpop.f32.mrf.mxu0
    %v602 = vadd.f32 %v553, %v601
    %v603 = vpop.f32.mrf.mxu0
    %v604 = vpop.f32.mrf.mxu0
    %v605 = vadd.f32 %v553, %v604
    %v606 = vpop.f32.mrf.mxu0
    %607 = vdwg.mxu0
    %v608 = vpack.c.bf16 %v605, %v602
    %v610 = vsel %vm290, %v474, 0
    %v613 = vsel %vm290, %v541, 0
    %615 = vmatprep.subr.bf16.mxu0 0
    %616 = vmatpush1.bf16.xpose.msra.mxu0 0
    %617 = vmatprep.subr.bf16.mxu0 0
    %618 = vmatpush1.bf16.xpose.msra.mxu0 0
    %619 = vmatprep.subr.bf16.mxu0 0
    %620 = vmatpush1.bf16.xpose.msra.mxu0 0
    %621 = vmatprep.subr.bf16.mxu0 0
    %622 = vmatpush1.bf16.xpose.msra.mxu0 0
    %623 = vmatprep.subr.bf16.mxu0 0
    %624 = vmatpush1.bf16.xpose.msra.mxu0 0
    %625 = vmatprep.subr.bf16.mxu0 0
    %626 = vmatpush1.bf16.xpose.msra.mxu0 0
    %627 = vmatprep.subr.bf16.mxu0 0
    %628 = vmatpush1.bf16.xpose.msra.mxu0 0
    %629 = vmatprep.subr.bf16.mxu0 0
    %630 = vmatpush1.bf16.xpose.msra.mxu0 %v613
    %631 = vmatprep.subr.bf16.mxu0 0
    %632 = vmatpush2.bf16.xpose.msra.mxu0 0
    %633 = vmatprep.subr.bf16.mxu0 0
    %634 = vmatpush2.bf16.xpose.msra.mxu0 0
    %635 = vmatprep.subr.bf16.mxu0 0
    %636 = vmatpush2.bf16.xpose.msra.mxu0 0
    %637 = vmatprep.subr.bf16.mxu0 0
    %638 = vmatpush2.bf16.xpose.msra.mxu0 0
    %639 = vmatprep.subr.bf16.mxu0 0
    %640 = vmatpush2.bf16.xpose.msra.mxu0 0
    %641 = vmatprep.subr.bf16.mxu0 0
    %642 = vmatpush2.bf16.xpose.msra.mxu0 0
    %643 = vmatprep.subr.bf16.mxu0 0
    %644 = vmatpush2.bf16.xpose.msra.mxu0 0
    %645 = vmatprep.subr.bf16.mxu0 0
    %646 = vmatpush2.bf16.xpose.msra.mxu0 0
    %647 = vmatprep.mubr.bf16.mxu0 0
    %648 = vmatmul.mubr.bf16.gmra.mxu0 %v610
    %v649 = vpop.f32.mrf.mxu0
    %v650 = vadd.f32 0.0, %v649
    %v651 = vpop.f32.mrf.mxu0
    %v652 = vpop.f32.mrf.mxu0
    %v653 = vadd.f32 0.0, %v652
    %v654 = vpop.f32.mrf.mxu0
    %655 = vdwg.mxu0
    %v656 = vmul.f32 %v650, 0.35355338
    %v657 = vmul.f32 %v653, 0.35355338
    %v658 = vadd.f32 %v656, %v38
    %v659 = vadd.f32 %v657, %v39
    %v660 = vmul.f32 %v658, 1.442695
    %v661 = vpow.pop %v660
    %v662 = vmul.f32 %v659, 1.442695
    %v663 = vpow.pop %v662
    %v664 = vsel %vm346, %v661, 0.0
    %665 = vadd.xlane.f32.xlu0 %v664
    %v666 = vpop.xlane.xlu0 %665
    %v667 = vsel %vm346, %v663, 0.0
    %668 = vadd.xlane.f32.xlu0 %v667
    %v669 = vpop.xlane.xlu0 %668
    %v670 = vrcp.pop %v666
    %v671 = vrcp.pop %v669
    %v672 = vmul.f32 %v661, %v670
    %v673 = vmul.f32 %v663, %v671
    %v674 = vpack.c.bf16 %v673, %v672
    %v676 = vsel %vm346, %v674, 0
    %678 = vmatprep.subr.bf16.mxu0 0
    %679 = vmatpush1.bf16.msra.mxu0 0
    %680 = vmatprep.subr.bf16.mxu0 0
    %681 = vmatpush1.bf16.msra.mxu0 0
    %682 = vmatprep.subr.bf16.mxu0 0
    %683 = vmatpush1.bf16.msra.mxu0 0
    %684 = vmatprep.subr.bf16.mxu0 0
    %685 = vmatpush1.bf16.msra.mxu0 0
    %686 = vmatprep.subr.bf16.mxu0 0
    %687 = vmatpush1.bf16.msra.mxu0 0
    %688 = vmatprep.subr.bf16.mxu0 0
    %689 = vmatpush1.bf16.msra.mxu0 0
    %690 = vmatprep.subr.bf16.mxu0 0
    %691 = vmatpush1.bf16.msra.mxu0 0
    %692 = vmatprep.subr.bf16.mxu0 0
    %693 = vmatpush1.bf16.msra.mxu0 %v608
    %694 = vmatprep.subr.bf16.mxu0 0
    %695 = vmatpush2.bf16.msra.mxu0 0
    %696 = vmatprep.subr.bf16.mxu0 0
    %697 = vmatpush2.bf16.msra.mxu0 0
    %698 = vmatprep.subr.bf16.mxu0 0
    %699 = vmatpush2.bf16.msra.mxu0 0
    %700 = vmatprep.subr.bf16.mxu0 0
    %701 = vmatpush2.bf16.msra.mxu0 0
    %702 = vmatprep.subr.bf16.mxu0 0
    %703 = vmatpush2.bf16.msra.mxu0 0
    %704 = vmatprep.subr.bf16.mxu0 0
    %705 = vmatpush2.bf16.msra.mxu0 0
    %706 = vmatprep.subr.bf16.mxu0 0
    %707 = vmatpush2.bf16.msra.mxu0 0
    %708 = vmatprep.subr.bf16.mxu0 0
    %709 = vmatpush2.bf16.msra.mxu0 0
    %710 = vmatprep.mubr.bf16.mxu0 0
    %711 = vmatmul.mubr.bf16.gmra.mxu0 %v676
    %v712 = vpop.f32.mrf.mxu0
    %v713 = vadd.f32 0.0, %v712
    %v714 = vpop.f32.mrf.mxu0
    %v715 = vpop.f32.mrf.mxu0
    %v716 = vadd.f32 0.0, %v715
    %v717 = vpop.f32.mrf.mxu0
    %718 = vdwg.mxu0
    %v719 = vpack.c.bf16 %v716, %v713
    %s720 = scalar_lea.vmem %s2, 112
    %v721 = vld [vmem:[%s720] sm:$0xf]
    %v722 = vld [vmem:[%s720 + $0x4] sm:$0xf]
    %v723 = vld [vmem:[%s720 + $0x8] sm:$0xf]
    %v724 = vld [vmem:[%s720 + $0xc] sm:$0xf]
    %v729 = vunpack.c.l.b16 %v721
    %v730 = vunpack.c.l.b16 %v722
    %v731 = vunpack.c.l.b16 %v723
    %v732 = vunpack.c.l.b16 %v724
    %v733 = vpack.c.b16 %v730, %v729
    %v734 = vpack.c.b16 %v732, %v731
    %v736 = vsel %vm290, %v719, 0
    %v739 = vsel %vm290, %v733, 0
    %v742 = vsel %vm290, %v734, 0
    %744 = vmatprep.subr.bf16.mxu0 0
    %745 = vmatpush1.bf16.xpose.msra.mxu0 0
    %746 = vmatprep.subr.bf16.mxu0 0
    %747 = vmatpush1.bf16.xpose.msra.mxu0 0
    %748 = vmatprep.subr.bf16.mxu0 0
    %749 = vmatpush1.bf16.xpose.msra.mxu0 0
    %750 = vmatprep.subr.bf16.mxu0 0
    %751 = vmatpush1.bf16.xpose.msra.mxu0 0
    %752 = vmatprep.subr.bf16.mxu0 0
    %753 = vmatpush1.bf16.xpose.msra.mxu0 0
    %754 = vmatprep.subr.bf16.mxu0 0
    %755 = vmatpush1.bf16.xpose.msra.mxu0 0
    %756 = vmatprep.subr.bf16.mxu0 0
    %757 = vmatpush1.bf16.xpose.msra.mxu0 %v742
    %758 = vmatprep.subr.bf16.mxu0 0
    %759 = vmatpush1.bf16.xpose.msra.mxu0 %v739
    %760 = vmatprep.subr.bf16.mxu0 0
    %761 = vmatpush2.bf16.xpose.msra.mxu0 0
    %762 = vmatprep.subr.bf16.mxu0 0
    %763 = vmatpush2.bf16.xpose.msra.mxu0 0
    %764 = vmatprep.subr.bf16.mxu0 0
    %765 = vmatpush2.bf16.xpose.msra.mxu0 0
    %766 = vmatprep.subr.bf16.mxu0 0
    %767 = vmatpush2.bf16.xpose.msra.mxu0 0
    %768 = vmatprep.subr.bf16.mxu0 0
    %769 = vmatpush2.bf16.xpose.msra.mxu0 0
    %770 = vmatprep.subr.bf16.mxu0 0
    %771 = vmatpush2.bf16.xpose.msra.mxu0 0
    %772 = vmatprep.subr.bf16.mxu0 0
    %773 = vmatpush2.bf16.xpose.msra.mxu0 0
    %774 = vmatprep.subr.bf16.mxu0 0
    %775 = vmatpush2.bf16.xpose.msra.mxu0 0
    %776 = vmatprep.mubr.bf16.mxu0 0
    %777 = vmatmul.mubr.bf16.gmra.mxu0 %v736
    %v778 = vpop.f32.mrf.mxu0
    %v779 = vadd.f32 0.0, %v778
    %v780 = vpop.f32.mrf.mxu0
    %v781 = vpop.f32.mrf.mxu0
    %v782 = vadd.f32 0.0, %v781
    %v783 = vpop.f32.mrf.mxu0
    %784 = vdwg.mxu0
    %v789 = vunpack.c.l.b16 %v404
    %v790 = vunpack.c.l.b16 %v405
    %v791 = vunpack.c.l.b16 %v406
    %v792 = vunpack.c.l.b16 %v407
    %v793 = vpack.c.b16 %v790, %v789
    %v794 = vpack.c.b16 %v792, %v791
    %v796 = vsel %vm290, %v402, 0
    %v799 = vsel %vm290, %v793, 0
    %v802 = vsel %vm290, %v794, 0
    %804 = vmatprep.subr.bf16.mxu0 0
    %805 = vmatpush1.bf16.xpose.msra.mxu0 0
    %806 = vmatprep.subr.bf16.mxu0 0
    %807 = vmatpush1.bf16.xpose.msra.mxu0 0
    %808 = vmatprep.subr.bf16.mxu0 0
    %809 = vmatpush1.bf16.xpose.msra.mxu0 0
    %810 = vmatprep.subr.bf16.mxu0 0
    %811 = vmatpush1.bf16.xpose.msra.mxu0 0
    %812 = vmatprep.subr.bf16.mxu0 0
    %813 = vmatpush1.bf16.xpose.msra.mxu0 0
    %814 = vmatprep.subr.bf16.mxu0 0
    %815 = vmatpush1.bf16.xpose.msra.mxu0 0
    %816 = vmatprep.subr.bf16.mxu0 0
    %817 = vmatpush1.bf16.xpose.msra.mxu0 %v802
    %818 = vmatprep.subr.bf16.mxu0 0
    %819 = vmatpush1.bf16.xpose.msra.mxu0 %v799
    %820 = vmatprep.subr.bf16.mxu0 0
    %821 = vmatpush2.bf16.xpose.msra.mxu0 0
    %822 = vmatprep.subr.bf16.mxu0 0
    %823 = vmatpush2.bf16.xpose.msra.mxu0 0
    %824 = vmatprep.subr.bf16.mxu0 0
    %825 = vmatpush2.bf16.xpose.msra.mxu0 0
    %826 = vmatprep.subr.bf16.mxu0 0
    %827 = vmatpush2.bf16.xpose.msra.mxu0 0
    %828 = vmatprep.subr.bf16.mxu0 0
    %829 = vmatpush2.bf16.xpose.msra.mxu0 0
    %830 = vmatprep.subr.bf16.mxu0 0
    %831 = vmatpush2.bf16.xpose.msra.mxu0 0
    %832 = vmatprep.subr.bf16.mxu0 0
    %833 = vmatpush2.bf16.xpose.msra.mxu0 0
    %834 = vmatprep.subr.bf16.mxu0 0
    %835 = vmatpush2.bf16.xpose.msra.mxu0 0
    %836 = vmatprep.mubr.bf16.mxu0 0
    %837 = vmatmul.mubr.bf16.gmra.mxu0 %v796
    %v838 = vpop.f32.mrf.mxu0
    %v839 = vadd.f32 %v779, %v838
    %v840 = vpop.f32.mrf.mxu0
    %v841 = vpop.f32.mrf.mxu0
    %v842 = vadd.f32 %v782, %v841
    %v843 = vpop.f32.mrf.mxu0
    %844 = vdwg.mxu0
    %s845 = scalar_lea.vmem %s2, 128
    %v846 = vld [vmem:[%s845] sm:$0xf]
    %v847 = vld [vmem:[%s845 + $0x4] sm:$0xf]
    %v848 = vld [vmem:[%s845 + $0x8] sm:$0xf]
    %v849 = vld [vmem:[%s845 + $0xc] sm:$0xf]
    %s850 = scalar_lea.vmem %s3, 6
    %v851 = vld [vmem:[%s850] sm:$0x1]
    %v853 = vlaneseq
    %v854 = vshrl.u32 %v853, 7
    %v855 = vsub.s32 0, %v854
    %v856 = vrot.slane %v851, %v855
    %v862 = vunpack.c.l.b16 %v846
    %v863 = vunpack.c.l.b16 %v847
    %v864 = vunpack.c.l.b16 %v848
    %v865 = vunpack.c.l.b16 %v849
    %v866 = vpack.c.b16 %v863, %v862
    %v867 = vpack.c.b16 %v865, %v864
    %870 = vmatprep.subr.bf16.mxu0 0
    %871 = vmatpush1.bf16.msra.mxu0 0
    %872 = vmatprep.subr.bf16.mxu0 0
    %873 = vmatpush1.bf16.msra.mxu0 0
    %874 = vmatprep.subr.bf16.mxu0 0
    %875 = vmatpush1.bf16.msra.mxu0 0
    %876 = vmatprep.subr.bf16.mxu0 0
    %877 = vmatpush1.bf16.msra.mxu0 0
    %878 = vmatprep.subr.bf16.mxu0 0
    %879 = vmatpush1.bf16.msra.mxu0 0
    %880 = vmatprep.subr.bf16.mxu0 0
    %881 = vmatpush1.bf16.msra.mxu0 0
    %882 = vmatprep.subr.bf16.mxu0 0
    %883 = vmatpush1.bf16.msra.mxu0 %v867
    %884 = vmatprep.subr.bf16.mxu0 0
    %885 = vmatpush1.bf16.msra.mxu0 %v866
    %886 = vmatprep.subr.bf16.mxu0 0
    %887 = vmatpush2.bf16.msra.mxu0 0
    %888 = vmatprep.subr.bf16.mxu0 0
    %889 = vmatpush2.bf16.msra.mxu0 0
    %890 = vmatprep.subr.bf16.mxu0 0
    %891 = vmatpush2.bf16.msra.mxu0 0
    %892 = vmatprep.subr.bf16.mxu0 0
    %893 = vmatpush2.bf16.msra.mxu0 0
    %894 = vmatprep.subr.bf16.mxu0 0
    %895 = vmatpush2.bf16.msra.mxu0 0
    %896 = vmatprep.subr.bf16.mxu0 0
    %897 = vmatpush2.bf16.msra.mxu0 0
    %898 = vmatprep.subr.bf16.mxu0 0
    %899 = vmatpush2.bf16.msra.mxu0 0
    %900 = vmatprep.subr.bf16.mxu0 0
    %901 = vmatpush2.bf16.msra.mxu0 0
    %902 = vmatprep.mubr.bf16.mxu0 0
    %903 = vmatmul.mubr.bf16.gmra.mxu0 %v112
    %v904 = vpop.f32.mrf.mxu0
    %v905 = vadd.f32 %v856, %v904
    %v906 = vpop.f32.mrf.mxu0
    %v907 = vpop.f32.mrf.mxu0
    %v908 = vadd.f32 %v856, %v907
    %v909 = vpop.f32.mrf.mxu0
    %910 = vdwg.mxu0
    %v911 = vpack.c.bf16 %v908, %v905
    %s912 = scalar_lea.vmem %s2, 144
    %v913 = vld [vmem:[%s912] sm:$0xf]
    %v914 = vld [vmem:[%s912 + $0x4] sm:$0xf]
    %v915 = vld [vmem:[%s912 + $0x8] sm:$0xf]
    %v916 = vld [vmem:[%s912 + $0xc] sm:$0xf]
    %s917 = scalar_lea.vmem %s3, 7
    %v918 = vld [vmem:[%s917] sm:$0x1]
    %v920 = vlaneseq
    %v921 = vshrl.u32 %v920, 7
    %v922 = vsub.s32 0, %v921
    %v923 = vrot.slane %v918, %v922
    %v929 = vunpack.c.l.b16 %v913
    %v930 = vunpack.c.l.b16 %v914
    %v931 = vunpack.c.l.b16 %v915
    %v932 = vunpack.c.l.b16 %v916
    %v933 = vpack.c.b16 %v930, %v929
    %v934 = vpack.c.b16 %v932, %v931
    %937 = vmatprep.subr.bf16.mxu0 0
    %938 = vmatpush1.bf16.msra.mxu0 0
    %939 = vmatprep.subr.bf16.mxu0 0
    %940 = vmatpush1.bf16.msra.mxu0 0
    %941 = vmatprep.subr.bf16.mxu0 0
    %942 = vmatpush1.bf16.msra.mxu0 0
    %943 = vmatprep.subr.bf16.mxu0 0
    %944 = vmatpush1.bf16.msra.mxu0 0
    %945 = vmatprep.subr.bf16.mxu0 0
    %946 = vmatpush1.bf16.msra.mxu0 0
    %947 = vmatprep.subr.bf16.mxu0 0
    %948 = vmatpush1.bf16.msra.mxu0 0
    %949 = vmatprep.subr.bf16.mxu0 0
    %950 = vmatpush1.bf16.msra.mxu0 %v934
    %951 = vmatprep.subr.bf16.mxu0 0
    %952 = vmatpush1.bf16.msra.mxu0 %v933
    %953 = vmatprep.subr.bf16.mxu0 0
    %954 = vmatpush2.bf16.msra.mxu0 0
    %955 = vmatprep.subr.bf16.mxu0 0
    %956 = vmatpush2.bf16.msra.mxu0 0
    %957 = vmatprep.subr.bf16.mxu0 0
    %958 = vmatpush2.bf16.msra.mxu0 0
    %959 = vmatprep.subr.bf16.mxu0 0
    %960 = vmatpush2.bf16.msra.mxu0 0
    %961 = vmatprep.subr.bf16.mxu0 0
    %962 = vmatpush2.bf16.msra.mxu0 0
    %963 = vmatprep.subr.bf16.mxu0 0
    %964 = vmatpush2.bf16.msra.mxu0 0
    %965 = vmatprep.subr.bf16.mxu0 0
    %966 = vmatpush2.bf16.msra.mxu0 0
    %967 = vmatprep.subr.bf16.mxu0 0
    %968 = vmatpush2.bf16.msra.mxu0 0
    %969 = vmatprep.mubr.bf16.mxu0 0
    %970 = vmatmul.mubr.bf16.gmra.mxu0 %v112
    %v971 = vpop.f32.mrf.mxu0
    %v972 = vadd.f32 %v923, %v971
    %v973 = vpop.f32.mrf.mxu0
    %v974 = vpop.f32.mrf.mxu0
    %v975 = vadd.f32 %v923, %v974
    %v976 = vpop.f32.mrf.mxu0
    %977 = vdwg.mxu0
    %v978 = vpack.c.bf16 %v975, %v972
    %s979 = scalar_lea.vmem %s2, 160
    %v980 = vld [vmem:[%s979] sm:$0xf]
    %v981 = vld [vmem:[%s979 + $0x4] sm:$0xf]
    %v982 = vld [vmem:[%s979 + $0x8] sm:$0xf]
    %v983 = vld [vmem:[%s979 + $0xc] sm:$0xf]
    %s984 = scalar_lea.vmem %s3, 8
    %v985 = vld [vmem:[%s984] sm:$0x1]
    %v987 = vlaneseq
    %v988 = vshrl.u32 %v987, 7
    %v989 = vsub.s32 0, %v988
    %v990 = vrot.slane %v985, %v989
    %v996 = vunpack.c.l.b16 %v980
    %v997 = vunpack.c.l.b16 %v981
    %v998 = vunpack.c.l.b16 %v982
    %v999 = vunpack.c.l.b16 %v983
    %v1000 = vpack.c.b16 %v997, %v996
    %v1001 = vpack.c.b16 %v999, %v998
    %1004 = vmatprep.subr.bf16.mxu0 0
    %1005 = vmatpush1.bf16.msra.mxu0 0
    %1006 = vmatprep.subr.bf16.mxu0 0
    %1007 = vmatpush1.bf16.msra.mxu0 0
    %1008 = vmatprep.subr.bf16.mxu0 0
    %1009 = vmatpush1.bf16.msra.mxu0 0
    %1010 = vmatprep.subr.bf16.mxu0 0
    %1011 = vmatpush1.bf16.msra.mxu0 0
    %1012 = vmatprep.subr.bf16.mxu0 0
    %1013 = vmatpush1.bf16.msra.mxu0 0
    %1014 = vmatprep.subr.bf16.mxu0 0
    %1015 = vmatpush1.bf16.msra.mxu0 0
    %1016 = vmatprep.subr.bf16.mxu0 0
    %1017 = vmatpush1.bf16.msra.mxu0 %v1001
    %1018 = vmatprep.subr.bf16.mxu0 0
    %1019 = vmatpush1.bf16.msra.mxu0 %v1000
    %1020 = vmatprep.subr.bf16.mxu0 0
    %1021 = vmatpush2.bf16.msra.mxu0 0
    %1022 = vmatprep.subr.bf16.mxu0 0
    %1023 = vmatpush2.bf16.msra.mxu0 0
    %1024 = vmatprep.subr.bf16.mxu0 0
    %1025 = vmatpush2.bf16.msra.mxu0 0
    %1026 = vmatprep.subr.bf16.mxu0 0
    %1027 = vmatpush2.bf16.msra.mxu0 0
    %1028 = vmatprep.subr.bf16.mxu0 0
    %1029 = vmatpush2.bf16.msra.mxu0 0
    %1030 = vmatprep.subr.bf16.mxu0 0
    %1031 = vmatpush2.bf16.msra.mxu0 0
    %1032 = vmatprep.subr.bf16.mxu0 0
    %1033 = vmatpush2.bf16.msra.mxu0 0
    %1034 = vmatprep.subr.bf16.mxu0 0
    %1035 = vmatpush2.bf16.msra.mxu0 0
    %1036 = vmatprep.mubr.bf16.mxu0 0
    %1037 = vmatmul.mubr.bf16.gmra.mxu0 %v112
    %v1038 = vpop.f32.mrf.mxu0
    %v1039 = vadd.f32 %v990, %v1038
    %v1040 = vpop.f32.mrf.mxu0
    %v1041 = vpop.f32.mrf.mxu0
    %v1042 = vadd.f32 %v990, %v1041
    %v1043 = vpop.f32.mrf.mxu0
    %1044 = vdwg.mxu0
    %v1045 = vpack.c.bf16 %v1042, %v1039
    %v1047 = vsel %vm290, %v911, 0
    %v1050 = vsel %vm290, %v978, 0
    %1052 = vmatprep.subr.bf16.mxu0 0
    %1053 = vmatpush1.bf16.xpose.msra.mxu0 0
    %1054 = vmatprep.subr.bf16.mxu0 0
    %1055 = vmatpush1.bf16.xpose.msra.mxu0 0
    %1056 = vmatprep.subr.bf16.mxu0 0
    %1057 = vmatpush1.bf16.xpose.msra.mxu0 0
    %1058 = vmatprep.subr.bf16.mxu0 0
    %1059 = vmatpush1.bf16.xpose.msra.mxu0 0
    %1060 = vmatprep.subr.bf16.mxu0 0
    %1061 = vmatpush1.bf16.xpose.msra.mxu0 0
    %1062 = vmatprep.subr.bf16.mxu0 0
    %1063 = vmatpush1.bf16.xpose.msra.mxu0 0
    %1064 = vmatprep.subr.bf16.mxu0 0
    %1065 = vmatpush1.bf16.xpose.msra.mxu0 0
    %1066 = vmatprep.subr.bf16.mxu0 0
    %1067 = vmatpush1.bf16.xpose.msra.mxu0 %v1050
    %1068 = vmatprep.subr.bf16.mxu0 0
    %1069 = vmatpush2.bf16.xpose.msra.mxu0 0
    %1070 = vmatprep.subr.bf16.mxu0 0
    %1071 = vmatpush2.bf16.xpose.msra.mxu0 0
    %1072 = vmatprep.subr.bf16.mxu0 0
    %1073 = vmatpush2.bf16.xpose.msra.mxu0 0
    %1074 = vmatprep.subr.bf16.mxu0 0
    %1075 = vmatpush2.bf16.xpose.msra.mxu0 0
    %1076 = vmatprep.subr.bf16.mxu0 0
    %1077 = vmatpush2.bf16.xpose.msra.mxu0 0
    %1078 = vmatprep.subr.bf16.mxu0 0
    %1079 = vmatpush2.bf16.xpose.msra.mxu0 0
    %1080 = vmatprep.subr.bf16.mxu0 0
    %1081 = vmatpush2.bf16.xpose.msra.mxu0 0
    %1082 = vmatprep.subr.bf16.mxu0 0
    %1083 = vmatpush2.bf16.xpose.msra.mxu0 0
    %1084 = vmatprep.mubr.bf16.mxu0 0
    %1085 = vmatmul.mubr.bf16.gmra.mxu0 %v1047
    %v1086 = vpop.f32.mrf.mxu0
    %v1087 = vadd.f32 0.0, %v1086
    %v1088 = vpop.f32.mrf.mxu0
    %v1089 = vpop.f32.mrf.mxu0
    %v1090 = vadd.f32 0.0, %v1089
    %v1091 = vpop.f32.mrf.mxu0
    %1092 = vdwg.mxu0
    %v1093 = vmul.f32 %v1087, 0.35355338
    %v1094 = vmul.f32 %v1090, 0.35355338
    %v1095 = vadd.f32 %v1093, %v38
    %v1096 = vadd.f32 %v1094, %v39
    %v1097 = vmul.f32 %v1095, 1.442695
    %v1098 = vpow.pop %v1097
    %v1099 = vmul.f32 %v1096, 1.442695
    %v1100 = vpow.pop %v1099
    %v1101 = vsel %vm346, %v1098, 0.0
    %1102 = vadd.xlane.f32.xlu0 %v1101
    %v1103 = vpop.xlane.xlu0 %1102
    %v1104 = vsel %vm346, %v1100, 0.0
    %1105 = vadd.xlane.f32.xlu0 %v1104
    %v1106 = vpop.xlane.xlu0 %1105
    %v1107 = vrcp.pop %v1103
    %v1108 = vrcp.pop %v1106
    %v1109 = vmul.f32 %v1098, %v1107
    %v1110 = vmul.f32 %v1100, %v1108
    %v1111 = vpack.c.bf16 %v1110, %v1109
    %v1113 = vsel %vm346, %v1111, 0
    %1115 = vmatprep.subr.bf16.mxu0 0
    %1116 = vmatpush1.bf16.msra.mxu0 0
    %1117 = vmatprep.subr.bf16.mxu0 0
    %1118 = vmatpush1.bf16.msra.mxu0 0
    %1119 = vmatprep.subr.bf16.mxu0 0
    %1120 = vmatpush1.bf16.msra.mxu0 0
    %1121 = vmatprep.subr.bf16.mxu0 0
    %1122 = vmatpush1.bf16.msra.mxu0 0
    %1123 = vmatprep.subr.bf16.mxu0 0
    %1124 = vmatpush1.bf16.msra.mxu0 0
    %1125 = vmatprep.subr.bf16.mxu0 0
    %1126 = vmatpush1.bf16.msra.mxu0 0
    %1127 = vmatprep.subr.bf16.mxu0 0
    %1128 = vmatpush1.bf16.msra.mxu0 0
    %1129 = vmatprep.subr.bf16.mxu0 0
    %1130 = vmatpush1.bf16.msra.mxu0 %v1045
    %1131 = vmatprep.subr.bf16.mxu0 0
    %1132 = vmatpush2.bf16.msra.mxu0 0
    %1133 = vmatprep.subr.bf16.mxu0 0
    %1134 = vmatpush2.bf16.msra.mxu0 0
    %1135 = vmatprep.subr.bf16.mxu0 0
    %1136 = vmatpush2.bf16.msra.mxu0 0
    %1137 = vmatprep.subr.bf16.mxu0 0
    %1138 = vmatpush2.bf16.msra.mxu0 0
    %1139 = vmatprep.subr.bf16.mxu0 0
    %1140 = vmatpush2.bf16.msra.mxu0 0
    %1141 = vmatprep.subr.bf16.mxu0 0
    %1142 = vmatpush2.bf16.msra.mxu0 0
    %1143 = vmatprep.subr.bf16.mxu0 0
    %1144 = vmatpush2.bf16.msra.mxu0 0
    %1145 = vmatprep.subr.bf16.mxu0 0
    %1146 = vmatpush2.bf16.msra.mxu0 0
    %1147 = vmatprep.mubr.bf16.mxu0 0
    %1148 = vmatmul.mubr.bf16.gmra.mxu0 %v1113
    %v1149 = vpop.f32.mrf.mxu0
    %v1150 = vadd.f32 0.0, %v1149
    %v1151 = vpop.f32.mrf.mxu0
    %v1152 = vpop.f32.mrf.mxu0
    %v1153 = vadd.f32 0.0, %v1152
    %v1154 = vpop.f32.mrf.mxu0
    %1155 = vdwg.mxu0
    %v1156 = vpack.c.bf16 %v1153, %v1150
    %s1157 = scalar_lea.vmem %s2, 176
    %v1158 = vld [vmem:[%s1157] sm:$0xf]
    %v1159 = vld [vmem:[%s1157 + $0x4] sm:$0xf]
    %v1160 = vld [vmem:[%s1157 + $0x8] sm:$0xf]
    %v1161 = vld [vmem:[%s1157 + $0xc] sm:$0xf]
    %v1166 = vunpack.c.l.b16 %v1158
    %v1167 = vunpack.c.l.b16 %v1159
    %v1168 = vunpack.c.l.b16 %v1160
    %v1169 = vunpack.c.l.b16 %v1161
    %v1170 = vpack.c.b16 %v1167, %v1166
    %v1171 = vpack.c.b16 %v1169, %v1168
    %v1173 = vsel %vm290, %v1156, 0
    %v1176 = vsel %vm290, %v1170, 0
    %v1179 = vsel %vm290, %v1171, 0
    %1181 = vmatprep.subr.bf16.mxu0 0
    %1182 = vmatpush1.bf16.xpose.msra.mxu0 0
    %1183 = vmatprep.subr.bf16.mxu0 0
    %1184 = vmatpush1.bf16.xpose.msra.mxu0 0
    %1185 = vmatprep.subr.bf16.mxu0 0
    %1186 = vmatpush1.bf16.xpose.msra.mxu0 0
    %1187 = vmatprep.subr.bf16.mxu0 0
    %1188 = vmatpush1.bf16.xpose.msra.mxu0 0
    %1189 = vmatprep.subr.bf16.mxu0 0
    %1190 = vmatpush1.bf16.xpose.msra.mxu0 0
    %1191 = vmatprep.subr.bf16.mxu0 0
    %1192 = vmatpush1.bf16.xpose.msra.mxu0 0
    %1193 = vmatprep.subr.bf16.mxu0 0
    %1194 = vmatpush1.bf16.xpose.msra.mxu0 %v1179
    %1195 = vmatprep.subr.bf16.mxu0 0
    %1196 = vmatpush1.bf16.xpose.msra.mxu0 %v1176
    %1197 = vmatprep.subr.bf16.mxu0 0
    %1198 = vmatpush2.bf16.xpose.msra.mxu0 0
    %1199 = vmatprep.subr.bf16.mxu0 0
    %1200 = vmatpush2.bf16.xpose.msra.mxu0 0
    %1201 = vmatprep.subr.bf16.mxu0 0
    %1202 = vmatpush2.bf16.xpose.msra.mxu0 0
    %1203 = vmatprep.subr.bf16.mxu0 0
    %1204 = vmatpush2.bf16.xpose.msra.mxu0 0
    %1205 = vmatprep.subr.bf16.mxu0 0
    %1206 = vmatpush2.bf16.xpose.msra.mxu0 0
    %1207 = vmatprep.subr.bf16.mxu0 0
    %1208 = vmatpush2.bf16.xpose.msra.mxu0 0
    %1209 = vmatprep.subr.bf16.mxu0 0
    %1210 = vmatpush2.bf16.xpose.msra.mxu0 0
    %1211 = vmatprep.subr.bf16.mxu0 0
    %1212 = vmatpush2.bf16.xpose.msra.mxu0 0
    %1213 = vmatprep.mubr.bf16.mxu0 0
    %1214 = vmatmul.mubr.bf16.gmra.mxu0 %v1173
    %v1215 = vpop.f32.mrf.mxu0
    %v1216 = vadd.f32 0.0, %v1215
    %v1217 = vpop.f32.mrf.mxu0
    %v1218 = vpop.f32.mrf.mxu0
    %v1219 = vadd.f32 0.0, %v1218
    %v1220 = vpop.f32.mrf.mxu0
    %1221 = vdwg.mxu0
    %v1222 = vadd.f32 %v839, %v1216
    %v1223 = vadd.f32 %v842, %v1219
    %s1224 = scalar_lea.vmem %s2, 192
    %v1225 = vld [vmem:[%s1224] sm:$0xf]
    %v1226 = vld [vmem:[%s1224 + $0x4] sm:$0xf]
    %v1227 = vld [vmem:[%s1224 + $0x8] sm:$0xf]
    %v1228 = vld [vmem:[%s1224 + $0xc] sm:$0xf]
    %s1229 = scalar_lea.vmem %s3, 9
    %v1230 = vld [vmem:[%s1229] sm:$0x1]
    %v1232 = vlaneseq
    %v1233 = vshrl.u32 %v1232, 7
    %v1234 = vsub.s32 0, %v1233
    %v1235 = vrot.slane %v1230, %v1234
    %v1241 = vunpack.c.l.b16 %v1225
    %v1242 = vunpack.c.l.b16 %v1226
    %v1243 = vunpack.c.l.b16 %v1227
    %v1244 = vunpack.c.l.b16 %v1228
    %v1245 = vpack.c.b16 %v1242, %v1241
    %v1246 = vpack.c.b16 %v1244, %v1243
    %1249 = vmatprep.subr.bf16.mxu0 0
    %1250 = vmatpush1.bf16.msra.mxu0 0
    %1251 = vmatprep.subr.bf16.mxu0 0
    %1252 = vmatpush1.bf16.msra.mxu0 0
    %1253 = vmatprep.subr.bf16.mxu0 0
    %1254 = vmatpush1.bf16.msra.mxu0 0
    %1255 = vmatprep.subr.bf16.mxu0 0
    %1256 = vmatpush1.bf16.msra.mxu0 0
    %1257 = vmatprep.subr.bf16.mxu0 0
    %1258 = vmatpush1.bf16.msra.mxu0 0
    %1259 = vmatprep.subr.bf16.mxu0 0
    %1260 = vmatpush1.bf16.msra.mxu0 0
    %1261 = vmatprep.subr.bf16.mxu0 0
    %1262 = vmatpush1.bf16.msra.mxu0 %v1246
    %1263 = vmatprep.subr.bf16.mxu0 0
    %1264 = vmatpush1.bf16.msra.mxu0 %v1245
    %1265 = vmatprep.subr.bf16.mxu0 0
    %1266 = vmatpush2.bf16.msra.mxu0 0
    %1267 = vmatprep.subr.bf16.mxu0 0
    %1268 = vmatpush2.bf16.msra.mxu0 0
    %1269 = vmatprep.subr.bf16.mxu0 0
    %1270 = vmatpush2.bf16.msra.mxu0 0
    %1271 = vmatprep.subr.bf16.mxu0 0
    %1272 = vmatpush2.bf16.msra.mxu0 0
    %1273 = vmatprep.subr.bf16.mxu0 0
    %1274 = vmatpush2.bf16.msra.mxu0 0
    %1275 = vmatprep.subr.bf16.mxu0 0
    %1276 = vmatpush2.bf16.msra.mxu0 0
    %1277 = vmatprep.subr.bf16.mxu0 0
    %1278 = vmatpush2.bf16.msra.mxu0 0
    %1279 = vmatprep.subr.bf16.mxu0 0
    %1280 = vmatpush2.bf16.msra.mxu0 0
    %1281 = vmatprep.mubr.bf16.mxu0 0
    %1282 = vmatmul.mubr.bf16.gmra.mxu0 %v112
    %v1283 = vpop.f32.mrf.mxu0
    %v1284 = vadd.f32 %v1235, %v1283
    %v1285 = vpop.f32.mrf.mxu0
    %v1286 = vpop.f32.mrf.mxu0
    %v1287 = vadd.f32 %v1235, %v1286
    %v1288 = vpop.f32.mrf.mxu0
    %1289 = vdwg.mxu0
    %v1290 = vpack.c.bf16 %v1287, %v1284
    %s1291 = scalar_lea.vmem %s2, 208
    %v1292 = vld [vmem:[%s1291] sm:$0xf]
    %v1293 = vld [vmem:[%s1291 + $0x4] sm:$0xf]
    %v1294 = vld [vmem:[%s1291 + $0x8] sm:$0xf]
    %v1295 = vld [vmem:[%s1291 + $0xc] sm:$0xf]
    %s1296 = scalar_lea.vmem %s3, 10
    %v1297 = vld [vmem:[%s1296] sm:$0x1]
    %v1299 = vlaneseq
    %v1300 = vshrl.u32 %v1299, 7
    %v1301 = vsub.s32 0, %v1300
    %v1302 = vrot.slane %v1297, %v1301
    %v1308 = vunpack.c.l.b16 %v1292
    %v1309 = vunpack.c.l.b16 %v1293
    %v1310 = vunpack.c.l.b16 %v1294
    %v1311 = vunpack.c.l.b16 %v1295
    %v1312 = vpack.c.b16 %v1309, %v1308
    %v1313 = vpack.c.b16 %v1311, %v1310
    %1316 = vmatprep.subr.bf16.mxu0 0
    %1317 = vmatpush1.bf16.msra.mxu0 0
    %1318 = vmatprep.subr.bf16.mxu0 0
    %1319 = vmatpush1.bf16.msra.mxu0 0
    %1320 = vmatprep.subr.bf16.mxu0 0
    %1321 = vmatpush1.bf16.msra.mxu0 0
    %1322 = vmatprep.subr.bf16.mxu0 0
    %1323 = vmatpush1.bf16.msra.mxu0 0
    %1324 = vmatprep.subr.bf16.mxu0 0
    %1325 = vmatpush1.bf16.msra.mxu0 0
    %1326 = vmatprep.subr.bf16.mxu0 0
    %1327 = vmatpush1.bf16.msra.mxu0 0
    %1328 = vmatprep.subr.bf16.mxu0 0
    %1329 = vmatpush1.bf16.msra.mxu0 %v1313
    %1330 = vmatprep.subr.bf16.mxu0 0
    %1331 = vmatpush1.bf16.msra.mxu0 %v1312
    %1332 = vmatprep.subr.bf16.mxu0 0
    %1333 = vmatpush2.bf16.msra.mxu0 0
    %1334 = vmatprep.subr.bf16.mxu0 0
    %1335 = vmatpush2.bf16.msra.mxu0 0
    %1336 = vmatprep.subr.bf16.mxu0 0
    %1337 = vmatpush2.bf16.msra.mxu0 0
    %1338 = vmatprep.subr.bf16.mxu0 0
    %1339 = vmatpush2.bf16.msra.mxu0 0
    %1340 = vmatprep.subr.bf16.mxu0 0
    %1341 = vmatpush2.bf16.msra.mxu0 0
    %1342 = vmatprep.subr.bf16.mxu0 0
    %1343 = vmatpush2.bf16.msra.mxu0 0
    %1344 = vmatprep.subr.bf16.mxu0 0
    %1345 = vmatpush2.bf16.msra.mxu0 0
    %1346 = vmatprep.subr.bf16.mxu0 0
    %1347 = vmatpush2.bf16.msra.mxu0 0
    %1348 = vmatprep.mubr.bf16.mxu0 0
    %1349 = vmatmul.mubr.bf16.gmra.mxu0 %v112
    %v1350 = vpop.f32.mrf.mxu0
    %v1351 = vadd.f32 %v1302, %v1350
    %v1352 = vpop.f32.mrf.mxu0
    %v1353 = vpop.f32.mrf.mxu0
    %v1354 = vadd.f32 %v1302, %v1353
    %v1355 = vpop.f32.mrf.mxu0
    %1356 = vdwg.mxu0
    %v1357 = vpack.c.bf16 %v1354, %v1351
    %s1358 = scalar_lea.vmem %s2, 224
    %v1359 = vld [vmem:[%s1358] sm:$0xf]
    %v1360 = vld [vmem:[%s1358 + $0x4] sm:$0xf]
    %v1361 = vld [vmem:[%s1358 + $0x8] sm:$0xf]
    %v1362 = vld [vmem:[%s1358 + $0xc] sm:$0xf]
    %s1363 = scalar_lea.vmem %s3, 11
    %v1364 = vld [vmem:[%s1363] sm:$0x1]
    %v1366 = vlaneseq
    %v1367 = vshrl.u32 %v1366, 7
    %v1368 = vsub.s32 0, %v1367
    %v1369 = vrot.slane %v1364, %v1368
    %v1375 = vunpack.c.l.b16 %v1359
    %v1376 = vunpack.c.l.b16 %v1360
    %v1377 = vunpack.c.l.b16 %v1361
    %v1378 = vunpack.c.l.b16 %v1362
    %v1379 = vpack.c.b16 %v1376, %v1375
    %v1380 = vpack.c.b16 %v1378, %v1377
    %1383 = vmatprep.subr.bf16.mxu0 0
    %1384 = vmatpush1.bf16.msra.mxu0 0
    %1385 = vmatprep.subr.bf16.mxu0 0
    %1386 = vmatpush1.bf16.msra.mxu0 0
    %1387 = vmatprep.subr.bf16.mxu0 0
    %1388 = vmatpush1.bf16.msra.mxu0 0
    %1389 = vmatprep.subr.bf16.mxu0 0
    %1390 = vmatpush1.bf16.msra.mxu0 0
    %1391 = vmatprep.subr.bf16.mxu0 0
    %1392 = vmatpush1.bf16.msra.mxu0 0
    %1393 = vmatprep.subr.bf16.mxu0 0
    %1394 = vmatpush1.bf16.msra.mxu0 0
    %1395 = vmatprep.subr.bf16.mxu0 0
    %1396 = vmatpush1.bf16.msra.mxu0 %v1380
    %1397 = vmatprep.subr.bf16.mxu0 0
    %1398 = vmatpush1.bf16.msra.mxu0 %v1379
    %1399 = vmatprep.subr.bf16.mxu0 0
    %1400 = vmatpush2.bf16.msra.mxu0 0
    %1401 = vmatprep.subr.bf16.mxu0 0
    %1402 = vmatpush2.bf16.msra.mxu0 0
    %1403 = vmatprep.subr.bf16.mxu0 0
    %1404 = vmatpush2.bf16.msra.mxu0 0
    %1405 = vmatprep.subr.bf16.mxu0 0
    %1406 = vmatpush2.bf16.msra.mxu0 0
    %1407 = vmatprep.subr.bf16.mxu0 0
    %1408 = vmatpush2.bf16.msra.mxu0 0
    %1409 = vmatprep.subr.bf16.mxu0 0
    %1410 = vmatpush2.bf16.msra.mxu0 0
    %1411 = vmatprep.subr.bf16.mxu0 0
    %1412 = vmatpush2.bf16.msra.mxu0 0
    %1413 = vmatprep.subr.bf16.mxu0 0
    %1414 = vmatpush2.bf16.msra.mxu0 0
    %1415 = vmatprep.mubr.bf16.mxu0 0
    %1416 = vmatmul.mubr.bf16.gmra.mxu0 %v112
    %v1417 = vpop.f32.mrf.mxu0
    %v1418 = vadd.f32 %v1369, %v1417
    %v1419 = vpop.f32.mrf.mxu0
    %v1420 = vpop.f32.mrf.mxu0
    %v1421 = vadd.f32 %v1369, %v1420
    %v1422 = vpop.f32.mrf.mxu0
    %1423 = vdwg.mxu0
    %v1424 = vpack.c.bf16 %v1421, %v1418
    %v1426 = vsel %vm290, %v1290, 0
    %v1429 = vsel %vm290, %v1357, 0
    %1431 = vmatprep.subr.bf16.mxu0 0
    %1432 = vmatpush1.bf16.xpose.msra.mxu0 0
    %1433 = vmatprep.subr.bf16.mxu0 0
    %1434 = vmatpush1.bf16.xpose.msra.mxu0 0
    %1435 = vmatprep.subr.bf16.mxu0 0
    %1436 = vmatpush1.bf16.xpose.msra.mxu0 0
    %1437 = vmatprep.subr.bf16.mxu0 0
    %1438 = vmatpush1.bf16.xpose.msra.mxu0 0
    %1439 = vmatprep.subr.bf16.mxu0 0
    %1440 = vmatpush1.bf16.xpose.msra.mxu0 0
    %1441 = vmatprep.subr.bf16.mxu0 0
    %1442 = vmatpush1.bf16.xpose.msra.mxu0 0
    %1443 = vmatprep.subr.bf16.mxu0 0
    %1444 = vmatpush1.bf16.xpose.msra.mxu0 0
    %1445 = vmatprep.subr.bf16.mxu0 0
    %1446 = vmatpush1.bf16.xpose.msra.mxu0 %v1429
    %1447 = vmatprep.subr.bf16.mxu0 0
    %1448 = vmatpush2.bf16.xpose.msra.mxu0 0
    %1449 = vmatprep.subr.bf16.mxu0 0
    %1450 = vmatpush2.bf16.xpose.msra.mxu0 0
    %1451 = vmatprep.subr.bf16.mxu0 0
    %1452 = vmatpush2.bf16.xpose.msra.mxu0 0
    %1453 = vmatprep.subr.bf16.mxu0 0
    %1454 = vmatpush2.bf16.xpose.msra.mxu0 0
    %1455 = vmatprep.subr.bf16.mxu0 0
    %1456 = vmatpush2.bf16.xpose.msra.mxu0 0
    %1457 = vmatprep.subr.bf16.mxu0 0
    %1458 = vmatpush2.bf16.xpose.msra.mxu0 0
    %1459 = vmatprep.subr.bf16.mxu0 0
    %1460 = vmatpush2.bf16.xpose.msra.mxu0 0
    %1461 = vmatprep.subr.bf16.mxu0 0
    %1462 = vmatpush2.bf16.xpose.msra.mxu0 0
    %1463 = vmatprep.mubr.bf16.mxu0 0
    %1464 = vmatmul.mubr.bf16.gmra.mxu0 %v1426
    %v1465 = vpop.f32.mrf.mxu0
    %v1466 = vadd.f32 0.0, %v1465
    %v1467 = vpop.f32.mrf.mxu0
    %v1468 = vpop.f32.mrf.mxu0
    %v1469 = vadd.f32 0.0, %v1468
    %v1470 = vpop.f32.mrf.mxu0
    %1471 = vdwg.mxu0
    %v1472 = vmul.f32 %v1466, 0.35355338
    %v1473 = vmul.f32 %v1469, 0.35355338
    %v1474 = vadd.f32 %v1472, %v38
    %v1475 = vadd.f32 %v1473, %v39
    %v1476 = vmul.f32 %v1474, 1.442695
    %v1477 = vpow.pop %v1476
    %v1478 = vmul.f32 %v1475, 1.442695
    %v1479 = vpow.pop %v1478
    %v1480 = vsel %vm346, %v1477, 0.0
    %1481 = vadd.xlane.f32.xlu0 %v1480
    %v1482 = vpop.xlane.xlu0 %1481
    %v1483 = vsel %vm346, %v1479, 0.0
    %1484 = vadd.xlane.f32.xlu0 %v1483
    %v1485 = vpop.xlane.xlu0 %1484
    %v1486 = vrcp.pop %v1482
    %v1487 = vrcp.pop %v1485
    %v1488 = vmul.f32 %v1477, %v1486
    %v1489 = vmul.f32 %v1479, %v1487
    %v1490 = vpack.c.bf16 %v1489, %v1488
    %v1492 = vsel %vm346, %v1490, 0
    %1494 = vmatprep.subr.bf16.mxu0 0
    %1495 = vmatpush1.bf16.msra.mxu0 0
    %1496 = vmatprep.subr.bf16.mxu0 0
    %1497 = vmatpush1.bf16.msra.mxu0 0
    %1498 = vmatprep.subr.bf16.mxu0 0
    %1499 = vmatpush1.bf16.msra.mxu0 0
    %1500 = vmatprep.subr.bf16.mxu0 0
    %1501 = vmatpush1.bf16.msra.mxu0 0
    %1502 = vmatprep.subr.bf16.mxu0 0
    %1503 = vmatpush1.bf16.msra.mxu0 0
    %1504 = vmatprep.subr.bf16.mxu0 0
    %1505 = vmatpush1.bf16.msra.mxu0 0
    %1506 = vmatprep.subr.bf16.mxu0 0
    %1507 = vmatpush1.bf16.msra.mxu0 0
    %1508 = vmatprep.subr.bf16.mxu0 0
    %1509 = vmatpush1.bf16.msra.mxu0 %v1424
    %1510 = vmatprep.subr.bf16.mxu0 0
    %1511 = vmatpush2.bf16.msra.mxu0 0
    %1512 = vmatprep.subr.bf16.mxu0 0
    %1513 = vmatpush2.bf16.msra.mxu0 0
    %1514 = vmatprep.subr.bf16.mxu0 0
    %1515 = vmatpush2.bf16.msra.mxu0 0
    %1516 = vmatprep.subr.bf16.mxu0 0
    %1517 = vmatpush2.bf16.msra.mxu0 0
    %1518 = vmatprep.subr.bf16.mxu0 0
    %1519 = vmatpush2.bf16.msra.mxu0 0
    %1520 = vmatprep.subr.bf16.mxu0 0
    %1521 = vmatpush2.bf16.msra.mxu0 0
    %1522 = vmatprep.subr.bf16.mxu0 0
    %1523 = vmatpush2.bf16.msra.mxu0 0
    %1524 = vmatprep.subr.bf16.mxu0 0
    %1525 = vmatpush2.bf16.msra.mxu0 0
    %1526 = vmatprep.mubr.bf16.mxu0 0
    %1527 = vmatmul.mubr.bf16.gmra.mxu0 %v1492
    %v1528 = vpop.f32.mrf.mxu0
    %v1529 = vadd.f32 0.0, %v1528
    %v1530 = vpop.f32.mrf.mxu0
    %v1531 = vpop.f32.mrf.mxu0
    %v1532 = vadd.f32 0.0, %v1531
    %v1533 = vpop.f32.mrf.mxu0
    %1534 = vdwg.mxu0
    %v1535 = vpack.c.bf16 %v1532, %v1529
    %s1536 = scalar_lea.vmem %s2, 240
    %v1537 = vld [vmem:[%s1536] sm:$0xf]
    %v1538 = vld [vmem:[%s1536 + $0x4] sm:$0xf]
    %v1539 = vld [vmem:[%s1536 + $0x8] sm:$0xf]
    %v1540 = vld [vmem:[%s1536 + $0xc] sm:$0xf]
    %v1545 = vunpack.c.l.b16 %v1537
    %v1546 = vunpack.c.l.b16 %v1538
    %v1547 = vunpack.c.l.b16 %v1539
    %v1548 = vunpack.c.l.b16 %v1540
    %v1549 = vpack.c.b16 %v1546, %v1545
    %v1550 = vpack.c.b16 %v1548, %v1547
    %v1552 = vsel %vm290, %v1535, 0
    %v1555 = vsel %vm290, %v1549, 0
    %v1558 = vsel %vm290, %v1550, 0
    %1560 = vmatprep.subr.bf16.mxu0 0
    %1561 = vmatpush1.bf16.xpose.msra.mxu0 0
    %1562 = vmatprep.subr.bf16.mxu0 0
    %1563 = vmatpush1.bf16.xpose.msra.mxu0 0
    %1564 = vmatprep.subr.bf16.mxu0 0
    %1565 = vmatpush1.bf16.xpose.msra.mxu0 0
    %1566 = vmatprep.subr.bf16.mxu0 0
    %1567 = vmatpush1.bf16.xpose.msra.mxu0 0
    %1568 = vmatprep.subr.bf16.mxu0 0
    %1569 = vmatpush1.bf16.xpose.msra.mxu0 0
    %1570 = vmatprep.subr.bf16.mxu0 0
    %1571 = vmatpush1.bf16.xpose.msra.mxu0 0
    %1572 = vmatprep.subr.bf16.mxu0 0
    %1573 = vmatpush1.bf16.xpose.msra.mxu0 %v1558
    %1574 = vmatprep.subr.bf16.mxu0 0
    %1575 = vmatpush1.bf16.xpose.msra.mxu0 %v1555
    %1576 = vmatprep.subr.bf16.mxu0 0
    %1577 = vmatpush2.bf16.xpose.msra.mxu0 0
    %1578 = vmatprep.subr.bf16.mxu0 0
    %1579 = vmatpush2.bf16.xpose.msra.mxu0 0
    %1580 = vmatprep.subr.bf16.mxu0 0
    %1581 = vmatpush2.bf16.xpose.msra.mxu0 0
    %1582 = vmatprep.subr.bf16.mxu0 0
    %1583 = vmatpush2.bf16.xpose.msra.mxu0 0
    %1584 = vmatprep.subr.bf16.mxu0 0
    %1585 = vmatpush2.bf16.xpose.msra.mxu0 0
    %1586 = vmatprep.subr.bf16.mxu0 0
    %1587 = vmatpush2.bf16.xpose.msra.mxu0 0
    %1588 = vmatprep.subr.bf16.mxu0 0
    %1589 = vmatpush2.bf16.xpose.msra.mxu0 0
    %1590 = vmatprep.subr.bf16.mxu0 0
    %1591 = vmatpush2.bf16.xpose.msra.mxu0 0
    %1592 = vmatprep.mubr.bf16.mxu0 0
    %1593 = vmatmul.mubr.bf16.gmra.mxu0 %v1552
    %v1594 = vpop.f32.mrf.mxu0
    %v1595 = vadd.f32 0.0, %v1594
    %v1596 = vpop.f32.mrf.mxu0
    %v1597 = vpop.f32.mrf.mxu0
    %v1598 = vadd.f32 0.0, %v1597
    %v1599 = vpop.f32.mrf.mxu0
    %1600 = vdwg.mxu0
    %v1601 = vadd.f32 %v1222, %v1595
    %v1602 = vadd.f32 %v1223, %v1598
    %v1603 = vadd.f32 %v36, %v1601
    %v1604 = vadd.f32 %v37, %v1602
    %s1605 = scalar_lea.vmem %s4, 2
    %v1606 = vld [vmem:[%s1605] sm:$0x1]
    %v1608 = vlaneseq
    %v1609 = vshrl.u32 %v1608, 7
    %v1610 = vsub.s32 0, %v1609
    %v1611 = vrot.slane %v1606, %v1610
    %v1613 = vadd.f32 %v1603, %v1611
    %v1614 = vadd.f32 %v1604, %v1611
    %s1615 = scalar_lea.vmem %s4, 3
    %v1616 = vld [vmem:[%s1615] sm:$0x1]
    %s1617 = scalar_lea.vmem %s4, 4
    %v1618 = vld [vmem:[%s1617] sm:$0x1]
    %v1619 = vsel %vm43, %v1613, 0.0
    %1620 = vadd.xlane.f32.xlu0 %v1619
    %v1621 = vpop.xlane.xlu0 %1620
    %v1622 = vsel %vm43, %v1614, 0.0
    %1623 = vadd.xlane.f32.xlu0 %v1622
    %v1624 = vpop.xlane.xlu0 %1623
    %v1625 = vmul.f32 %v1621, %v50
    %v1626 = vmul.f32 %v1624, %v50
    %v1627 = vsub.f32 %v1613, %v1625
    %v1628 = vsub.f32 %v1614, %v1626
    %v1629 = vmul.f32 %v1627, %v1627
    %v1630 = vmul.f32 %v1628, %v1628
    %v1631 = vsel %vm43, %v1629, 0.0
    %1632 = vadd.xlane.f32.xlu0 %v1631
    %v1633 = vpop.xlane.xlu0 %1632
    %v1634 = vsel %vm43, %v1630, 0.0
    %1635 = vadd.xlane.f32.xlu0 %v1634
    %v1636 = vpop.xlane.xlu0 %1635
    %v1637 = vmul.f32 %v1633, %v50
    %v1638 = vmul.f32 %v1636, %v50
    %v1639 = vadd.f32 %v1637, 1e-05
    %v1640 = vadd.f32 %v1638, 1e-05
    %v1641 = vrsqrt.pop %v1639
    %v1642 = vrsqrt.pop %v1640
    %v1643 = vmul.f32 %v1627, %v1641
    %v1644 = vmul.f32 %v1628, %v1642
    %v1646 = vlaneseq
    %v1647 = vshrl.u32 %v1646, 7
    %v1648 = vsub.s32 0, %v1647
    %v1649 = vrot.slane %v1616, %v1648
    %v1651 = vmul.f32 %v1643, %v1649
    %v1652 = vmul.f32 %v1644, %v1649
    %v1654 = vlaneseq
    %v1655 = vshrl.u32 %v1654, 7
    %v1656 = vsub.s32 0, %v1655
    %v1657 = vrot.slane %v1618, %v1656
    %v1659 = vadd.f32 %v1651, %v1657
    %v1660 = vadd.f32 %v1652, %v1657
    %v1661 = vpack.c.bf16 %v1660, %v1659
    %v1662 = vld [vmem:[%s5] sm:$0xf]
    %v1663 = vld [vmem:[%s5 + $0x4] sm:$0xf]
    %v1664 = vld [vmem:[%s5 + $0x8] sm:$0xf]
    %v1665 = vld [vmem:[%s5 + $0xc] sm:$0xf]
    %s1666 = scalar_lea.vmem %s4, 6
    %v1667 = vld [vmem:[%s1666] sm:$0x1]
    %v1669 = vlaneseq
    %v1670 = vshrl.u32 %v1669, 7
    %v1671 = vsub.s32 0, %v1670
    %v1672 = vrot.slane %v1667, %v1671
    %v1678 = vunpack.c.l.b16 %v1662
    %v1679 = vunpack.c.l.b16 %v1663
    %v1680 = vunpack.c.l.b16 %v1664
    %v1681 = vunpack.c.l.b16 %v1665
    %v1682 = vpack.c.b16 %v1679, %v1678
    %v1683 = vpack.c.b16 %v1681, %v1680
    %v1687 = vsel %vm43, %v1661, 0
    %1689 = vmatprep.subr.bf16.mxu0 0
    %1690 = vmatpush1.bf16.msra.mxu0 0
    %1691 = vmatprep.subr.bf16.mxu0 0
    %1692 = vmatpush1.bf16.msra.mxu0 0
    %1693 = vmatprep.subr.bf16.mxu0 0
    %1694 = vmatpush1.bf16.msra.mxu0 0
    %1695 = vmatprep.subr.bf16.mxu0 0
    %1696 = vmatpush1.bf16.msra.mxu0 0
    %1697 = vmatprep.subr.bf16.mxu0 0
    %1698 = vmatpush1.bf16.msra.mxu0 0
    %1699 = vmatprep.subr.bf16.mxu0 0
    %1700 = vmatpush1.bf16.msra.mxu0 0
    %1701 = vmatprep.subr.bf16.mxu0 0
    %1702 = vmatpush1.bf16.msra.mxu0 %v1683
    %1703 = vmatprep.subr.bf16.mxu0 0
    %1704 = vmatpush1.bf16.msra.mxu0 %v1682
    %1705 = vmatprep.subr.bf16.mxu0 0
    %1706 = vmatpush2.bf16.msra.mxu0 0
    %1707 = vmatprep.subr.bf16.mxu0 0
    %1708 = vmatpush2.bf16.msra.mxu0 0
    %1709 = vmatprep.subr.bf16.mxu0 0
    %1710 = vmatpush2.bf16.msra.mxu0 0
    %1711 = vmatprep.subr.bf16.mxu0 0
    %1712 = vmatpush2.bf16.msra.mxu0 0
    %1713 = vmatprep.subr.bf16.mxu0 0
    %1714 = vmatpush2.bf16.msra.mxu0 0
    %1715 = vmatprep.subr.bf16.mxu0 0
    %1716 = vmatpush2.bf16.msra.mxu0 0
    %1717 = vmatprep.subr.bf16.mxu0 0
    %1718 = vmatpush2.bf16.msra.mxu0 0
    %1719 = vmatprep.subr.bf16.mxu0 0
    %1720 = vmatpush2.bf16.msra.mxu0 0
    %1721 = vmatprep.mubr.bf16.mxu0 0
    %1722 = vmatmul.mubr.bf16.gmra.mxu0 %v1687
    %v1723 = vpop.f32.mrf.mxu0
    %v1724 = vadd.f32 %v1672, %v1723
    %v1725 = vpop.f32.mrf.mxu0
    %v1726 = vpop.f32.mrf.mxu0
    %v1727 = vadd.f32 %v1672, %v1726
    %v1728 = vpop.f32.mrf.mxu0
    %1729 = vdwg.mxu0
    %v1730 = vmul.f32 %v1724, 0.5
    %v1731 = vmul.f32 %v1727, 0.5
    %v1732 = vmul.f32 %v1724, %v1724
    %v1733 = vmul.f32 %v1727, %v1727
    %v1734 = vmul.f32 %v1732, %v1724
    %v1735 = vmul.f32 %v1733, %v1727
    %v1736 = vmul.f32 %v1734, 0.044715
    %v1737 = vmul.f32 %v1735, 0.044715
    %v1738 = vadd.f32 %v1724, %v1736
    %v1739 = vadd.f32 %v1727, %v1737
    %v1740 = vmul.f32 %v1738, 0.7978846
    %v1741 = vmul.f32 %v1739, 0.7978846
    %v1742 = vtanh.pop %v1740
    %v1743 = vtanh.pop %v1741
    %v1744 = vadd.f32 %v1742, 1.0
    %v1745 = vadd.f32 %v1743, 1.0
    %v1746 = vmul.f32 %v1730, %v1744
    %v1747 = vmul.f32 %v1731, %v1745
    %v1748 = vpack.c.bf16 %v1747, %v1746
    %v1749 = vld [vmem:[%s6] sm:$0xf]
    %v1750 = vld [vmem:[%s6 + $0x4] sm:$0xf]
    %v1751 = vld [vmem:[%s6 + $0x8] sm:$0xf]
    %v1752 = vld [vmem:[%s6 + $0xc] sm:$0xf]
    %v1753 = vld [vmem:[%s6 + $0x10] sm:$0xf]
    %v1754 = vld [vmem:[%s6 + $0x14] sm:$0xf]
    %v1755 = vld [vmem:[%s6 + $0x18] sm:$0xf]
    %v1756 = vld [vmem:[%s6 + $0x1c] sm:$0xf]
    %v1757 = vld [vmem:[%s6 + $0x20] sm:$0xf]
    %v1758 = vld [vmem:[%s6 + $0x24] sm:$0xf]
    %v1759 = vld [vmem:[%s6 + $0x28] sm:$0xf]
    %v1760 = vld [vmem:[%s6 + $0x2c] sm:$0xf]
    %v1761 = vld [vmem:[%s6 + $0x30] sm:$0xf]
    %v1762 = vld [vmem:[%s6 + $0x34] sm:$0xf]
    %v1763 = vld [vmem:[%s6 + $0x38] sm:$0xf]
    %v1764 = vld [vmem:[%s6 + $0x3c] sm:$0xf]
    %v1781 = vunpack.c.l.b16 %v1749
    %v1782 = vunpack.c.l.b16 %v1750
    %v1783 = vunpack.c.l.b16 %v1751
    %v1784 = vunpack.c.l.b16 %v1752
    %v1785 = vunpack.c.l.b16 %v1753
    %v1786 = vunpack.c.l.b16 %v1754
    %v1787 = vunpack.c.l.b16 %v1755
    %v1788 = vunpack.c.l.b16 %v1756
    %v1789 = vunpack.c.l.b16 %v1757
    %v1790 = vunpack.c.l.b16 %v1758
    %v1791 = vunpack.c.l.b16 %v1759
    %v1792 = vunpack.c.l.b16 %v1760
    %v1793 = vunpack.c.l.b16 %v1761
    %v1794 = vunpack.c.l.b16 %v1762
    %v1795 = vunpack.c.l.b16 %v1763
    %v1796 = vunpack.c.l.b16 %v1764
    %v1797 = vpack.c.b16 %v1782, %v1781
    %v1798 = vpack.c.b16 %v1784, %v1783
    %v1799 = vpack.c.b16 %v1786, %v1785
    %v1800 = vpack.c.b16 %v1788, %v1787
    %v1801 = vpack.c.b16 %v1790, %v1789
    %v1802 = vpack.c.b16 %v1792, %v1791
    %v1803 = vpack.c.b16 %v1794, %v1793
    %v1804 = vpack.c.b16 %v1796, %v1795
    %1813 = vmatprep.subr.bf16.mxu0 0
    %1814 = vmatpush1.bf16.msra.mxu0 %v1804
    %1815 = vmatprep.subr.bf16.mxu0 0
    %1816 = vmatpush1.bf16.msra.mxu0 %v1803
    %1817 = vmatprep.subr.bf16.mxu0 0
    %1818 = vmatpush1.bf16.msra.mxu0 %v1802
    %1819 = vmatprep.subr.bf16.mxu0 0
    %1820 = vmatpush1.bf16.msra.mxu0 %v1801
    %1821 = vmatprep.subr.bf16.mxu0 0
    %1822 = vmatpush1.bf16.msra.mxu0 %v1800
    %1823 = vmatprep.subr.bf16.mxu0 0
    %1824 = vmatpush1.bf16.msra.mxu0 %v1799
    %1825 = vmatprep.subr.bf16.mxu0 0
    %1826 = vmatpush1.bf16.msra.mxu0 %v1798
    %1827 = vmatprep.subr.bf16.mxu0 0
    %1828 = vmatpush1.bf16.msra.mxu0 %v1797
    %1829 = vmatprep.subr.bf16.mxu0 0
    %1830 = vmatpush2.bf16.msra.mxu0 0
    %1831 = vmatprep.subr.bf16.mxu0 0
    %1832 = vmatpush2.bf16.msra.mxu0 0
    %1833 = vmatprep.subr.bf16.mxu0 0
    %1834 = vmatpush2.bf16.msra.mxu0 0
    %1835 = vmatprep.subr.bf16.mxu0 0
    %1836 = vmatpush2.bf16.msra.mxu0 0
    %1837 = vmatprep.subr.bf16.mxu0 0
    %1838 = vmatpush2.bf16.msra.mxu0 0
    %1839 = vmatprep.subr.bf16.mxu0 0
    %1840 = vmatpush2.bf16.msra.mxu0 0
    %1841 = vmatprep.subr.bf16.mxu0 0
    %1842 = vmatpush2.bf16.msra.mxu0 0
    %1843 = vmatprep.subr.bf16.mxu0 0
    %1844 = vmatpush2.bf16.msra.mxu0 0
    %1845 = vmatprep.mubr.bf16.mxu0 0
    %1846 = vmatmul.mubr.bf16.gmra.mxu0 %v1748
    %v1847 = vpop.f32.mrf.mxu0
    %v1848 = vadd.f32 0.0, %v1847
    %v1849 = vpop.f32.mrf.mxu0
    %v1850 = vpop.f32.mrf.mxu0
    %v1851 = vadd.f32 0.0, %v1850
    %v1852 = vpop.f32.mrf.mxu0
    %1853 = vdwg.mxu0
    %v1854 = vadd.f32 %v1613, %v1848
    %v1855 = vadd.f32 %v1614, %v1851
    %s1856 = scalar_lea.vmem %s4, 5
    %v1857 = vld [vmem:[%s1856] sm:$0x1]
    %v1859 = vlaneseq
    %v1860 = vshrl.u32 %v1859, 7
    %v1861 = vsub.s32 0, %v1860
    %v1862 = vrot.slane %v1857, %v1861
    %v1864 = vadd.f32 %v1854, %v1862
    %v1865 = vadd.f32 %v1855, %v1862
    %s1866 = scalar_lea.vmem %s4, 7
    %v1867 = vld [vmem:[%s1866] sm:$0x1]
    %s1868 = scalar_lea.vmem %s4, 8
    %v1869 = vld [vmem:[%s1868] sm:$0x1]
    %v1870 = vsel %vm43, %v1864, 0.0
    %1871 = vadd.xlane.f32.xlu0 %v1870
    %v1872 = vpop.xlane.xlu0 %1871
    %v1873 = vsel %vm43, %v1865, 0.0
    %1874 = vadd.xlane.f32.xlu0 %v1873
    %v1875 = vpop.xlane.xlu0 %1874
    %v1876 = vmul.f32 %v1872, %v50
    %v1877 = vmul.f32 %v1875, %v50
    %v1878 = vsub.f32 %v1864, %v1876
    %v1879 = vsub.f32 %v1865, %v1877
    %v1880 = vmul.f32 %v1878, %v1878
    %v1881 = vmul.f32 %v1879, %v1879
    %v1882 = vsel %vm43, %v1880, 0.0
    %1883 = vadd.xlane.f32.xlu0 %v1882
    %v1884 = vpop.xlane.xlu0 %1883
    %v1885 = vsel %vm43, %v1881, 0.0
    %1886 = vadd.xlane.f32.xlu0 %v1885
    %v1887 = vpop.xlane.xlu0 %1886
    %v1888 = vmul.f32 %v1884, %v50
    %v1889 = vmul.f32 %v1887, %v50
    %v1890 = vadd.f32 %v1888, 1e-05
    %v1891 = vadd.f32 %v1889, 1e-05
    %v1892 = vrsqrt.pop %v1890
    %v1893 = vrsqrt.pop %v1891
    %v1894 = vmul.f32 %v1878, %v1892
    %v1895 = vmul.f32 %v1879, %v1893
    %v1897 = vlaneseq
    %v1898 = vshrl.u32 %v1897, 7
    %v1899 = vsub.s32 0, %v1898
    %v1900 = vrot.slane %v1867, %v1899
    %v1902 = vmul.f32 %v1894, %v1900
    %v1903 = vmul.f32 %v1895, %v1900
    %v1905 = vlaneseq
    %v1906 = vshrl.u32 %v1905, 7
    %v1907 = vsub.s32 0, %v1906
    %v1908 = vrot.slane %v1869, %v1907
    %v1910 = vadd.f32 %v1902, %v1908
    %v1911 = vadd.f32 %v1903, %v1908
    %v1912 = vpack.c.bf16 %v1911, %v1910
    %s1913 = scalar_lea.vmem %s2, 256
    %v1914 = vld [vmem:[%s1913] sm:$0xf]
    %v1915 = vld [vmem:[%s1913 + $0x4] sm:$0xf]
    %v1916 = vld [vmem:[%s1913 + $0x8] sm:$0xf]
    %v1917 = vld [vmem:[%s1913 + $0xc] sm:$0xf]
    %s1918 = scalar_lea.vmem %s3, 12
    %v1919 = vld [vmem:[%s1918] sm:$0x1]
    %v1921 = vlaneseq
    %v1922 = vshrl.u32 %v1921, 7
    %v1923 = vsub.s32 0, %v1922
    %v1924 = vrot.slane %v1919, %v1923
    %v1930 = vunpack.c.l.b16 %v1914
    %v1931 = vunpack.c.l.b16 %v1915
    %v1932 = vunpack.c.l.b16 %v1916
    %v1933 = vunpack.c.l.b16 %v1917
    %v1934 = vpack.c.b16 %v1931, %v1930
    %v1935 = vpack.c.b16 %v1933, %v1932
    %v1939 = vsel %vm43, %v1912, 0
    %1941 = vmatprep.subr.bf16.mxu0 0
    %1942 = vmatpush1.bf16.msra.mxu0 0
    %1943 = vmatprep.subr.bf16.mxu0 0
    %1944 = vmatpush1.bf16.msra.mxu0 0
    %1945 = vmatprep.subr.bf16.mxu0 0
    %1946 = vmatpush1.bf16.msra.mxu0 0
    %1947 = vmatprep.subr.bf16.mxu0 0
    %1948 = vmatpush1.bf16.msra.mxu0 0
    %1949 = vmatprep.subr.bf16.mxu0 0
    %1950 = vmatpush1.bf16.msra.mxu0 0
    %1951 = vmatprep.subr.bf16.mxu0 0
    %1952 = vmatpush1.bf16.msra.mxu0 0
    %1953 = vmatprep.subr.bf16.mxu0 0
    %1954 = vmatpush1.bf16.msra.mxu0 %v1935
    %1955 = vmatprep.subr.bf16.mxu0 0
    %1956 = vmatpush1.bf16.msra.mxu0 %v1934
    %1957 = vmatprep.subr.bf16.mxu0 0
    %1958 = vmatpush2.bf16.msra.mxu0 0
    %1959 = vmatprep.subr.bf16.mxu0 0
    %1960 = vmatpush2.bf16.msra.mxu0 0
    %1961 = vmatprep.subr.bf16.mxu0 0
    %1962 = vmatpush2.bf16.msra.mxu0 0
    %1963 = vmatprep.subr.bf16.mxu0 0
    %1964 = vmatpush2.bf16.msra.mxu0 0
    %1965 = vmatprep.subr.bf16.mxu0 0
    %1966 = vmatpush2.bf16.msra.mxu0 0
    %1967 = vmatprep.subr.bf16.mxu0 0
    %1968 = vmatpush2.bf16.msra.mxu0 0
    %1969 = vmatprep.subr.bf16.mxu0 0
    %1970 = vmatpush2.bf16.msra.mxu0 0
    %1971 = vmatprep.subr.bf16.mxu0 0
    %1972 = vmatpush2.bf16.msra.mxu0 0
    %1973 = vmatprep.mubr.bf16.mxu0 0
    %1974 = vmatmul.mubr.bf16.gmra.mxu0 %v1939
    %v1975 = vpop.f32.mrf.mxu0
    %v1976 = vadd.f32 %v1924, %v1975
    %v1977 = vpop.f32.mrf.mxu0
    %v1978 = vpop.f32.mrf.mxu0
    %v1979 = vadd.f32 %v1924, %v1978
    %v1980 = vpop.f32.mrf.mxu0
    %1981 = vdwg.mxu0
    %v1982 = vpack.c.bf16 %v1979, %v1976
    %s1983 = scalar_lea.vmem %s2, 272
    %v1984 = vld [vmem:[%s1983] sm:$0xf]
    %v1985 = vld [vmem:[%s1983 + $0x4] sm:$0xf]
    %v1986 = vld [vmem:[%s1983 + $0x8] sm:$0xf]
    %v1987 = vld [vmem:[%s1983 + $0xc] sm:$0xf]
    %s1988 = scalar_lea.vmem %s3, 13
    %v1989 = vld [vmem:[%s1988] sm:$0x1]
    %v1991 = vlaneseq
    %v1992 = vshrl.u32 %v1991, 7
    %v1993 = vsub.s32 0, %v1992
    %v1994 = vrot.slane %v1989, %v1993
    %v2000 = vunpack.c.l.b16 %v1984
    %v2001 = vunpack.c.l.b16 %v1985
    %v2002 = vunpack.c.l.b16 %v1986
    %v2003 = vunpack.c.l.b16 %v1987
    %v2004 = vpack.c.b16 %v2001, %v2000
    %v2005 = vpack.c.b16 %v2003, %v2002
    %2008 = vmatprep.subr.bf16.mxu0 0
    %2009 = vmatpush1.bf16.msra.mxu0 0
    %2010 = vmatprep.subr.bf16.mxu0 0
    %2011 = vmatpush1.bf16.msra.mxu0 0
    %2012 = vmatprep.subr.bf16.mxu0 0
    %2013 = vmatpush1.bf16.msra.mxu0 0
    %2014 = vmatprep.subr.bf16.mxu0 0
    %2015 = vmatpush1.bf16.msra.mxu0 0
    %2016 = vmatprep.subr.bf16.mxu0 0
    %2017 = vmatpush1.bf16.msra.mxu0 0
    %2018 = vmatprep.subr.bf16.mxu0 0
    %2019 = vmatpush1.bf16.msra.mxu0 0
    %2020 = vmatprep.subr.bf16.mxu0 0
    %2021 = vmatpush1.bf16.msra.mxu0 %v2005
    %2022 = vmatprep.subr.bf16.mxu0 0
    %2023 = vmatpush1.bf16.msra.mxu0 %v2004
    %2024 = vmatprep.subr.bf16.mxu0 0
    %2025 = vmatpush2.bf16.msra.mxu0 0
    %2026 = vmatprep.subr.bf16.mxu0 0
    %2027 = vmatpush2.bf16.msra.mxu0 0
    %2028 = vmatprep.subr.bf16.mxu0 0
    %2029 = vmatpush2.bf16.msra.mxu0 0
    %2030 = vmatprep.subr.bf16.mxu0 0
    %2031 = vmatpush2.bf16.msra.mxu0 0
    %2032 = vmatprep.subr.bf16.mxu0 0
    %2033 = vmatpush2.bf16.msra.mxu0 0
    %2034 = vmatprep.subr.bf16.mxu0 0
    %2035 = vmatpush2.bf16.msra.mxu0 0
    %2036 = vmatprep.subr.bf16.mxu0 0
    %2037 = vmatpush2.bf16.msra.mxu0 0
    %2038 = vmatprep.subr.bf16.mxu0 0
    %2039 = vmatpush2.bf16.msra.mxu0 0
    %2040 = vmatprep.mubr.bf16.mxu0 0
    %2041 = vmatmul.mubr.bf16.gmra.mxu0 %v1939
    %v2042 = vpop.f32.mrf.mxu0
    %v2043 = vadd.f32 %v1994, %v2042
    %v2044 = vpop.f32.mrf.mxu0
    %v2045 = vpop.f32.mrf.mxu0
    %v2046 = vadd.f32 %v1994, %v2045
    %v2047 = vpop.f32.mrf.mxu0
    %2048 = vdwg.mxu0
    %v2049 = vpack.c.bf16 %v2046, %v2043
    %s2050 = scalar_lea.vmem %s2, 288
    %v2051 = vld [vmem:[%s2050] sm:$0xf]
    %v2052 = vld [vmem:[%s2050 + $0x4] sm:$0xf]
    %v2053 = vld [vmem:[%s2050 + $0x8] sm:$0xf]
    %v2054 = vld [vmem:[%s2050 + $0xc] sm:$0xf]
    %s2055 = scalar_lea.vmem %s3, 14
    %v2056 = vld [vmem:[%s2055] sm:$0x1]
    %v2058 = vlaneseq
    %v2059 = vshrl.u32 %v2058, 7
    %v2060 = vsub.s32 0, %v2059
    %v2061 = vrot.slane %v2056, %v2060
    %v2067 = vunpack.c.l.b16 %v2051
    %v2068 = vunpack.c.l.b16 %v2052
    %v2069 = vunpack.c.l.b16 %v2053
    %v2070 = vunpack.c.l.b16 %v2054
    %v2071 = vpack.c.b16 %v2068, %v2067
    %v2072 = vpack.c.b16 %v2070, %v2069
    %2075 = vmatprep.subr.bf16.mxu0 0
    %2076 = vmatpush1.bf16.msra.mxu0 0
    %2077 = vmatprep.subr.bf16.mxu0 0
    %2078 = vmatpush1.bf16.msra.mxu0 0
    %2079 = vmatprep.subr.bf16.mxu0 0
    %2080 = vmatpush1.bf16.msra.mxu0 0
    %2081 = vmatprep.subr.bf16.mxu0 0
    %2082 = vmatpush1.bf16.msra.mxu0 0
    %2083 = vmatprep.subr.bf16.mxu0 0
    %2084 = vmatpush1.bf16.msra.mxu0 0
    %2085 = vmatprep.subr.bf16.mxu0 0
    %2086 = vmatpush1.bf16.msra.mxu0 0
    %2087 = vmatprep.subr.bf16.mxu0 0
    %2088 = vmatpush1.bf16.msra.mxu0 %v2072
    %2089 = vmatprep.subr.bf16.mxu0 0
    %2090 = vmatpush1.bf16.msra.mxu0 %v2071
    %2091 = vmatprep.subr.bf16.mxu0 0
    %2092 = vmatpush2.bf16.msra.mxu0 0
    %2093 = vmatprep.subr.bf16.mxu0 0
    %2094 = vmatpush2.bf16.msra.mxu0 0
    %2095 = vmatprep.subr.bf16.mxu0 0
    %2096 = vmatpush2.bf16.msra.mxu0 0
    %2097 = vmatprep.subr.bf16.mxu0 0
    %2098 = vmatpush2.bf16.msra.mxu0 0
    %2099 = vmatprep.subr.bf16.mxu0 0
    %2100 = vmatpush2.bf16.msra.mxu0 0
    %2101 = vmatprep.subr.bf16.mxu0 0
    %2102 = vmatpush2.bf16.msra.mxu0 0
    %2103 = vmatprep.subr.bf16.mxu0 0
    %2104 = vmatpush2.bf16.msra.mxu0 0
    %2105 = vmatprep.subr.bf16.mxu0 0
    %2106 = vmatpush2.bf16.msra.mxu0 0
    %2107 = vmatprep.mubr.bf16.mxu0 0
    %2108 = vmatmul.mubr.bf16.gmra.mxu0 %v1939
    %v2109 = vpop.f32.mrf.mxu0
    %v2110 = vadd.f32 %v2061, %v2109
    %v2111 = vpop.f32.mrf.mxu0
    %v2112 = vpop.f32.mrf.mxu0
    %v2113 = vadd.f32 %v2061, %v2112
    %v2114 = vpop.f32.mrf.mxu0
    %2115 = vdwg.mxu0
    %v2116 = vpack.c.bf16 %v2113, %v2110
    %v2118 = vsel %vm290, %v1982, 0
    %v2121 = vsel %vm290, %v2049, 0
    %2123 = vmatprep.subr.bf16.mxu0 0
    %2124 = vmatpush1.bf16.xpose.msra.mxu0 0
    %2125 = vmatprep.subr.bf16.mxu0 0
    %2126 = vmatpush1.bf16.xpose.msra.mxu0 0
    %2127 = vmatprep.subr.bf16.mxu0 0
    %2128 = vmatpush1.bf16.xpose.msra.mxu0 0
    %2129 = vmatprep.subr.bf16.mxu0 0
    %2130 = vmatpush1.bf16.xpose.msra.mxu0 0
    %2131 = vmatprep.subr.bf16.mxu0 0
    %2132 = vmatpush1.bf16.xpose.msra.mxu0 0
    %2133 = vmatprep.subr.bf16.mxu0 0
    %2134 = vmatpush1.bf16.xpose.msra.mxu0 0
    %2135 = vmatprep.subr.bf16.mxu0 0
    %2136 = vmatpush1.bf16.xpose.msra.mxu0 0
    %2137 = vmatprep.subr.bf16.mxu0 0
    %2138 = vmatpush1.bf16.xpose.msra.mxu0 %v2121
    %2139 = vmatprep.subr.bf16.mxu0 0
    %2140 = vmatpush2.bf16.xpose.msra.mxu0 0
    %2141 = vmatprep.subr.bf16.mxu0 0
    %2142 = vmatpush2.bf16.xpose.msra.mxu0 0
    %2143 = vmatprep.subr.bf16.mxu0 0
    %2144 = vmatpush2.bf16.xpose.msra.mxu0 0
    %2145 = vmatprep.subr.bf16.mxu0 0
    %2146 = vmatpush2.bf16.xpose.msra.mxu0 0
    %2147 = vmatprep.subr.bf16.mxu0 0
    %2148 = vmatpush2.bf16.xpose.msra.mxu0 0
    %2149 = vmatprep.subr.bf16.mxu0 0
    %2150 = vmatpush2.bf16.xpose.msra.mxu0 0
    %2151 = vmatprep.subr.bf16.mxu0 0
    %2152 = vmatpush2.bf16.xpose.msra.mxu0 0
    %2153 = vmatprep.subr.bf16.mxu0 0
    %2154 = vmatpush2.bf16.xpose.msra.mxu0 0
    %2155 = vmatprep.mubr.bf16.mxu0 0
    %2156 = vmatmul.mubr.bf16.gmra.mxu0 %v2118
    %v2157 = vpop.f32.mrf.mxu0
    %v2158 = vadd.f32 0.0, %v2157
    %v2159 = vpop.f32.mrf.mxu0
    %v2160 = vpop.f32.mrf.mxu0
    %v2161 = vadd.f32 0.0, %v2160
    %v2162 = vpop.f32.mrf.mxu0
    %2163 = vdwg.mxu0
    %v2164 = vmul.f32 %v2158, 0.35355338
    %v2165 = vmul.f32 %v2161, 0.35355338
    %v2166 = vadd.f32 %v2164, %v38
    %v2167 = vadd.f32 %v2165, %v39
    %v2168 = vmul.f32 %v2166, 1.442695
    %v2169 = vpow.pop %v2168
    %v2170 = vmul.f32 %v2167, 1.442695
    %v2171 = vpow.pop %v2170
    %v2172 = vsel %vm346, %v2169, 0.0
    %2173 = vadd.xlane.f32.xlu0 %v2172
    %v2174 = vpop.xlane.xlu0 %2173
    %v2175 = vsel %vm346, %v2171, 0.0
    %2176 = vadd.xlane.f32.xlu0 %v2175
    %v2177 = vpop.xlane.xlu0 %2176
    %v2178 = vrcp.pop %v2174
    %v2179 = vrcp.pop %v2177
    %v2180 = vmul.f32 %v2169, %v2178
    %v2181 = vmul.f32 %v2171, %v2179
    %2182 = vst.msk [vmem:[%s10] sm:$0xff] %vm346, %v2180
    %2183 = vst.msk [vmem:[%s10 + $0x8] sm:$0xff] %vm346, %v2181
    %v2184 = vpack.c.bf16 %v2181, %v2180
    %v2186 = vsel %vm346, %v2184, 0
    %2188 = vmatprep.subr.bf16.mxu0 0
    %2189 = vmatpush1.bf16.msra.mxu0 0
    %2190 = vmatprep.subr.bf16.mxu0 0
    %2191 = vmatpush1.bf16.msra.mxu0 0
    %2192 = vmatprep.subr.bf16.mxu0 0
    %2193 = vmatpush1.bf16.msra.mxu0 0
    %2194 = vmatprep.subr.bf16.mxu0 0
    %2195 = vmatpush1.bf16.msra.mxu0 0
    %2196 = vmatprep.subr.bf16.mxu0 0
    %2197 = vmatpush1.bf16.msra.mxu0 0
    %2198 = vmatprep.subr.bf16.mxu0 0
    %2199 = vmatpush1.bf16.msra.mxu0 0
    %2200 = vmatprep.subr.bf16.mxu0 0
    %2201 = vmatpush1.bf16.msra.mxu0 0
    %2202 = vmatprep.subr.bf16.mxu0 0
    %2203 = vmatpush1.bf16.msra.mxu0 %v2116
    %2204 = vmatprep.subr.bf16.mxu0 0
    %2205 = vmatpush2.bf16.msra.mxu0 0
    %2206 = vmatprep.subr.bf16.mxu0 0
    %2207 = vmatpush2.bf16.msra.mxu0 0
    %2208 = vmatprep.subr.bf16.mxu0 0
    %2209 = vmatpush2.bf16.msra.mxu0 0
    %2210 = vmatprep.subr.bf16.mxu0 0
    %2211 = vmatpush2.bf16.msra.mxu0 0
    %2212 = vmatprep.subr.bf16.mxu0 0
    %2213 = vmatpush2.bf16.msra.mxu0 0
    %2214 = vmatprep.subr.bf16.mxu0 0
    %2215 = vmatpush2.bf16.msra.mxu0 0
    %2216 = vmatprep.subr.bf16.mxu0 0
    %2217 = vmatpush2.bf16.msra.mxu0 0
    %2218 = vmatprep.subr.bf16.mxu0 0
    %2219 = vmatpush2.bf16.msra.mxu0 0
    %2220 = vmatprep.mubr.bf16.mxu0 0
    %2221 = vmatmul.mubr.bf16.gmra.mxu0 %v2186
    %v2222 = vpop.f32.mrf.mxu0
    %v2223 = vadd.f32 0.0, %v2222
    %v2224 = vpop.f32.mrf.mxu0
    %v2225 = vpop.f32.mrf.mxu0
    %v2226 = vadd.f32 0.0, %v2225
    %v2227 = vpop.f32.mrf.mxu0
    %2228 = vdwg.mxu0
    %v2229 = vpack.c.bf16 %v2226, %v2223
    %s2230 = scalar_lea.vmem %s2, 304
    %v2231 = vld [vmem:[%s2230] sm:$0xf]
    %v2232 = vld [vmem:[%s2230 + $0x4] sm:$0xf]
    %v2233 = vld [vmem:[%s2230 + $0x8] sm:$0xf]
    %v2234 = vld [vmem:[%s2230 + $0xc] sm:$0xf]
    %s2235 = scalar_lea.vmem %s2, 320
    %v2236 = vld [vmem:[%s2235] sm:$0xf]
    %v2237 = vld [vmem:[%s2235 + $0x4] sm:$0xf]
    %v2238 = vld [vmem:[%s2235 + $0x8] sm:$0xf]
    %v2239 = vld [vmem:[%s2235 + $0xc] sm:$0xf]
    %s2240 = scalar_lea.vmem %s3, 15
    %v2241 = vld [vmem:[%s2240] sm:$0x1]
    %v2243 = vlaneseq
    %v2244 = vshrl.u32 %v2243, 7
    %v2245 = vsub.s32 0, %v2244
    %v2246 = vrot.slane %v2241, %v2245
    %v2252 = vunpack.c.l.b16 %v2236
    %v2253 = vunpack.c.l.b16 %v2237
    %v2254 = vunpack.c.l.b16 %v2238
    %v2255 = vunpack.c.l.b16 %v2239
    %v2256 = vpack.c.b16 %v2253, %v2252
    %v2257 = vpack.c.b16 %v2255, %v2254
    %2260 = vmatprep.subr.bf16.mxu0 0
    %2261 = vmatpush1.bf16.msra.mxu0 0
    %2262 = vmatprep.subr.bf16.mxu0 0
    %2263 = vmatpush1.bf16.msra.mxu0 0
    %2264 = vmatprep.subr.bf16.mxu0 0
    %2265 = vmatpush1.bf16.msra.mxu0 0
    %2266 = vmatprep.subr.bf16.mxu0 0
    %2267 = vmatpush1.bf16.msra.mxu0 0
    %2268 = vmatprep.subr.bf16.mxu0 0
    %2269 = vmatpush1.bf16.msra.mxu0 0
    %2270 = vmatprep.subr.bf16.mxu0 0
    %2271 = vmatpush1.bf16.msra.mxu0 0
    %2272 = vmatprep.subr.bf16.mxu0 0
    %2273 = vmatpush1.bf16.msra.mxu0 %v2257
    %2274 = vmatprep.subr.bf16.mxu0 0
    %2275 = vmatpush1.bf16.msra.mxu0 %v2256
    %2276 = vmatprep.subr.bf16.mxu0 0
    %2277 = vmatpush2.bf16.msra.mxu0 0
    %2278 = vmatprep.subr.bf16.mxu0 0
    %2279 = vmatpush2.bf16.msra.mxu0 0
    %2280 = vmatprep.subr.bf16.mxu0 0
    %2281 = vmatpush2.bf16.msra.mxu0 0
    %2282 = vmatprep.subr.bf16.mxu0 0
    %2283 = vmatpush2.bf16.msra.mxu0 0
    %2284 = vmatprep.subr.bf16.mxu0 0
    %2285 = vmatpush2.bf16.msra.mxu0 0
    %2286 = vmatprep.subr.bf16.mxu0 0
    %2287 = vmatpush2.bf16.msra.mxu0 0
    %2288 = vmatprep.subr.bf16.mxu0 0
    %2289 = vmatpush2.bf16.msra.mxu0 0
    %2290 = vmatprep.subr.bf16.mxu0 0
    %2291 = vmatpush2.bf16.msra.mxu0 0
    %2292 = vmatprep.mubr.bf16.mxu0 0
    %2293 = vmatmul.mubr.bf16.gmra.mxu0 %v1939
    %v2294 = vpop.f32.mrf.mxu0
    %v2295 = vadd.f32 %v2246, %v2294
    %v2296 = vpop.f32.mrf.mxu0
    %v2297 = vpop.f32.mrf.mxu0
    %v2298 = vadd.f32 %v2246, %v2297
    %v2299 = vpop.f32.mrf.mxu0
    %2300 = vdwg.mxu0
    %v2301 = vpack.c.bf16 %v2298, %v2295
    %s2302 = scalar_lea.vmem %s2, 336
    %v2303 = vld [vmem:[%s2302] sm:$0xf]
    %v2304 = vld [vmem:[%s2302 + $0x4] sm:$0xf]
    %v2305 = vld [vmem:[%s2302 + $0x8] sm:$0xf]
    %v2306 = vld [vmem:[%s2302 + $0xc] sm:$0xf]
    %s2307 = scalar_lea.vmem %s3, 16
    %v2308 = vld [vmem:[%s2307] sm:$0x1]
    %v2310 = vlaneseq
    %v2311 = vshrl.u32 %v2310, 7
    %v2312 = vsub.s32 0, %v2311
    %v2313 = vrot.slane %v2308, %v2312
    %v2319 = vunpack.c.l.b16 %v2303
    %v2320 = vunpack.c.l.b16 %v2304
    %v2321 = vunpack.c.l.b16 %v2305
    %v2322 = vunpack.c.l.b16 %v2306
    %v2323 = vpack.c.b16 %v2320, %v2319
    %v2324 = vpack.c.b16 %v2322, %v2321
    %2327 = vmatprep.subr.bf16.mxu0 0
    %2328 = vmatpush1.bf16.msra.mxu0 0
    %2329 = vmatprep.subr.bf16.mxu0 0
    %2330 = vmatpush1.bf16.msra.mxu0 0
    %2331 = vmatprep.subr.bf16.mxu0 0
    %2332 = vmatpush1.bf16.msra.mxu0 0
    %2333 = vmatprep.subr.bf16.mxu0 0
    %2334 = vmatpush1.bf16.msra.mxu0 0
    %2335 = vmatprep.subr.bf16.mxu0 0
    %2336 = vmatpush1.bf16.msra.mxu0 0
    %2337 = vmatprep.subr.bf16.mxu0 0
    %2338 = vmatpush1.bf16.msra.mxu0 0
    %2339 = vmatprep.subr.bf16.mxu0 0
    %2340 = vmatpush1.bf16.msra.mxu0 %v2324
    %2341 = vmatprep.subr.bf16.mxu0 0
    %2342 = vmatpush1.bf16.msra.mxu0 %v2323
    %2343 = vmatprep.subr.bf16.mxu0 0
    %2344 = vmatpush2.bf16.msra.mxu0 0
    %2345 = vmatprep.subr.bf16.mxu0 0
    %2346 = vmatpush2.bf16.msra.mxu0 0
    %2347 = vmatprep.subr.bf16.mxu0 0
    %2348 = vmatpush2.bf16.msra.mxu0 0
    %2349 = vmatprep.subr.bf16.mxu0 0
    %2350 = vmatpush2.bf16.msra.mxu0 0
    %2351 = vmatprep.subr.bf16.mxu0 0
    %2352 = vmatpush2.bf16.msra.mxu0 0
    %2353 = vmatprep.subr.bf16.mxu0 0
    %2354 = vmatpush2.bf16.msra.mxu0 0
    %2355 = vmatprep.subr.bf16.mxu0 0
    %2356 = vmatpush2.bf16.msra.mxu0 0
    %2357 = vmatprep.subr.bf16.mxu0 0
    %2358 = vmatpush2.bf16.msra.mxu0 0
    %2359 = vmatprep.mubr.bf16.mxu0 0
    %2360 = vmatmul.mubr.bf16.gmra.mxu0 %v1939
    %v2361 = vpop.f32.mrf.mxu0
    %v2362 = vadd.f32 %v2313, %v2361
    %v2363 = vpop.f32.mrf.mxu0
    %v2364 = vpop.f32.mrf.mxu0
    %v2365 = vadd.f32 %v2313, %v2364
    %v2366 = vpop.f32.mrf.mxu0
    %2367 = vdwg.mxu0
    %v2368 = vpack.c.bf16 %v2365, %v2362
    %s2369 = scalar_lea.vmem %s2, 352
    %v2370 = vld [vmem:[%s2369] sm:$0xf]
    %v2371 = vld [vmem:[%s2369 + $0x4] sm:$0xf]
    %v2372 = vld [vmem:[%s2369 + $0x8] sm:$0xf]
    %v2373 = vld [vmem:[%s2369 + $0xc] sm:$0xf]
    %s2374 = scalar_lea.vmem %s3, 17
    %v2375 = vld [vmem:[%s2374] sm:$0x1]
    %v2377 = vlaneseq
    %v2378 = vshrl.u32 %v2377, 7
    %v2379 = vsub.s32 0, %v2378
    %v2380 = vrot.slane %v2375, %v2379
    %v2386 = vunpack.c.l.b16 %v2370
    %v2387 = vunpack.c.l.b16 %v2371
    %v2388 = vunpack.c.l.b16 %v2372
    %v2389 = vunpack.c.l.b16 %v2373
    %v2390 = vpack.c.b16 %v2387, %v2386
    %v2391 = vpack.c.b16 %v2389, %v2388
    %2394 = vmatprep.subr.bf16.mxu0 0
    %2395 = vmatpush1.bf16.msra.mxu0 0
    %2396 = vmatprep.subr.bf16.mxu0 0
    %2397 = vmatpush1.bf16.msra.mxu0 0
    %2398 = vmatprep.subr.bf16.mxu0 0
    %2399 = vmatpush1.bf16.msra.mxu0 0
    %2400 = vmatprep.subr.bf16.mxu0 0
    %2401 = vmatpush1.bf16.msra.mxu0 0
    %2402 = vmatprep.subr.bf16.mxu0 0
    %2403 = vmatpush1.bf16.msra.mxu0 0
    %2404 = vmatprep.subr.bf16.mxu0 0
    %2405 = vmatpush1.bf16.msra.mxu0 0
    %2406 = vmatprep.subr.bf16.mxu0 0
    %2407 = vmatpush1.bf16.msra.mxu0 %v2391
    %2408 = vmatprep.subr.bf16.mxu0 0
    %2409 = vmatpush1.bf16.msra.mxu0 %v2390
    %2410 = vmatprep.subr.bf16.mxu0 0
    %2411 = vmatpush2.bf16.msra.mxu0 0
    %2412 = vmatprep.subr.bf16.mxu0 0
    %2413 = vmatpush2.bf16.msra.mxu0 0
    %2414 = vmatprep.subr.bf16.mxu0 0
    %2415 = vmatpush2.bf16.msra.mxu0 0
    %2416 = vmatprep.subr.bf16.mxu0 0
    %2417 = vmatpush2.bf16.msra.mxu0 0
    %2418 = vmatprep.subr.bf16.mxu0 0
    %2419 = vmatpush2.bf16.msra.mxu0 0
    %2420 = vmatprep.subr.bf16.mxu0 0
    %2421 = vmatpush2.bf16.msra.mxu0 0
    %2422 = vmatprep.subr.bf16.mxu0 0
    %2423 = vmatpush2.bf16.msra.mxu0 0
    %2424 = vmatprep.subr.bf16.mxu0 0
    %2425 = vmatpush2.bf16.msra.mxu0 0
    %2426 = vmatprep.mubr.bf16.mxu0 0
    %2427 = vmatmul.mubr.bf16.gmra.mxu0 %v1939
    %v2428 = vpop.f32.mrf.mxu0
    %v2429 = vadd.f32 %v2380, %v2428
    %v2430 = vpop.f32.mrf.mxu0
    %v2431 = vpop.f32.mrf.mxu0
    %v2432 = vadd.f32 %v2380, %v2431
    %v2433 = vpop.f32.mrf.mxu0
    %2434 = vdwg.mxu0
    %v2435 = vpack.c.bf16 %v2432, %v2429
    %v2437 = vsel %vm290, %v2301, 0
    %v2440 = vsel %vm290, %v2368, 0
    %2442 = vmatprep.subr.bf16.mxu0 0
    %2443 = vmatpush1.bf16.xpose.msra.mxu0 0
    %2444 = vmatprep.subr.bf16.mxu0 0
    %2445 = vmatpush1.bf16.xpose.msra.mxu0 0
    %2446 = vmatprep.subr.bf16.mxu0 0
    %2447 = vmatpush1.bf16.xpose.msra.mxu0 0
    %2448 = vmatprep.subr.bf16.mxu0 0
    %2449 = vmatpush1.bf16.xpose.msra.mxu0 0
    %2450 = vmatprep.subr.bf16.mxu0 0
    %2451 = vmatpush1.bf16.xpose.msra.mxu0 0
    %2452 = vmatprep.subr.bf16.mxu0 0
    %2453 = vmatpush1.bf16.xpose.msra.mxu0 0
    %2454 = vmatprep.subr.bf16.mxu0 0
    %2455 = vmatpush1.bf16.xpose.msra.mxu0 0
    %2456 = vmatprep.subr.bf16.mxu0 0
    %2457 = vmatpush1.bf16.xpose.msra.mxu0 %v2440
    %2458 = vmatprep.subr.bf16.mxu0 0
    %2459 = vmatpush2.bf16.xpose.msra.mxu0 0
    %2460 = vmatprep.subr.bf16.mxu0 0
    %2461 = vmatpush2.bf16.xpose.msra.mxu0 0
    %2462 = vmatprep.subr.bf16.mxu0 0
    %2463 = vmatpush2.bf16.xpose.msra.mxu0 0
    %2464 = vmatprep.subr.bf16.mxu0 0
    %2465 = vmatpush2.bf16.xpose.msra.mxu0 0
    %2466 = vmatprep.subr.bf16.mxu0 0
    %2467 = vmatpush2.bf16.xpose.msra.mxu0 0
    %2468 = vmatprep.subr.bf16.mxu0 0
    %2469 = vmatpush2.bf16.xpose.msra.mxu0 0
    %2470 = vmatprep.subr.bf16.mxu0 0
    %2471 = vmatpush2.bf16.xpose.msra.mxu0 0
    %2472 = vmatprep.subr.bf16.mxu0 0
    %2473 = vmatpush2.bf16.xpose.msra.mxu0 0
    %2474 = vmatprep.mubr.bf16.mxu0 0
    %2475 = vmatmul.mubr.bf16.gmra.mxu0 %v2437
    %v2476 = vpop.f32.mrf.mxu0
    %v2477 = vadd.f32 0.0, %v2476
    %v2478 = vpop.f32.mrf.mxu0
    %v2479 = vpop.f32.mrf.mxu0
    %v2480 = vadd.f32 0.0, %v2479
    %v2481 = vpop.f32.mrf.mxu0
    %2482 = vdwg.mxu0
    %v2483 = vmul.f32 %v2477, 0.35355338
    %v2484 = vmul.f32 %v2480, 0.35355338
    %v2485 = vadd.f32 %v2483, %v38
    %v2486 = vadd.f32 %v2484, %v39
    %v2487 = vmul.f32 %v2485, 1.442695
    %v2488 = vpow.pop %v2487
    %v2489 = vmul.f32 %v2486, 1.442695
    %v2490 = vpow.pop %v2489
    %v2491 = vsel %vm346, %v2488, 0.0
    %2492 = vadd.xlane.f32.xlu0 %v2491
    %v2493 = vpop.xlane.xlu0 %2492
    %v2494 = vsel %vm346, %v2490, 0.0
    %2495 = vadd.xlane.f32.xlu0 %v2494
    %v2496 = vpop.xlane.xlu0 %2495
    %v2497 = vrcp.pop %v2493
    %v2498 = vrcp.pop %v2496
    %v2499 = vmul.f32 %v2488, %v2497
    %v2500 = vmul.f32 %v2490, %v2498
    %v2501 = vpack.c.bf16 %v2500, %v2499
    %v2503 = vsel %vm346, %v2501, 0
    %2505 = vmatprep.subr.bf16.mxu0 0
    %2506 = vmatpush1.bf16.msra.mxu0 0
    %2507 = vmatprep.subr.bf16.mxu0 0
    %2508 = vmatpush1.bf16.msra.mxu0 0
    %2509 = vmatprep.subr.bf16.mxu0 0
    %2510 = vmatpush1.bf16.msra.mxu0 0
    %2511 = vmatprep.subr.bf16.mxu0 0
    %2512 = vmatpush1.bf16.msra.mxu0 0
    %2513 = vmatprep.subr.bf16.mxu0 0
    %2514 = vmatpush1.bf16.msra.mxu0 0
    %2515 = vmatprep.subr.bf16.mxu0 0
    %2516 = vmatpush1.bf16.msra.mxu0 0
    %2517 = vmatprep.subr.bf16.mxu0 0
    %2518 = vmatpush1.bf16.msra.mxu0 0
    %2519 = vmatprep.subr.bf16.mxu0 0
    %2520 = vmatpush1.bf16.msra.mxu0 %v2435
    %2521 = vmatprep.subr.bf16.mxu0 0
    %2522 = vmatpush2.bf16.msra.mxu0 0
    %2523 = vmatprep.subr.bf16.mxu0 0
    %2524 = vmatpush2.bf16.msra.mxu0 0
    %2525 = vmatprep.subr.bf16.mxu0 0
    %2526 = vmatpush2.bf16.msra.mxu0 0
    %2527 = vmatprep.subr.bf16.mxu0 0
    %2528 = vmatpush2.bf16.msra.mxu0 0
    %2529 = vmatprep.subr.bf16.mxu0 0
    %2530 = vmatpush2.bf16.msra.mxu0 0
    %2531 = vmatprep.subr.bf16.mxu0 0
    %2532 = vmatpush2.bf16.msra.mxu0 0
    %2533 = vmatprep.subr.bf16.mxu0 0
    %2534 = vmatpush2.bf16.msra.mxu0 0
    %2535 = vmatprep.subr.bf16.mxu0 0
    %2536 = vmatpush2.bf16.msra.mxu0 0
    %2537 = vmatprep.mubr.bf16.mxu0 0
    %2538 = vmatmul.mubr.bf16.gmra.mxu0 %v2503
    %v2539 = vpop.f32.mrf.mxu0
    %v2540 = vadd.f32 0.0, %v2539
    %v2541 = vpop.f32.mrf.mxu0
    %v2542 = vpop.f32.mrf.mxu0
    %v2543 = vadd.f32 0.0, %v2542
    %v2544 = vpop.f32.mrf.mxu0
    %2545 = vdwg.mxu0
    %v2546 = vpack.c.bf16 %v2543, %v2540
    %s2547 = scalar_lea.vmem %s2, 368
    %v2548 = vld [vmem:[%s2547] sm:$0xf]
    %v2549 = vld [vmem:[%s2547 + $0x4] sm:$0xf]
    %v2550 = vld [vmem:[%s2547 + $0x8] sm:$0xf]
    %v2551 = vld [vmem:[%s2547 + $0xc] sm:$0xf]
    %v2556 = vunpack.c.l.b16 %v2548
    %v2557 = vunpack.c.l.b16 %v2549
    %v2558 = vunpack.c.l.b16 %v2550
    %v2559 = vunpack.c.l.b16 %v2551
    %v2560 = vpack.c.b16 %v2557, %v2556
    %v2561 = vpack.c.b16 %v2559, %v2558
    %v2563 = vsel %vm290, %v2546, 0
    %v2566 = vsel %vm290, %v2560, 0
    %v2569 = vsel %vm290, %v2561, 0
    %2571 = vmatprep.subr.bf16.mxu0 0
    %2572 = vmatpush1.bf16.xpose.msra.mxu0 0
    %2573 = vmatprep.subr.bf16.mxu0 0
    %2574 = vmatpush1.bf16.xpose.msra.mxu0 0
    %2575 = vmatprep.subr.bf16.mxu0 0
    %2576 = vmatpush1.bf16.xpose.msra.mxu0 0
    %2577 = vmatprep.subr.bf16.mxu0 0
    %2578 = vmatpush1.bf16.xpose.msra.mxu0 0
    %2579 = vmatprep.subr.bf16.mxu0 0
    %2580 = vmatpush1.bf16.xpose.msra.mxu0 0
    %2581 = vmatprep.subr.bf16.mxu0 0
    %2582 = vmatpush1.bf16.xpose.msra.mxu0 0
    %2583 = vmatprep.subr.bf16.mxu0 0
    %2584 = vmatpush1.bf16.xpose.msra.mxu0 %v2569
    %2585 = vmatprep.subr.bf16.mxu0 0
    %2586 = vmatpush1.bf16.xpose.msra.mxu0 %v2566
    %2587 = vmatprep.subr.bf16.mxu0 0
    %2588 = vmatpush2.bf16.xpose.msra.mxu0 0
    %2589 = vmatprep.subr.bf16.mxu0 0
    %2590 = vmatpush2.bf16.xpose.msra.mxu0 0
    %2591 = vmatprep.subr.bf16.mxu0 0
    %2592 = vmatpush2.bf16.xpose.msra.mxu0 0
    %2593 = vmatprep.subr.bf16.mxu0 0
    %2594 = vmatpush2.bf16.xpose.msra.mxu0 0
    %2595 = vmatprep.subr.bf16.mxu0 0
    %2596 = vmatpush2.bf16.xpose.msra.mxu0 0
    %2597 = vmatprep.subr.bf16.mxu0 0
    %2598 = vmatpush2.bf16.xpose.msra.mxu0 0
    %2599 = vmatprep.subr.bf16.mxu0 0
    %2600 = vmatpush2.bf16.xpose.msra.mxu0 0
    %2601 = vmatprep.subr.bf16.mxu0 0
    %2602 = vmatpush2.bf16.xpose.msra.mxu0 0
    %2603 = vmatprep.mubr.bf16.mxu0 0
    %2604 = vmatmul.mubr.bf16.gmra.mxu0 %v2563
    %v2605 = vpop.f32.mrf.mxu0
    %v2606 = vadd.f32 0.0, %v2605
    %v2607 = vpop.f32.mrf.mxu0
    %v2608 = vpop.f32.mrf.mxu0
    %v2609 = vadd.f32 0.0, %v2608
    %v2610 = vpop.f32.mrf.mxu0
    %2611 = vdwg.mxu0
    %v2616 = vunpack.c.l.b16 %v2231
    %v2617 = vunpack.c.l.b16 %v2232
    %v2618 = vunpack.c.l.b16 %v2233
    %v2619 = vunpack.c.l.b16 %v2234
    %v2620 = vpack.c.b16 %v2617, %v2616
    %v2621 = vpack.c.b16 %v2619, %v2618
    %v2623 = vsel %vm290, %v2229, 0
    %v2626 = vsel %vm290, %v2620, 0
    %v2629 = vsel %vm290, %v2621, 0
    %2631 = vmatprep.subr.bf16.mxu0 0
    %2632 = vmatpush1.bf16.xpose.msra.mxu0 0
    %2633 = vmatprep.subr.bf16.mxu0 0
    %2634 = vmatpush1.bf16.xpose.msra.mxu0 0
    %2635 = vmatprep.subr.bf16.mxu0 0
    %2636 = vmatpush1.bf16.xpose.msra.mxu0 0
    %2637 = vmatprep.subr.bf16.mxu0 0
    %2638 = vmatpush1.bf16.xpose.msra.mxu0 0
    %2639 = vmatprep.subr.bf16.mxu0 0
    %2640 = vmatpush1.bf16.xpose.msra.mxu0 0
    %2641 = vmatprep.subr.bf16.mxu0 0
    %2642 = vmatpush1.bf16.xpose.msra.mxu0 0
    %2643 = vmatprep.subr.bf16.mxu0 0
    %2644 = vmatpush1.bf16.xpose.msra.mxu0 %v2629
    %2645 = vmatprep.subr.bf16.mxu0 0
    %2646 = vmatpush1.bf16.xpose.msra.mxu0 %v2626
    %2647 = vmatprep.subr.bf16.mxu0 0
    %2648 = vmatpush2.bf16.xpose.msra.mxu0 0
    %2649 = vmatprep.subr.bf16.mxu0 0
    %2650 = vmatpush2.bf16.xpose.msra.mxu0 0
    %2651 = vmatprep.subr.bf16.mxu0 0
    %2652 = vmatpush2.bf16.xpose.msra.mxu0 0
    %2653 = vmatprep.subr.bf16.mxu0 0
    %2654 = vmatpush2.bf16.xpose.msra.mxu0 0
    %2655 = vmatprep.subr.bf16.mxu0 0
    %2656 = vmatpush2.bf16.xpose.msra.mxu0 0
    %2657 = vmatprep.subr.bf16.mxu0 0
    %2658 = vmatpush2.bf16.xpose.msra.mxu0 0
    %2659 = vmatprep.subr.bf16.mxu0 0
    %2660 = vmatpush2.bf16.xpose.msra.mxu0 0
    %2661 = vmatprep.subr.bf16.mxu0 0
    %2662 = vmatpush2.bf16.xpose.msra.mxu0 0
    %2663 = vmatprep.mubr.bf16.mxu0 0
    %2664 = vmatmul.mubr.bf16.gmra.mxu0 %v2623
    %v2665 = vpop.f32.mrf.mxu0
    %v2666 = vadd.f32 %v2606, %v2665
    %v2667 = vpop.f32.mrf.mxu0
    %v2668 = vpop.f32.mrf.mxu0
    %v2669 = vadd.f32 %v2609, %v2668
    %v2670 = vpop.f32.mrf.mxu0
    %2671 = vdwg.mxu0
    %s2672 = scalar_lea.vmem %s2, 384
    %v2673 = vld [vmem:[%s2672] sm:$0xf]
    %v2674 = vld [vmem:[%s2672 + $0x4] sm:$0xf]
    %v2675 = vld [vmem:[%s2672 + $0x8] sm:$0xf]
    %v2676 = vld [vmem:[%s2672 + $0xc] sm:$0xf]
    %s2677 = scalar_lea.vmem %s3, 18
    %v2678 = vld [vmem:[%s2677] sm:$0x1]
    %v2680 = vlaneseq
    %v2681 = vshrl.u32 %v2680, 7
    %v2682 = vsub.s32 0, %v2681
    %v2683 = vrot.slane %v2678, %v2682
    %v2689 = vunpack.c.l.b16 %v2673
    %v2690 = vunpack.c.l.b16 %v2674
    %v2691 = vunpack.c.l.b16 %v2675
    %v2692 = vunpack.c.l.b16 %v2676
    %v2693 = vpack.c.b16 %v2690, %v2689
    %v2694 = vpack.c.b16 %v2692, %v2691
    %2697 = vmatprep.subr.bf16.mxu0 0
    %2698 = vmatpush1.bf16.msra.mxu0 0
    %2699 = vmatprep.subr.bf16.mxu0 0
    %2700 = vmatpush1.bf16.msra.mxu0 0
    %2701 = vmatprep.subr.bf16.mxu0 0
    %2702 = vmatpush1.bf16.msra.mxu0 0
    %2703 = vmatprep.subr.bf16.mxu0 0
    %2704 = vmatpush1.bf16.msra.mxu0 0
    %2705 = vmatprep.subr.bf16.mxu0 0
    %2706 = vmatpush1.bf16.msra.mxu0 0
    %2707 = vmatprep.subr.bf16.mxu0 0
    %2708 = vmatpush1.bf16.msra.mxu0 0
    %2709 = vmatprep.subr.bf16.mxu0 0
    %2710 = vmatpush1.bf16.msra.mxu0 %v2694
    %2711 = vmatprep.subr.bf16.mxu0 0
    %2712 = vmatpush1.bf16.msra.mxu0 %v2693
    %2713 = vmatprep.subr.bf16.mxu0 0
    %2714 = vmatpush2.bf16.msra.mxu0 0
    %2715 = vmatprep.subr.bf16.mxu0 0
    %2716 = vmatpush2.bf16.msra.mxu0 0
    %2717 = vmatprep.subr.bf16.mxu0 0
    %2718 = vmatpush2.bf16.msra.mxu0 0
    %2719 = vmatprep.subr.bf16.mxu0 0
    %2720 = vmatpush2.bf16.msra.mxu0 0
    %2721 = vmatprep.subr.bf16.mxu0 0
    %2722 = vmatpush2.bf16.msra.mxu0 0
    %2723 = vmatprep.subr.bf16.mxu0 0
    %2724 = vmatpush2.bf16.msra.mxu0 0
    %2725 = vmatprep.subr.bf16.mxu0 0
    %2726 = vmatpush2.bf16.msra.mxu0 0
    %2727 = vmatprep.subr.bf16.mxu0 0
    %2728 = vmatpush2.bf16.msra.mxu0 0
    %2729 = vmatprep.mubr.bf16.mxu0 0
    %2730 = vmatmul.mubr.bf16.gmra.mxu0 %v1939
    %v2731 = vpop.f32.mrf.mxu0
    %v2732 = vadd.f32 %v2683, %v2731
    %v2733 = vpop.f32.mrf.mxu0
    %v2734 = vpop.f32.mrf.mxu0
    %v2735 = vadd.f32 %v2683, %v2734
    %v2736 = vpop.f32.mrf.mxu0
    %2737 = vdwg.mxu0
    %v2738 = vpack.c.bf16 %v2735, %v2732
    %s2739 = scalar_lea.vmem %s2, 400
    %v2740 = vld [vmem:[%s2739] sm:$0xf]
    %v2741 = vld [vmem:[%s2739 + $0x4] sm:$0xf]
    %v2742 = vld [vmem:[%s2739 + $0x8] sm:$0xf]
    %v2743 = vld [vmem:[%s2739 + $0xc] sm:$0xf]
    %s2744 = scalar_lea.vmem %s3, 19
    %v2745 = vld [vmem:[%s2744] sm:$0x1]
    %v2747 = vlaneseq
    %v2748 = vshrl.u32 %v2747, 7
    %v2749 = vsub.s32 0, %v2748
    %v2750 = vrot.slane %v2745, %v2749
    %v2756 = vunpack.c.l.b16 %v2740
    %v2757 = vunpack.c.l.b16 %v2741
    %v2758 = vunpack.c.l.b16 %v2742
    %v2759 = vunpack.c.l.b16 %v2743
    %v2760 = vpack.c.b16 %v2757, %v2756
    %v2761 = vpack.c.b16 %v2759, %v2758
    %2764 = vmatprep.subr.bf16.mxu0 0
    %2765 = vmatpush1.bf16.msra.mxu0 0
    %2766 = vmatprep.subr.bf16.mxu0 0
    %2767 = vmatpush1.bf16.msra.mxu0 0
    %2768 = vmatprep.subr.bf16.mxu0 0
    %2769 = vmatpush1.bf16.msra.mxu0 0
    %2770 = vmatprep.subr.bf16.mxu0 0
    %2771 = vmatpush1.bf16.msra.mxu0 0
    %2772 = vmatprep.subr.bf16.mxu0 0
    %2773 = vmatpush1.bf16.msra.mxu0 0
    %2774 = vmatprep.subr.bf16.mxu0 0
    %2775 = vmatpush1.bf16.msra.mxu0 0
    %2776 = vmatprep.subr.bf16.mxu0 0
    %2777 = vmatpush1.bf16.msra.mxu0 %v2761
    %2778 = vmatprep.subr.bf16.mxu0 0
    %2779 = vmatpush1.bf16.msra.mxu0 %v2760
    %2780 = vmatprep.subr.bf16.mxu0 0
    %2781 = vmatpush2.bf16.msra.mxu0 0
    %2782 = vmatprep.subr.bf16.mxu0 0
    %2783 = vmatpush2.bf16.msra.mxu0 0
    %2784 = vmatprep.subr.bf16.mxu0 0
    %2785 = vmatpush2.bf16.msra.mxu0 0
    %2786 = vmatprep.subr.bf16.mxu0 0
    %2787 = vmatpush2.bf16.msra.mxu0 0
    %2788 = vmatprep.subr.bf16.mxu0 0
    %2789 = vmatpush2.bf16.msra.mxu0 0
    %2790 = vmatprep.subr.bf16.mxu0 0
    %2791 = vmatpush2.bf16.msra.mxu0 0
    %2792 = vmatprep.subr.bf16.mxu0 0
    %2793 = vmatpush2.bf16.msra.mxu0 0
    %2794 = vmatprep.subr.bf16.mxu0 0
    %2795 = vmatpush2.bf16.msra.mxu0 0
    %2796 = vmatprep.mubr.bf16.mxu0 0
    %2797 = vmatmul.mubr.bf16.gmra.mxu0 %v1939
    %v2798 = vpop.f32.mrf.mxu0
    %v2799 = vadd.f32 %v2750, %v2798
    %v2800 = vpop.f32.mrf.mxu0
    %v2801 = vpop.f32.mrf.mxu0
    %v2802 = vadd.f32 %v2750, %v2801
    %v2803 = vpop.f32.mrf.mxu0
    %2804 = vdwg.mxu0
    %v2805 = vpack.c.bf16 %v2802, %v2799
    %s2806 = scalar_lea.vmem %s2, 416
    %v2807 = vld [vmem:[%s2806] sm:$0xf]
    %v2808 = vld [vmem:[%s2806 + $0x4] sm:$0xf]
    %v2809 = vld [vmem:[%s2806 + $0x8] sm:$0xf]
    %v2810 = vld [vmem:[%s2806 + $0xc] sm:$0xf]
    %s2811 = scalar_lea.vmem %s3, 20
    %v2812 = vld [vmem:[%s2811] sm:$0x1]
    %v2814 = vlaneseq
    %v2815 = vshrl.u32 %v2814, 7
    %v2816 = vsub.s32 0, %v2815
    %v2817 = vrot.slane %v2812, %v2816
    %v2823 = vunpack.c.l.b16 %v2807
    %v2824 = vunpack.c.l.b16 %v2808
    %v2825 = vunpack.c.l.b16 %v2809
    %v2826 = vunpack.c.l.b16 %v2810
    %v2827 = vpack.c.b16 %v2824, %v2823
    %v2828 = vpack.c.b16 %v2826, %v2825
    %2831 = vmatprep.subr.bf16.mxu0 0
    %2832 = vmatpush1.bf16.msra.mxu0 0
    %2833 = vmatprep.subr.bf16.mxu0 0
    %2834 = vmatpush1.bf16.msra.mxu0 0
    %2835 = vmatprep.subr.bf16.mxu0 0
    %2836 = vmatpush1.bf16.msra.mxu0 0
    %2837 = vmatprep.subr.bf16.mxu0 0
    %2838 = vmatpush1.bf16.msra.mxu0 0
    %2839 = vmatprep.subr.bf16.mxu0 0
    %2840 = vmatpush1.bf16.msra.mxu0 0
    %2841 = vmatprep.subr.bf16.mxu0 0
    %2842 = vmatpush1.bf16.msra.mxu0 0
    %2843 = vmatprep.subr.bf16.mxu0 0
    %2844 = vmatpush1.bf16.msra.mxu0 %v2828
    %2845 = vmatprep.subr.bf16.mxu0 0
    %2846 = vmatpush1.bf16.msra.mxu0 %v2827
    %2847 = vmatprep.subr.bf16.mxu0 0
    %2848 = vmatpush2.bf16.msra.mxu0 0
    %2849 = vmatprep.subr.bf16.mxu0 0
    %2850 = vmatpush2.bf16.msra.mxu0 0
    %2851 = vmatprep.subr.bf16.mxu0 0
    %2852 = vmatpush2.bf16.msra.mxu0 0
    %2853 = vmatprep.subr.bf16.mxu0 0
    %2854 = vmatpush2.bf16.msra.mxu0 0
    %2855 = vmatprep.subr.bf16.mxu0 0
    %2856 = vmatpush2.bf16.msra.mxu0 0
    %2857 = vmatprep.subr.bf16.mxu0 0
    %2858 = vmatpush2.bf16.msra.mxu0 0
    %2859 = vmatprep.subr.bf16.mxu0 0
    %2860 = vmatpush2.bf16.msra.mxu0 0
    %2861 = vmatprep.subr.bf16.mxu0 0
    %2862 = vmatpush2.bf16.msra.mxu0 0
    %2863 = vmatprep.mubr.bf16.mxu0 0
    %2864 = vmatmul.mubr.bf16.gmra.mxu0 %v1939
    %v2865 = vpop.f32.mrf.mxu0
    %v2866 = vadd.f32 %v2817, %v2865
    %v2867 = vpop.f32.mrf.mxu0
    %v2868 = vpop.f32.mrf.mxu0
    %v2869 = vadd.f32 %v2817, %v2868
    %v2870 = vpop.f32.mrf.mxu0
    %2871 = vdwg.mxu0
    %v2872 = vpack.c.bf16 %v2869, %v2866
    %v2874 = vsel %vm290, %v2738, 0
    %v2877 = vsel %vm290, %v2805, 0
    %2879 = vmatprep.subr.bf16.mxu0 0
    %2880 = vmatpush1.bf16.xpose.msra.mxu0 0
    %2881 = vmatprep.subr.bf16.mxu0 0
    %2882 = vmatpush1.bf16.xpose.msra.mxu0 0
    %2883 = vmatprep.subr.bf16.mxu0 0
    %2884 = vmatpush1.bf16.xpose.msra.mxu0 0
    %2885 = vmatprep.subr.bf16.mxu0 0
    %2886 = vmatpush1.bf16.xpose.msra.mxu0 0
    %2887 = vmatprep.subr.bf16.mxu0 0
    %2888 = vmatpush1.bf16.xpose.msra.mxu0 0
    %2889 = vmatprep.subr.bf16.mxu0 0
    %2890 = vmatpush1.bf16.xpose.msra.mxu0 0
    %2891 = vmatprep.subr.bf16.mxu0 0
    %2892 = vmatpush1.bf16.xpose.msra.mxu0 0
    %2893 = vmatprep.subr.bf16.mxu0 0
    %2894 = vmatpush1.bf16.xpose.msra.mxu0 %v2877
    %2895 = vmatprep.subr.bf16.mxu0 0
    %2896 = vmatpush2.bf16.xpose.msra.mxu0 0
    %2897 = vmatprep.subr.bf16.mxu0 0
    %2898 = vmatpush2.bf16.xpose.msra.mxu0 0
    %2899 = vmatprep.subr.bf16.mxu0 0
    %2900 = vmatpush2.bf16.xpose.msra.mxu0 0
    %2901 = vmatprep.subr.bf16.mxu0 0
    %2902 = vmatpush2.bf16.xpose.msra.mxu0 0
    %2903 = vmatprep.subr.bf16.mxu0 0
    %2904 = vmatpush2.bf16.xpose.msra.mxu0 0
    %2905 = vmatprep.subr.bf16.mxu0 0
    %2906 = vmatpush2.bf16.xpose.msra.mxu0 0
    %2907 = vmatprep.subr.bf16.mxu0 0
    %2908 = vmatpush2.bf16.xpose.msra.mxu0 0
    %2909 = vmatprep.subr.bf16.mxu0 0
    %2910 = vmatpush2.bf16.xpose.msra.mxu0 0
    %2911 = vmatprep.mubr.bf16.mxu0 0
    %2912 = vmatmul.mubr.bf16.gmra.mxu0 %v2874
    %v2913 = vpop.f32.mrf.mxu0
    %v2914 = vadd.f32 0.0, %v2913
    %v2915 = vpop.f32.mrf.mxu0
    %v2916 = vpop.f32.mrf.mxu0
    %v2917 = vadd.f32 0.0, %v2916
    %v2918 = vpop.f32.mrf.mxu0
    %2919 = vdwg.mxu0
    %v2920 = vmul.f32 %v2914, 0.35355338
    %v2921 = vmul.f32 %v2917, 0.35355338
    %v2922 = vadd.f32 %v2920, %v38
    %v2923 = vadd.f32 %v2921, %v39
    %v2924 = vmul.f32 %v2922, 1.442695
    %v2925 = vpow.pop %v2924
    %v2926 = vmul.f32 %v2923, 1.442695
    %v2927 = vpow.pop %v2926
    %v2928 = vsel %vm346, %v2925, 0.0
    %2929 = vadd.xlane.f32.xlu0 %v2928
    %v2930 = vpop.xlane.xlu0 %2929
    %v2931 = vsel %vm346, %v2927, 0.0
    %2932 = vadd.xlane.f32.xlu0 %v2931
    %v2933 = vpop.xlane.xlu0 %2932
    %v2934 = vrcp.pop %v2930
    %v2935 = vrcp.pop %v2933
    %v2936 = vmul.f32 %v2925, %v2934
    %v2937 = vmul.f32 %v2927, %v2935
    %v2938 = vpack.c.bf16 %v2937, %v2936
    %v2940 = vsel %vm346, %v2938, 0
    %2942 = vmatprep.subr.bf16.mxu0 0
    %2943 = vmatpush1.bf16.msra.mxu0 0
    %2944 = vmatprep.subr.bf16.mxu0 0
    %2945 = vmatpush1.bf16.msra.mxu0 0
    %2946 = vmatprep.subr.bf16.mxu0 0
    %2947 = vmatpush1.bf16.msra.mxu0 0
    %2948 = vmatprep.subr.bf16.mxu0 0
    %2949 = vmatpush1.bf16.msra.mxu0 0
    %2950 = vmatprep.subr.bf16.mxu0 0
    %2951 = vmatpush1.bf16.msra.mxu0 0
    %2952 = vmatprep.subr.bf16.mxu0 0
    %2953 = vmatpush1.bf16.msra.mxu0 0
    %2954 = vmatprep.subr.bf16.mxu0 0
    %2955 = vmatpush1.bf16.msra.mxu0 0
    %2956 = vmatprep.subr.bf16.mxu0 0
    %2957 = vmatpush1.bf16.msra.mxu0 %v2872
    %2958 = vmatprep.subr.bf16.mxu0 0
    %2959 = vmatpush2.bf16.msra.mxu0 0
    %2960 = vmatprep.subr.bf16.mxu0 0
    %2961 = vmatpush2.bf16.msra.mxu0 0
    %2962 = vmatprep.subr.bf16.mxu0 0
    %2963 = vmatpush2.bf16.msra.mxu0 0
    %2964 = vmatprep.subr.bf16.mxu0 0
    %2965 = vmatpush2.bf16.msra.mxu0 0
    %2966 = vmatprep.subr.bf16.mxu0 0
    %2967 = vmatpush2.bf16.msra.mxu0 0
    %2968 = vmatprep.subr.bf16.mxu0 0
    %2969 = vmatpush2.bf16.msra.mxu0 0
    %2970 = vmatprep.subr.bf16.mxu0 0
    %2971 = vmatpush2.bf16.msra.mxu0 0
    %2972 = vmatprep.subr.bf16.mxu0 0
    %2973 = vmatpush2.bf16.msra.mxu0 0
    %2974 = vmatprep.mubr.bf16.mxu0 0
    %2975 = vmatmul.mubr.bf16.gmra.mxu0 %v2940
    %v2976 = vpop.f32.mrf.mxu0
    %v2977 = vadd.f32 0.0, %v2976
    %v2978 = vpop.f32.mrf.mxu0
    %v2979 = vpop.f32.mrf.mxu0
    %v2980 = vadd.f32 0.0, %v2979
    %v2981 = vpop.f32.mrf.mxu0
    %2982 = vdwg.mxu0
    %v2983 = vpack.c.bf16 %v2980, %v2977
    %s2984 = scalar_lea.vmem %s2, 432
    %v2985 = vld [vmem:[%s2984] sm:$0xf]
    %v2986 = vld [vmem:[%s2984 + $0x4] sm:$0xf]
    %v2987 = vld [vmem:[%s2984 + $0x8] sm:$0xf]
    %v2988 = vld [vmem:[%s2984 + $0xc] sm:$0xf]
    %v2993 = vunpack.c.l.b16 %v2985
    %v2994 = vunpack.c.l.b16 %v2986
    %v2995 = vunpack.c.l.b16 %v2987
    %v2996 = vunpack.c.l.b16 %v2988
    %v2997 = vpack.c.b16 %v2994, %v2993
    %v2998 = vpack.c.b16 %v2996, %v2995
    %v3000 = vsel %vm290, %v2983, 0
    %v3003 = vsel %vm290, %v2997, 0
    %v3006 = vsel %vm290, %v2998, 0
    %3008 = vmatprep.subr.bf16.mxu0 0
    %3009 = vmatpush1.bf16.xpose.msra.mxu0 0
    %3010 = vmatprep.subr.bf16.mxu0 0
    %3011 = vmatpush1.bf16.xpose.msra.mxu0 0
    %3012 = vmatprep.subr.bf16.mxu0 0
    %3013 = vmatpush1.bf16.xpose.msra.mxu0 0
    %3014 = vmatprep.subr.bf16.mxu0 0
    %3015 = vmatpush1.bf16.xpose.msra.mxu0 0
    %3016 = vmatprep.subr.bf16.mxu0 0
    %3017 = vmatpush1.bf16.xpose.msra.mxu0 0
    %3018 = vmatprep.subr.bf16.mxu0 0
    %3019 = vmatpush1.bf16.xpose.msra.mxu0 0
    %3020 = vmatprep.subr.bf16.mxu0 0
    %3021 = vmatpush1.bf16.xpose.msra.mxu0 %v3006
    %3022 = vmatprep.subr.bf16.mxu0 0
    %3023 = vmatpush1.bf16.xpose.msra.mxu0 %v3003
    %3024 = vmatprep.subr.bf16.mxu0 0
    %3025 = vmatpush2.bf16.xpose.msra.mxu0 0
    %3026 = vmatprep.subr.bf16.mxu0 0
    %3027 = vmatpush2.bf16.xpose.msra.mxu0 0
    %3028 = vmatprep.subr.bf16.mxu0 0
    %3029 = vmatpush2.bf16.xpose.msra.mxu0 0
    %3030 = vmatprep.subr.bf16.mxu0 0
    %3031 = vmatpush2.bf16.xpose.msra.mxu0 0
    %3032 = vmatprep.subr.bf16.mxu0 0
    %3033 = vmatpush2.bf16.xpose.msra.mxu0 0
    %3034 = vmatprep.subr.bf16.mxu0 0
    %3035 = vmatpush2.bf16.xpose.msra.mxu0 0
    %3036 = vmatprep.subr.bf16.mxu0 0
    %3037 = vmatpush2.bf16.xpose.msra.mxu0 0
    %3038 = vmatprep.subr.bf16.mxu0 0
    %3039 = vmatpush2.bf16.xpose.msra.mxu0 0
    %3040 = vmatprep.mubr.bf16.mxu0 0
    %3041 = vmatmul.mubr.bf16.gmra.mxu0 %v3000
    %v3042 = vpop.f32.mrf.mxu0
    %v3043 = vadd.f32 0.0, %v3042
    %v3044 = vpop.f32.mrf.mxu0
    %v3045 = vpop.f32.mrf.mxu0
    %v3046 = vadd.f32 0.0, %v3045
    %v3047 = vpop.f32.mrf.mxu0
    %3048 = vdwg.mxu0
    %v3049 = vadd.f32 %v2666, %v3043
    %v3050 = vadd.f32 %v2669, %v3046
    %s3051 = scalar_lea.vmem %s2, 448
    %v3052 = vld [vmem:[%s3051] sm:$0xf]
    %v3053 = vld [vmem:[%s3051 + $0x4] sm:$0xf]
    %v3054 = vld [vmem:[%s3051 + $0x8] sm:$0xf]
    %v3055 = vld [vmem:[%s3051 + $0xc] sm:$0xf]
    %s3056 = scalar_lea.vmem %s3, 21
    %v3057 = vld [vmem:[%s3056] sm:$0x1]
    %v3059 = vlaneseq
    %v3060 = vshrl.u32 %v3059, 7
    %v3061 = vsub.s32 0, %v3060
    %v3062 = vrot.slane %v3057, %v3061
    %v3068 = vunpack.c.l.b16 %v3052
    %v3069 = vunpack.c.l.b16 %v3053
    %v3070 = vunpack.c.l.b16 %v3054
    %v3071 = vunpack.c.l.b16 %v3055
    %v3072 = vpack.c.b16 %v3069, %v3068
    %v3073 = vpack.c.b16 %v3071, %v3070
    %3076 = vmatprep.subr.bf16.mxu0 0
    %3077 = vmatpush1.bf16.msra.mxu0 0
    %3078 = vmatprep.subr.bf16.mxu0 0
    %3079 = vmatpush1.bf16.msra.mxu0 0
    %3080 = vmatprep.subr.bf16.mxu0 0
    %3081 = vmatpush1.bf16.msra.mxu0 0
    %3082 = vmatprep.subr.bf16.mxu0 0
    %3083 = vmatpush1.bf16.msra.mxu0 0
    %3084 = vmatprep.subr.bf16.mxu0 0
    %3085 = vmatpush1.bf16.msra.mxu0 0
    %3086 = vmatprep.subr.bf16.mxu0 0
    %3087 = vmatpush1.bf16.msra.mxu0 0
    %3088 = vmatprep.subr.bf16.mxu0 0
    %3089 = vmatpush1.bf16.msra.mxu0 %v3073
    %3090 = vmatprep.subr.bf16.mxu0 0
    %3091 = vmatpush1.bf16.msra.mxu0 %v3072
    %3092 = vmatprep.subr.bf16.mxu0 0
    %3093 = vmatpush2.bf16.msra.mxu0 0
    %3094 = vmatprep.subr.bf16.mxu0 0
    %3095 = vmatpush2.bf16.msra.mxu0 0
    %3096 = vmatprep.subr.bf16.mxu0 0
    %3097 = vmatpush2.bf16.msra.mxu0 0
    %3098 = vmatprep.subr.bf16.mxu0 0
    %3099 = vmatpush2.bf16.msra.mxu0 0
    %3100 = vmatprep.subr.bf16.mxu0 0
    %3101 = vmatpush2.bf16.msra.mxu0 0
    %3102 = vmatprep.subr.bf16.mxu0 0
    %3103 = vmatpush2.bf16.msra.mxu0 0
    %3104 = vmatprep.subr.bf16.mxu0 0
    %3105 = vmatpush2.bf16.msra.mxu0 0
    %3106 = vmatprep.subr.bf16.mxu0 0
    %3107 = vmatpush2.bf16.msra.mxu0 0
    %3108 = vmatprep.mubr.bf16.mxu0 0
    %3109 = vmatmul.mubr.bf16.gmra.mxu0 %v1939
    %v3110 = vpop.f32.mrf.mxu0
    %v3111 = vadd.f32 %v3062, %v3110
    %v3112 = vpop.f32.mrf.mxu0
    %v3113 = vpop.f32.mrf.mxu0
    %v3114 = vadd.f32 %v3062, %v3113
    %v3115 = vpop.f32.mrf.mxu0
    %3116 = vdwg.mxu0
    %v3117 = vpack.c.bf16 %v3114, %v3111
    %s3118 = scalar_lea.vmem %s2, 464
    %v3119 = vld [vmem:[%s3118] sm:$0xf]
    %v3120 = vld [vmem:[%s3118 + $0x4] sm:$0xf]
    %v3121 = vld [vmem:[%s3118 + $0x8] sm:$0xf]
    %v3122 = vld [vmem:[%s3118 + $0xc] sm:$0xf]
    %s3123 = scalar_lea.vmem %s3, 22
    %v3124 = vld [vmem:[%s3123] sm:$0x1]
    %v3126 = vlaneseq
    %v3127 = vshrl.u32 %v3126, 7
    %v3128 = vsub.s32 0, %v3127
    %v3129 = vrot.slane %v3124, %v3128
    %v3135 = vunpack.c.l.b16 %v3119
    %v3136 = vunpack.c.l.b16 %v3120
    %v3137 = vunpack.c.l.b16 %v3121
    %v3138 = vunpack.c.l.b16 %v3122
    %v3139 = vpack.c.b16 %v3136, %v3135
    %v3140 = vpack.c.b16 %v3138, %v3137
    %3143 = vmatprep.subr.bf16.mxu0 0
    %3144 = vmatpush1.bf16.msra.mxu0 0
    %3145 = vmatprep.subr.bf16.mxu0 0
    %3146 = vmatpush1.bf16.msra.mxu0 0
    %3147 = vmatprep.subr.bf16.mxu0 0
    %3148 = vmatpush1.bf16.msra.mxu0 0
    %3149 = vmatprep.subr.bf16.mxu0 0
    %3150 = vmatpush1.bf16.msra.mxu0 0
    %3151 = vmatprep.subr.bf16.mxu0 0
    %3152 = vmatpush1.bf16.msra.mxu0 0
    %3153 = vmatprep.subr.bf16.mxu0 0
    %3154 = vmatpush1.bf16.msra.mxu0 0
    %3155 = vmatprep.subr.bf16.mxu0 0
    %3156 = vmatpush1.bf16.msra.mxu0 %v3140
    %3157 = vmatprep.subr.bf16.mxu0 0
    %3158 = vmatpush1.bf16.msra.mxu0 %v3139
    %3159 = vmatprep.subr.bf16.mxu0 0
    %3160 = vmatpush2.bf16.msra.mxu0 0
    %3161 = vmatprep.subr.bf16.mxu0 0
    %3162 = vmatpush2.bf16.msra.mxu0 0
    %3163 = vmatprep.subr.bf16.mxu0 0
    %3164 = vmatpush2.bf16.msra.mxu0 0
    %3165 = vmatprep.subr.bf16.mxu0 0
    %3166 = vmatpush2.bf16.msra.mxu0 0
    %3167 = vmatprep.subr.bf16.mxu0 0
    %3168 = vmatpush2.bf16.msra.mxu0 0
    %3169 = vmatprep.subr.bf16.mxu0 0
    %3170 = vmatpush2.bf16.msra.mxu0 0
    %3171 = vmatprep.subr.bf16.mxu0 0
    %3172 = vmatpush2.bf16.msra.mxu0 0
    %3173 = vmatprep.subr.bf16.mxu0 0
    %3174 = vmatpush2.bf16.msra.mxu0 0
    %3175 = vmatprep.mubr.bf16.mxu0 0
    %3176 = vmatmul.mubr.bf16.gmra.mxu0 %v1939
    %v3177 = vpop.f32.mrf.mxu0
    %v3178 = vadd.f32 %v3129, %v3177
    %v3179 = vpop.f32.mrf.mxu0
    %v3180 = vpop.f32.mrf.mxu0
    %v3181 = vadd.f32 %v3129, %v3180
    %v3182 = vpop.f32.mrf.mxu0
    %3183 = vdwg.mxu0
    %v3184 = vpack.c.bf16 %v3181, %v3178
    %s3185 = scalar_lea.vmem %s2, 480
    %v3186 = vld [vmem:[%s3185] sm:$0xf]
    %v3187 = vld [vmem:[%s3185 + $0x4] sm:$0xf]
    %v3188 = vld [vmem:[%s3185 + $0x8] sm:$0xf]
    %v3189 = vld [vmem:[%s3185 + $0xc] sm:$0xf]
    %s3190 = scalar_lea.vmem %s3, 23
    %v3191 = vld [vmem:[%s3190] sm:$0x1]
    %v3193 = vlaneseq
    %v3194 = vshrl.u32 %v3193, 7
    %v3195 = vsub.s32 0, %v3194
    %v3196 = vrot.slane %v3191, %v3195
    %v3202 = vunpack.c.l.b16 %v3186
    %v3203 = vunpack.c.l.b16 %v3187
    %v3204 = vunpack.c.l.b16 %v3188
    %v3205 = vunpack.c.l.b16 %v3189
    %v3206 = vpack.c.b16 %v3203, %v3202
    %v3207 = vpack.c.b16 %v3205, %v3204
    %3210 = vmatprep.subr.bf16.mxu0 0
    %3211 = vmatpush1.bf16.msra.mxu0 0
    %3212 = vmatprep.subr.bf16.mxu0 0
    %3213 = vmatpush1.bf16.msra.mxu0 0
    %3214 = vmatprep.subr.bf16.mxu0 0
    %3215 = vmatpush1.bf16.msra.mxu0 0
    %3216 = vmatprep.subr.bf16.mxu0 0
    %3217 = vmatpush1.bf16.msra.mxu0 0
    %3218 = vmatprep.subr.bf16.mxu0 0
    %3219 = vmatpush1.bf16.msra.mxu0 0
    %3220 = vmatprep.subr.bf16.mxu0 0
    %3221 = vmatpush1.bf16.msra.mxu0 0
    %3222 = vmatprep.subr.bf16.mxu0 0
    %3223 = vmatpush1.bf16.msra.mxu0 %v3207
    %3224 = vmatprep.subr.bf16.mxu0 0
    %3225 = vmatpush1.bf16.msra.mxu0 %v3206
    %3226 = vmatprep.subr.bf16.mxu0 0
    %3227 = vmatpush2.bf16.msra.mxu0 0
    %3228 = vmatprep.subr.bf16.mxu0 0
    %3229 = vmatpush2.bf16.msra.mxu0 0
    %3230 = vmatprep.subr.bf16.mxu0 0
    %3231 = vmatpush2.bf16.msra.mxu0 0
    %3232 = vmatprep.subr.bf16.mxu0 0
    %3233 = vmatpush2.bf16.msra.mxu0 0
    %3234 = vmatprep.subr.bf16.mxu0 0
    %3235 = vmatpush2.bf16.msra.mxu0 0
    %3236 = vmatprep.subr.bf16.mxu0 0
    %3237 = vmatpush2.bf16.msra.mxu0 0
    %3238 = vmatprep.subr.bf16.mxu0 0
    %3239 = vmatpush2.bf16.msra.mxu0 0
    %3240 = vmatprep.subr.bf16.mxu0 0
    %3241 = vmatpush2.bf16.msra.mxu0 0
    %3242 = vmatprep.mubr.bf16.mxu0 0
    %3243 = vmatmul.mubr.bf16.gmra.mxu0 %v1939
    %v3244 = vpop.f32.mrf.mxu0
    %v3245 = vadd.f32 %v3196, %v3244
    %v3246 = vpop.f32.mrf.mxu0
    %v3247 = vpop.f32.mrf.mxu0
    %v3248 = vadd.f32 %v3196, %v3247
    %v3249 = vpop.f32.mrf.mxu0
    %3250 = vdwg.mxu0
    %v3251 = vpack.c.bf16 %v3248, %v3245
    %v3253 = vsel %vm290, %v3117, 0
    %v3256 = vsel %vm290, %v3184, 0
    %3258 = vmatprep.subr.bf16.mxu0 0
    %3259 = vmatpush1.bf16.xpose.msra.mxu0 0
    %3260 = vmatprep.subr.bf16.mxu0 0
    %3261 = vmatpush1.bf16.xpose.msra.mxu0 0
    %3262 = vmatprep.subr.bf16.mxu0 0
    %3263 = vmatpush1.bf16.xpose.msra.mxu0 0
    %3264 = vmatprep.subr.bf16.mxu0 0
    %3265 = vmatpush1.bf16.xpose.msra.mxu0 0
    %3266 = vmatprep.subr.bf16.mxu0 0
    %3267 = vmatpush1.bf16.xpose.msra.mxu0 0
    %3268 = vmatprep.subr.bf16.mxu0 0
    %3269 = vmatpush1.bf16.xpose.msra.mxu0 0
    %3270 = vmatprep.subr.bf16.mxu0 0
    %3271 = vmatpush1.bf16.xpose.msra.mxu0 0
    %3272 = vmatprep.subr.bf16.mxu0 0
    %3273 = vmatpush1.bf16.xpose.msra.mxu0 %v3256
    %3274 = vmatprep.subr.bf16.mxu0 0
    %3275 = vmatpush2.bf16.xpose.msra.mxu0 0
    %3276 = vmatprep.subr.bf16.mxu0 0
    %3277 = vmatpush2.bf16.xpose.msra.mxu0 0
    %3278 = vmatprep.subr.bf16.mxu0 0
    %3279 = vmatpush2.bf16.xpose.msra.mxu0 0
    %3280 = vmatprep.subr.bf16.mxu0 0
    %3281 = vmatpush2.bf16.xpose.msra.mxu0 0
    %3282 = vmatprep.subr.bf16.mxu0 0
    %3283 = vmatpush2.bf16.xpose.msra.mxu0 0
    %3284 = vmatprep.subr.bf16.mxu0 0
    %3285 = vmatpush2.bf16.xpose.msra.mxu0 0
    %3286 = vmatprep.subr.bf16.mxu0 0
    %3287 = vmatpush2.bf16.xpose.msra.mxu0 0
    %3288 = vmatprep.subr.bf16.mxu0 0
    %3289 = vmatpush2.bf16.xpose.msra.mxu0 0
    %3290 = vmatprep.mubr.bf16.mxu0 0
    %3291 = vmatmul.mubr.bf16.gmra.mxu0 %v3253
    %v3292 = vpop.f32.mrf.mxu0
    %v3293 = vadd.f32 0.0, %v3292
    %v3294 = vpop.f32.mrf.mxu0
    %v3295 = vpop.f32.mrf.mxu0
    %v3296 = vadd.f32 0.0, %v3295
    %v3297 = vpop.f32.mrf.mxu0
    %3298 = vdwg.mxu0
    %v3299 = vmul.f32 %v3293, 0.35355338
    %v3300 = vmul.f32 %v3296, 0.35355338
    %v3301 = vadd.f32 %v3299, %v38
    %v3302 = vadd.f32 %v3300, %v39
    %v3303 = vmul.f32 %v3301, 1.442695
    %v3304 = vpow.pop %v3303
    %v3305 = vmul.f32 %v3302, 1.442695
    %v3306 = vpow.pop %v3305
    %v3307 = vsel %vm346, %v3304, 0.0
    %3308 = vadd.xlane.f32.xlu0 %v3307
    %v3309 = vpop.xlane.xlu0 %3308
    %v3310 = vsel %vm346, %v3306, 0.0
    %3311 = vadd.xlane.f32.xlu0 %v3310
    %v3312 = vpop.xlane.xlu0 %3311
    %v3313 = vrcp.pop %v3309
    %v3314 = vrcp.pop %v3312
    %v3315 = vmul.f32 %v3304, %v3313
    %v3316 = vmul.f32 %v3306, %v3314
    %v3317 = vpack.c.bf16 %v3316, %v3315
    %v3319 = vsel %vm346, %v3317, 0
    %3321 = vmatprep.subr.bf16.mxu0 0
    %3322 = vmatpush1.bf16.msra.mxu0 0
    %3323 = vmatprep.subr.bf16.mxu0 0
    %3324 = vmatpush1.bf16.msra.mxu0 0
    %3325 = vmatprep.subr.bf16.mxu0 0
    %3326 = vmatpush1.bf16.msra.mxu0 0
    %3327 = vmatprep.subr.bf16.mxu0 0
    %3328 = vmatpush1.bf16.msra.mxu0 0
    %3329 = vmatprep.subr.bf16.mxu0 0
    %3330 = vmatpush1.bf16.msra.mxu0 0
    %3331 = vmatprep.subr.bf16.mxu0 0
    %3332 = vmatpush1.bf16.msra.mxu0 0
    %3333 = vmatprep.subr.bf16.mxu0 0
    %3334 = vmatpush1.bf16.msra.mxu0 0
    %3335 = vmatprep.subr.bf16.mxu0 0
    %3336 = vmatpush1.bf16.msra.mxu0 %v3251
    %3337 = vmatprep.subr.bf16.mxu0 0
    %3338 = vmatpush2.bf16.msra.mxu0 0
    %3339 = vmatprep.subr.bf16.mxu0 0
    %3340 = vmatpush2.bf16.msra.mxu0 0
    %3341 = vmatprep.subr.bf16.mxu0 0
    %3342 = vmatpush2.bf16.msra.mxu0 0
    %3343 = vmatprep.subr.bf16.mxu0 0
    %3344 = vmatpush2.bf16.msra.mxu0 0
    %3345 = vmatprep.subr.bf16.mxu0 0
    %3346 = vmatpush2.bf16.msra.mxu0 0
    %3347 = vmatprep.subr.bf16.mxu0 0
    %3348 = vmatpush2.bf16.msra.mxu0 0
    %3349 = vmatprep.subr.bf16.mxu0 0
    %3350 = vmatpush2.bf16.msra.mxu0 0
    %3351 = vmatprep.subr.bf16.mxu0 0
    %3352 = vmatpush2.bf16.msra.mxu0 0
    %3353 = vmatprep.mubr.bf16.mxu0 0
    %3354 = vmatmul.mubr.bf16.gmra.mxu0 %v3319
    %v3355 = vpop.f32.mrf.mxu0
    %v3356 = vadd.f32 0.0, %v3355
    %v3357 = vpop.f32.mrf.mxu0
    %v3358 = vpop.f32.mrf.mxu0
    %v3359 = vadd.f32 0.0, %v3358
    %v3360 = vpop.f32.mrf.mxu0
    %3361 = vdwg.mxu0
    %v3362 = vpack.c.bf16 %v3359, %v3356
    %s3363 = scalar_lea.vmem %s2, 496
    %v3364 = vld [vmem:[%s3363] sm:$0xf]
    %v3365 = vld [vmem:[%s3363 + $0x4] sm:$0xf]
    %v3366 = vld [vmem:[%s3363 + $0x8] sm:$0xf]
    %v3367 = vld [vmem:[%s3363 + $0xc] sm:$0xf]
    %v3372 = vunpack.c.l.b16 %v3364
    %v3373 = vunpack.c.l.b16 %v3365
    %v3374 = vunpack.c.l.b16 %v3366
    %v3375 = vunpack.c.l.b16 %v3367
    %v3376 = vpack.c.b16 %v3373, %v3372
    %v3377 = vpack.c.b16 %v3375, %v3374
    %v3379 = vsel %vm290, %v3362, 0
    %v3382 = vsel %vm290, %v3376, 0
    %v3385 = vsel %vm290, %v3377, 0
    %3387 = vmatprep.subr.bf16.mxu0 0
    %3388 = vmatpush1.bf16.xpose.msra.mxu0 0
    %3389 = vmatprep.subr.bf16.mxu0 0
    %3390 = vmatpush1.bf16.xpose.msra.mxu0 0
    %3391 = vmatprep.subr.bf16.mxu0 0
    %3392 = vmatpush1.bf16.xpose.msra.mxu0 0
    %3393 = vmatprep.subr.bf16.mxu0 0
    %3394 = vmatpush1.bf16.xpose.msra.mxu0 0
    %3395 = vmatprep.subr.bf16.mxu0 0
    %3396 = vmatpush1.bf16.xpose.msra.mxu0 0
    %3397 = vmatprep.subr.bf16.mxu0 0
    %3398 = vmatpush1.bf16.xpose.msra.mxu0 0
    %3399 = vmatprep.subr.bf16.mxu0 0
    %3400 = vmatpush1.bf16.xpose.msra.mxu0 %v3385
    %3401 = vmatprep.subr.bf16.mxu0 0
    %3402 = vmatpush1.bf16.xpose.msra.mxu0 %v3382
    %3403 = vmatprep.subr.bf16.mxu0 0
    %3404 = vmatpush2.bf16.xpose.msra.mxu0 0
    %3405 = vmatprep.subr.bf16.mxu0 0
    %3406 = vmatpush2.bf16.xpose.msra.mxu0 0
    %3407 = vmatprep.subr.bf16.mxu0 0
    %3408 = vmatpush2.bf16.xpose.msra.mxu0 0
    %3409 = vmatprep.subr.bf16.mxu0 0
    %3410 = vmatpush2.bf16.xpose.msra.mxu0 0
    %3411 = vmatprep.subr.bf16.mxu0 0
    %3412 = vmatpush2.bf16.xpose.msra.mxu0 0
    %3413 = vmatprep.subr.bf16.mxu0 0
    %3414 = vmatpush2.bf16.xpose.msra.mxu0 0
    %3415 = vmatprep.subr.bf16.mxu0 0
    %3416 = vmatpush2.bf16.xpose.msra.mxu0 0
    %3417 = vmatprep.subr.bf16.mxu0 0
    %3418 = vmatpush2.bf16.xpose.msra.mxu0 0
    %3419 = vmatprep.mubr.bf16.mxu0 0
    %3420 = vmatmul.mubr.bf16.gmra.mxu0 %v3379
    %v3421 = vpop.f32.mrf.mxu0
    %v3422 = vadd.f32 0.0, %v3421
    %v3423 = vpop.f32.mrf.mxu0
    %v3424 = vpop.f32.mrf.mxu0
    %v3425 = vadd.f32 0.0, %v3424
    %v3426 = vpop.f32.mrf.mxu0
    %3427 = vdwg.mxu0
    %v3428 = vadd.f32 %v3049, %v3422
    %v3429 = vadd.f32 %v3050, %v3425
    %v3430 = vadd.f32 %v1864, %v3428
    %v3431 = vadd.f32 %v1865, %v3429
    %s3432 = scalar_lea.vmem %s4, 9
    %v3433 = vld [vmem:[%s3432] sm:$0x1]
    %v3435 = vlaneseq
    %v3436 = vshrl.u32 %v3435, 7
    %v3437 = vsub.s32 0, %v3436
    %v3438 = vrot.slane %v3433, %v3437
    %v3440 = vadd.f32 %v3430, %v3438
    %v3441 = vadd.f32 %v3431, %v3438
    %s3442 = scalar_lea.vmem %s4, 10
    %v3443 = vld [vmem:[%s3442] sm:$0x1]
    %s3444 = scalar_lea.vmem %s4, 11
    %v3445 = vld [vmem:[%s3444] sm:$0x1]
    %v3446 = vsel %vm43, %v3440, 0.0
    %3447 = vadd.xlane.f32.xlu0 %v3446
    %v3448 = vpop.xlane.xlu0 %3447
    %v3449 = vsel %vm43, %v3441, 0.0
    %3450 = vadd.xlane.f32.xlu0 %v3449
    %v3451 = vpop.xlane.xlu0 %3450
    %v3452 = vmul.f32 %v3448, %v50
    %v3453 = vmul.f32 %v3451, %v50
    %v3454 = vsub.f32 %v3440, %v3452
    %v3455 = vsub.f32 %v3441, %v3453
    %v3456 = vmul.f32 %v3454, %v3454
    %v3457 = vmul.f32 %v3455, %v3455
    %v3458 = vsel %vm43, %v3456, 0.0
    %3459 = vadd.xlane.f32.xlu0 %v3458
    %v3460 = vpop.xlane.xlu0 %3459
    %v3461 = vsel %vm43, %v3457, 0.0
    %3462 = vadd.xlane.f32.xlu0 %v3461
    %v3463 = vpop.xlane.xlu0 %3462
    %v3464 = vmul.f32 %v3460, %v50
    %v3465 = vmul.f32 %v3463, %v50
    %v3466 = vadd.f32 %v3464, 1e-05
    %v3467 = vadd.f32 %v3465, 1e-05
    %v3468 = vrsqrt.pop %v3466
    %v3469 = vrsqrt.pop %v3467
    %v3470 = vmul.f32 %v3454, %v3468
    %v3471 = vmul.f32 %v3455, %v3469
    %v3473 = vlaneseq
    %v3474 = vshrl.u32 %v3473, 7
    %v3475 = vsub.s32 0, %v3474
    %v3476 = vrot.slane %v3443, %v3475
    %v3478 = vmul.f32 %v3470, %v3476
    %v3479 = vmul.f32 %v3471, %v3476
    %v3481 = vlaneseq
    %v3482 = vshrl.u32 %v3481, 7
    %v3483 = vsub.s32 0, %v3482
    %v3484 = vrot.slane %v3445, %v3483
    %v3486 = vadd.f32 %v3478, %v3484
    %v3487 = vadd.f32 %v3479, %v3484
    %v3488 = vpack.c.bf16 %v3487, %v3486
    %s3489 = scalar_lea.vmem %s5, 16
    %v3490 = vld [vmem:[%s3489] sm:$0xf]
    %v3491 = vld [vmem:[%s3489 + $0x4] sm:$0xf]
    %v3492 = vld [vmem:[%s3489 + $0x8] sm:$0xf]
    %v3493 = vld [vmem:[%s3489 + $0xc] sm:$0xf]
    %s3494 = scalar_lea.vmem %s4, 13
    %v3495 = vld [vmem:[%s3494] sm:$0x1]
    %v3497 = vlaneseq
    %v3498 = vshrl.u32 %v3497, 7
    %v3499 = vsub.s32 0, %v3498
    %v3500 = vrot.slane %v3495, %v3499
    %v3506 = vunpack.c.l.b16 %v3490
    %v3507 = vunpack.c.l.b16 %v3491
    %v3508 = vunpack.c.l.b16 %v3492
    %v3509 = vunpack.c.l.b16 %v3493
    %v3510 = vpack.c.b16 %v3507, %v3506
    %v3511 = vpack.c.b16 %v3509, %v3508
    %v3515 = vsel %vm43, %v3488, 0
    %3517 = vmatprep.subr.bf16.mxu0 0
    %3518 = vmatpush1.bf16.msra.mxu0 0
    %3519 = vmatprep.subr.bf16.mxu0 0
    %3520 = vmatpush1.bf16.msra.mxu0 0
    %3521 = vmatprep.subr.bf16.mxu0 0
    %3522 = vmatpush1.bf16.msra.mxu0 0
    %3523 = vmatprep.subr.bf16.mxu0 0
    %3524 = vmatpush1.bf16.msra.mxu0 0
    %3525 = vmatprep.subr.bf16.mxu0 0
    %3526 = vmatpush1.bf16.msra.mxu0 0
    %3527 = vmatprep.subr.bf16.mxu0 0
    %3528 = vmatpush1.bf16.msra.mxu0 0
    %3529 = vmatprep.subr.bf16.mxu0 0
    %3530 = vmatpush1.bf16.msra.mxu0 %v3511
    %3531 = vmatprep.subr.bf16.mxu0 0
    %3532 = vmatpush1.bf16.msra.mxu0 %v3510
    %3533 = vmatprep.subr.bf16.mxu0 0
    %3534 = vmatpush2.bf16.msra.mxu0 0
    %3535 = vmatprep.subr.bf16.mxu0 0
    %3536 = vmatpush2.bf16.msra.mxu0 0
    %3537 = vmatprep.subr.bf16.mxu0 0
    %3538 = vmatpush2.bf16.msra.mxu0 0
    %3539 = vmatprep.subr.bf16.mxu0 0
    %3540 = vmatpush2.bf16.msra.mxu0 0
    %3541 = vmatprep.subr.bf16.mxu0 0
    %3542 = vmatpush2.bf16.msra.mxu0 0
    %3543 = vmatprep.subr.bf16.mxu0 0
    %3544 = vmatpush2.bf16.msra.mxu0 0
    %3545 = vmatprep.subr.bf16.mxu0 0
    %3546 = vmatpush2.bf16.msra.mxu0 0
    %3547 = vmatprep.subr.bf16.mxu0 0
    %3548 = vmatpush2.bf16.msra.mxu0 0
    %3549 = vmatprep.mubr.bf16.mxu0 0
    %3550 = vmatmul.mubr.bf16.gmra.mxu0 %v3515
    %v3551 = vpop.f32.mrf.mxu0
    %v3552 = vadd.f32 %v3500, %v3551
    %v3553 = vpop.f32.mrf.mxu0
    %v3554 = vpop.f32.mrf.mxu0
    %v3555 = vadd.f32 %v3500, %v3554
    %v3556 = vpop.f32.mrf.mxu0
    %3557 = vdwg.mxu0
    %v3558 = vmul.f32 %v3552, 0.5
    %v3559 = vmul.f32 %v3555, 0.5
    %v3560 = vmul.f32 %v3552, %v3552
    %v3561 = vmul.f32 %v3555, %v3555
    %v3562 = vmul.f32 %v3560, %v3552
    %v3563 = vmul.f32 %v3561, %v3555
    %v3564 = vmul.f32 %v3562, 0.044715
    %v3565 = vmul.f32 %v3563, 0.044715
    %v3566 = vadd.f32 %v3552, %v3564
    %v3567 = vadd.f32 %v3555, %v3565
    %v3568 = vmul.f32 %v3566, 0.7978846
    %v3569 = vmul.f32 %v3567, 0.7978846
    %v3570 = vtanh.pop %v3568
    %v3571 = vtanh.pop %v3569
    %v3572 = vadd.f32 %v3570, 1.0
    %v3573 = vadd.f32 %v3571, 1.0
    %v3574 = vmul.f32 %v3558, %v3572
    %v3575 = vmul.f32 %v3559, %v3573
    %v3576 = vpack.c.bf16 %v3575, %v3574
    %s3577 = scalar_lea.vmem %s6, 64
    %v3578 = vld [vmem:[%s3577] sm:$0xf]
    %v3579 = vld [vmem:[%s3577 + $0x4] sm:$0xf]
    %v3580 = vld [vmem:[%s3577 + $0x8] sm:$0xf]
    %v3581 = vld [vmem:[%s3577 + $0xc] sm:$0xf]
    %v3582 = vld [vmem:[%s3577 + $0x10] sm:$0xf]
    %v3583 = vld [vmem:[%s3577 + $0x14] sm:$0xf]
    %v3584 = vld [vmem:[%s3577 + $0x18] sm:$0xf]
    %v3585 = vld [vmem:[%s3577 + $0x1c] sm:$0xf]
    %v3586 = vld [vmem:[%s3577 + $0x20] sm:$0xf]
    %v3587 = vld [vmem:[%s3577 + $0x24] sm:$0xf]
    %v3588 = vld [vmem:[%s3577 + $0x28] sm:$0xf]
    %v3589 = vld [vmem:[%s3577 + $0x2c] sm:$0xf]
    %v3590 = vld [vmem:[%s3577 + $0x30] sm:$0xf]
    %v3591 = vld [vmem:[%s3577 + $0x34] sm:$0xf]
    %v3592 = vld [vmem:[%s3577 + $0x38] sm:$0xf]
    %v3593 = vld [vmem:[%s3577 + $0x3c] sm:$0xf]
    %v3610 = vunpack.c.l.b16 %v3578
    %v3611 = vunpack.c.l.b16 %v3579
    %v3612 = vunpack.c.l.b16 %v3580
    %v3613 = vunpack.c.l.b16 %v3581
    %v3614 = vunpack.c.l.b16 %v3582
    %v3615 = vunpack.c.l.b16 %v3583
    %v3616 = vunpack.c.l.b16 %v3584
    %v3617 = vunpack.c.l.b16 %v3585
    %v3618 = vunpack.c.l.b16 %v3586
    %v3619 = vunpack.c.l.b16 %v3587
    %v3620 = vunpack.c.l.b16 %v3588
    %v3621 = vunpack.c.l.b16 %v3589
    %v3622 = vunpack.c.l.b16 %v3590
    %v3623 = vunpack.c.l.b16 %v3591
    %v3624 = vunpack.c.l.b16 %v3592
    %v3625 = vunpack.c.l.b16 %v3593
    %v3626 = vpack.c.b16 %v3611, %v3610
    %v3627 = vpack.c.b16 %v3613, %v3612
    %v3628 = vpack.c.b16 %v3615, %v3614
    %v3629 = vpack.c.b16 %v3617, %v3616
    %v3630 = vpack.c.b16 %v3619, %v3618
    %v3631 = vpack.c.b16 %v3621, %v3620
    %v3632 = vpack.c.b16 %v3623, %v3622
    %v3633 = vpack.c.b16 %v3625, %v3624
    %3642 = vmatprep.subr.bf16.mxu0 0
    %3643 = vmatpush1.bf16.msra.mxu0 %v3633
    %3644 = vmatprep.subr.bf16.mxu0 0
    %3645 = vmatpush1.bf16.msra.mxu0 %v3632
    %3646 = vmatprep.subr.bf16.mxu0 0
    %3647 = vmatpush1.bf16.msra.mxu0 %v3631
    %3648 = vmatprep.subr.bf16.mxu0 0
    %3649 = vmatpush1.bf16.msra.mxu0 %v3630
    %3650 = vmatprep.subr.bf16.mxu0 0
    %3651 = vmatpush1.bf16.msra.mxu0 %v3629
    %3652 = vmatprep.subr.bf16.mxu0 0
    %3653 = vmatpush1.bf16.msra.mxu0 %v3628
    %3654 = vmatprep.subr.bf16.mxu0 0
    %3655 = vmatpush1.bf16.msra.mxu0 %v3627
    %3656 = vmatprep.subr.bf16.mxu0 0
    %3657 = vmatpush1.bf16.msra.mxu0 %v3626
    %3658 = vmatprep.subr.bf16.mxu0 0
    %3659 = vmatpush2.bf16.msra.mxu0 0
    %3660 = vmatprep.subr.bf16.mxu0 0
    %3661 = vmatpush2.bf16.msra.mxu0 0
    %3662 = vmatprep.subr.bf16.mxu0 0
    %3663 = vmatpush2.bf16.msra.mxu0 0
    %3664 = vmatprep.subr.bf16.mxu0 0
    %3665 = vmatpush2.bf16.msra.mxu0 0
    %3666 = vmatprep.subr.bf16.mxu0 0
    %3667 = vmatpush2.bf16.msra.mxu0 0
    %3668 = vmatprep.subr.bf16.mxu0 0
    %3669 = vmatpush2.bf16.msra.mxu0 0
    %3670 = vmatprep.subr.bf16.mxu0 0
    %3671 = vmatpush2.bf16.msra.mxu0 0
    %3672 = vmatprep.subr.bf16.mxu0 0
    %3673 = vmatpush2.bf16.msra.mxu0 0
    %3674 = vmatprep.mubr.bf16.mxu0 0
    %3675 = vmatmul.mubr.bf16.gmra.mxu0 %v3576
    %v3676 = vpop.f32.mrf.mxu0
    %v3677 = vadd.f32 0.0, %v3676
    %v3678 = vpop.f32.mrf.mxu0
    %v3679 = vpop.f32.mrf.mxu0
    %v3680 = vadd.f32 0.0, %v3679
    %v3681 = vpop.f32.mrf.mxu0
    %3682 = vdwg.mxu0
    %v3683 = vadd.f32 %v3440, %v3677
    %v3684 = vadd.f32 %v3441, %v3680
    %s3685 = scalar_lea.vmem %s4, 12
    %v3686 = vld [vmem:[%s3685] sm:$0x1]
    %v3688 = vlaneseq
    %v3689 = vshrl.u32 %v3688, 7
    %v3690 = vsub.s32 0, %v3689
    %v3691 = vrot.slane %v3686, %v3690
    %v3693 = vadd.f32 %v3683, %v3691
    %v3694 = vadd.f32 %v3684, %v3691
    %v3695 = vld [vmem:[%s7] sm:$0x1]
    %s3696 = scalar_lea.vmem %s7, 1
    %v3697 = vld [vmem:[%s3696] sm:$0x1]
    %v3698 = vsel %vm43, %v3693, 0.0
    %3699 = vadd.xlane.f32.xlu0 %v3698
    %v3700 = vpop.xlane.xlu0 %3699
    %v3701 = vsel %vm43, %v3694, 0.0
    %3702 = vadd.xlane.f32.xlu0 %v3701
    %v3703 = vpop.xlane.xlu0 %3702
    %v3704 = vmul.f32 %v3700, %v50
    %v3705 = vmul.f32 %v3703, %v50
    %v3706 = vsub.f32 %v3693, %v3704
    %v3707 = vsub.f32 %v3694, %v3705
    %v3708 = vmul.f32 %v3706, %v3706
    %v3709 = vmul.f32 %v3707, %v3707
    %v3710 = vsel %vm43, %v3708, 0.0
    %3711 = vadd.xlane.f32.xlu0 %v3710
    %v3712 = vpop.xlane.xlu0 %3711
    %v3713 = vsel %vm43, %v3709, 0.0
    %3714 = vadd.xlane.f32.xlu0 %v3713
    %v3715 = vpop.xlane.xlu0 %3714
    %v3716 = vmul.f32 %v3712, %v50
    %v3717 = vmul.f32 %v3715, %v50
    %v3718 = vadd.f32 %v3716, 1e-05
    %v3719 = vadd.f32 %v3717, 1e-05
    %v3720 = vrsqrt.pop %v3718
    %v3721 = vrsqrt.pop %v3719
    %v3722 = vmul.f32 %v3706, %v3720
    %v3723 = vmul.f32 %v3707, %v3721
    %v3725 = vlaneseq
    %v3726 = vshrl.u32 %v3725, 7
    %v3727 = vsub.s32 0, %v3726
    %v3728 = vrot.slane %v3695, %v3727
    %v3730 = vmul.f32 %v3722, %v3728
    %v3731 = vmul.f32 %v3723, %v3728
    %v3733 = vlaneseq
    %v3734 = vshrl.u32 %v3733, 7
    %v3735 = vsub.s32 0, %v3734
    %v3736 = vrot.slane %v3697, %v3735
    %v3738 = vadd.f32 %v3730, %v3736
    %v3739 = vadd.f32 %v3731, %v3736
    %v3740 = vpack.c.bf16 %v3739, %v3738
    %v3741 = vlaneseq
    %v3742 = vshrl.u32 %v3741, 7
    %v3743 = vlaneseq
    %v3744 = vand.u32 %v3743, 127
    %v3745 = vmul.u32 %v3742, 8
    %vm3746 = vcmp.ge.s32.totalorder %v3744, %v3745
    %v3747 = vadd.s32 %v3742, 1
    %v3748 = vmul.u32 %v3747, 8
    %vm3749 = vcmp.lt.s32.totalorder %v3744, %v3748
    %vm3750 = vmand %vm3746, %vm3749
    %v3751 = vsel %vm3750, 0.125, 0.0
    %v3752 = vpack.c.bf16 %v3751, %v3751
    %v3754 = vsel %vm346, %v3752, 0
    %3756 = vmatprep.subr.bf16.mxu0 0
    %3757 = vmatpush1.bf16.msra.mxu0 0
    %3758 = vmatprep.subr.bf16.mxu0 0
    %3759 = vmatpush1.bf16.msra.mxu0 0
    %3760 = vmatprep.subr.bf16.mxu0 0
    %3761 = vmatpush1.bf16.msra.mxu0 0
    %3762 = vmatprep.subr.bf16.mxu0 0
    %3763 = vmatpush1.bf16.msra.mxu0 0
    %3764 = vmatprep.subr.bf16.mxu0 0
    %3765 = vmatpush1.bf16.msra.mxu0 0
    %3766 = vmatprep.subr.bf16.mxu0 0
    %3767 = vmatpush1.bf16.msra.mxu0 0
    %3768 = vmatprep.subr.bf16.mxu0 0
    %3769 = vmatpush1.bf16.msra.mxu0 0
    %3770 = vmatprep.subr.bf16.mxu0 0
    %3771 = vmatpush1.bf16.msra.mxu0 %v3740
    %3772 = vmatprep.subr.bf16.mxu0 0
    %3773 = vmatpush2.bf16.msra.mxu0 0
    %3774 = vmatprep.subr.bf16.mxu0 0
    %3775 = vmatpush2.bf16.msra.mxu0 0
    %3776 = vmatprep.subr.bf16.mxu0 0
    %3777 = vmatpush2.bf16.msra.mxu0 0
    %3778 = vmatprep.subr.bf16.mxu0 0
    %3779 = vmatpush2.bf16.msra.mxu0 0
    %3780 = vmatprep.subr.bf16.mxu0 0
    %3781 = vmatpush2.bf16.msra.mxu0 0
    %3782 = vmatprep.subr.bf16.mxu0 0
    %3783 = vmatpush2.bf16.msra.mxu0 0
    %3784 = vmatprep.subr.bf16.mxu0 0
    %3785 = vmatpush2.bf16.msra.mxu0 0
    %3786 = vmatprep.subr.bf16.mxu0 0
    %3787 = vmatpush2.bf16.msra.mxu0 0
    %3788 = vmatprep.mubr.bf16.mxu0 0
    %3789 = vmatmul.mubr.bf16.gmra.mxu0 %v3754
    %v3790 = vpop.f32.mrf.mxu0
    %v3791 = vadd.f32 0.0, %v3790
    %v3792 = vpop.f32.mrf.mxu0
    %v3793 = vpop.f32.mrf.mxu0
    %v3794 = vpop.f32.mrf.mxu0
    %3795 = vdwg.mxu0
    %v3796 = vld [vmem:[%s8] sm:$0xf]
    %v3797 = vld [vmem:[%s8 + $0x4] sm:$0xf]
    %v3798 = vld [vmem:[%s8 + $0x8] sm:$0xf]
    %v3799 = vld [vmem:[%s8 + $0xc] sm:$0xf]
    %s3800 = scalar_lea.vmem %s8, 16
    %v3801 = vld [vmem:[%s3800] sm:$0xf]
    %v3802 = vld [vmem:[%s3800 + $0x4] sm:$0xf]
    %s3803 = scalar_lea.vmem %s7, 2
    %v3804 = vld [vmem:[%s3803] sm:$0x1]
    %s3805 = scalar_lea.vmem %s7, 3
    %v3806 = vld [vmem:[%s3805] sm:$0x1]
    %v3807 = vpack.c.bf16 %v3791, %v3791
    %v3809 = vlaneseq
    %v3810 = vshrl.u32 %v3809, 7
    %v3811 = vsub.s32 0, %v3810
    %v3812 = vrot.slane %v3804, %v3811
    %v3818 = vunpack.c.l.b16 %v3796
    %v3819 = vunpack.c.l.b16 %v3797
    %v3820 = vunpack.c.l.b16 %v3798
    %v3821 = vunpack.c.l.b16 %v3799
    %v3822 = vpack.c.b16 %v3819, %v3818
    %v3823 = vpack.c.b16 %v3821, %v3820
    %v3827 = vsel %vm43, %v3807, 0
    %3829 = vmatprep.subr.bf16.mxu0 0
    %3830 = vmatpush1.bf16.msra.mxu0 0
    %3831 = vmatprep.subr.bf16.mxu0 0
    %3832 = vmatpush1.bf16.msra.mxu0 0
    %3833 = vmatprep.subr.bf16.mxu0 0
    %3834 = vmatpush1.bf16.msra.mxu0 0
    %3835 = vmatprep.subr.bf16.mxu0 0
    %3836 = vmatpush1.bf16.msra.mxu0 0
    %3837 = vmatprep.subr.bf16.mxu0 0
    %3838 = vmatpush1.bf16.msra.mxu0 0
    %3839 = vmatprep.subr.bf16.mxu0 0
    %3840 = vmatpush1.bf16.msra.mxu0 0
    %3841 = vmatprep.subr.bf16.mxu0 0
    %3842 = vmatpush1.bf16.msra.mxu0 %v3823
    %3843 = vmatprep.subr.bf16.mxu0 0
    %3844 = vmatpush1.bf16.msra.mxu0 %v3822
    %3845 = vmatprep.subr.bf16.mxu0 0
    %3846 = vmatpush2.bf16.msra.mxu0 0
    %3847 = vmatprep.subr.bf16.mxu0 0
    %3848 = vmatpush2.bf16.msra.mxu0 0
    %3849 = vmatprep.subr.bf16.mxu0 0
    %3850 = vmatpush2.bf16.msra.mxu0 0
    %3851 = vmatprep.subr.bf16.mxu0 0
    %3852 = vmatpush2.bf16.msra.mxu0 0
    %3853 = vmatprep.subr.bf16.mxu0 0
    %3854 = vmatpush2.bf16.msra.mxu0 0
    %3855 = vmatprep.subr.bf16.mxu0 0
    %3856 = vmatpush2.bf16.msra.mxu0 0
    %3857 = vmatprep.subr.bf16.mxu0 0
    %3858 = vmatpush2.bf16.msra.mxu0 0
    %3859 = vmatprep.subr.bf16.mxu0 0
    %3860 = vmatpush2.bf16.msra.mxu0 0
    %3861 = vmatprep.mubr.bf16.mxu0 0
    %3862 = vmatmul.mubr.bf16.gmra.mxu0 %v3827
    %v3863 = vpop.f32.mrf.mxu0
    %v3864 = vadd.f32 %v3812, %v3863
    %v3865 = vpop.f32.mrf.mxu0
    %v3866 = vpop.f32.mrf.mxu0
    %v3867 = vpop.f32.mrf.mxu0
    %3868 = vdwg.mxu0
    %v3869 = vmax.f32 %v3864, 0.0
    %v3870 = vpack.c.bf16 %v3869, %v3869
    %v3872 = vlaneseq
    %v3873 = vshrl.u32 %v3872, 7
    %v3874 = vsub.s32 0, %v3873
    %v3875 = vrot.slane %v3806, %v3874
    %v3879 = vunpack.c.l.b16 %v3801
    %v3880 = vunpack.c.l.b16 %v3802
    %v3881 = vpack.c.b16 %v3880, %v3879
    %v3884 = vsel %vm346, %v3870, 0
    %3886 = vmatprep.subr.bf16.mxu0 0
    %3887 = vmatpush1.bf16.msra.mxu0 0
    %3888 = vmatprep.subr.bf16.mxu0 0
    %3889 = vmatpush1.bf16.msra.mxu0 0
    %3890 = vmatprep.subr.bf16.mxu0 0
    %3891 = vmatpush1.bf16.msra.mxu0 0
    %3892 = vmatprep.subr.bf16.mxu0 0
    %3893 = vmatpush1.bf16.msra.mxu0 0
    %3894 = vmatprep.subr.bf16.mxu0 0
    %3895 = vmatpush1.bf16.msra.mxu0 0
    %3896 = vmatprep.subr.bf16.mxu0 0
    %3897 = vmatpush1.bf16.msra.mxu0 0
    %3898 = vmatprep.subr.bf16.mxu0 0
    %3899 = vmatpush1.bf16.msra.mxu0 0
    %3900 = vmatprep.subr.bf16.mxu0 0
    %3901 = vmatpush1.bf16.msra.mxu0 %v3881
    %3902 = vmatprep.subr.bf16.mxu0 0
    %3903 = vmatpush2.bf16.msra.mxu0 0
    %3904 = vmatprep.subr.bf16.mxu0 0
    %3905 = vmatpush2.bf16.msra.mxu0 0
    %3906 = vmatprep.subr.bf16.mxu0 0
    %3907 = vmatpush2.bf16.msra.mxu0 0
    %3908 = vmatprep.subr.bf16.mxu0 0
    %3909 = vmatpush2.bf16.msra.mxu0 0
    %3910 = vmatprep.subr.bf16.mxu0 0
    %3911 = vmatpush2.bf16.msra.mxu0 0
    %3912 = vmatprep.subr.bf16.mxu0 0
    %3913 = vmatpush2.bf16.msra.mxu0 0
    %3914 = vmatprep.subr.bf16.mxu0 0
    %3915 = vmatpush2.bf16.msra.mxu0 0
    %3916 = vmatprep.subr.bf16.mxu0 0
    %3917 = vmatpush2.bf16.msra.mxu0 0
    %3918 = vmatprep.mubr.bf16.mxu0 0
    %3919 = vmatmul.mubr.bf16.gmra.mxu0 %v3884
    %v3920 = vpop.f32.mrf.mxu0
    %v3921 = vadd.f32 %v3875, %v3920
    %v3922 = vpop.f32.mrf.mxu0
    %v3923 = vpop.f32.mrf.mxu0
    %v3924 = vpop.f32.mrf.mxu0
    %3925 = vdwg.mxu0
    %vm3926 = vcmask 25600
    %v3927 = vsel %vm3926, %v3921, -inf
    %3928 = vmax.xlane.f32.xlu0 %v3927
    %v3929 = vpop.xlane.xlu0 %3928
    %v3930 = vsub.f32 %v3921, %v3929
    %v3931 = vmul.f32 %v3930, 1.442695
    %v3932 = vpow.pop %v3931
    %v3933 = vsel %vm3926, %v3932, 0.0
    %3934 = vadd.xlane.f32.xlu0 %v3933
    %v3935 = vpop.xlane.xlu0 %3934
    %v3936 = vrcp.pop %v3935
    %v3937 = vmul.f32 %v3932, %v3936
    %3938 = vst.msk [vmem:[#allocation2] sm:$0x3] %vm3926, %v3937
    // Predicated region
    $region38: #{_lambda_.1} parent=1 // pred_check
      _
    $region39: #{_lambda_.1} parent=1 // pred_check_branch
      %3940 = sbr.rel (0) target = $region41
    $region40: #{_lambda_.1} parent=1 // pred_region
      %s3942 = ssub.s32 32, 32
      %3943 = vsyncadd [#allocation3], %s3942
      %s3945 = sshll.u32 [#allocation2], 4
      %s3946 = int_to_ptr.vmem [resolvable:$true] %s3945
      %3948 = dma.vmem_to_hbm [thread:$0]  %s3946, 32, %s9, [#allocation3]
    $region41: #{_lambda_.1} parent=1 // pred_fallthru
      _
    // Predicated region
    $region42: #{_lambda_.1} parent=1 // pred_check
      _
    $region43: #{_lambda_.1} parent=1 // pred_check_branch
      %3950 = sbr.rel (0) target = $region45
    $region44: #{_lambda_.1} parent=1 // pred_region
      _
    $region45: #{_lambda_.1} parent=1 // pred_fallthru
      _
    // Predicated region
    $region46: #{_lambda_.1} parent=1 // pred_check
      _
    $region47: #{_lambda_.1} parent=1 // pred_check_branch
      %3952 = sbr.rel (0) target = $region49
    $region48: #{_lambda_.1} parent=1 // pred_region
      %3953 = dma.done [#allocation3], 32
    $region49: #{_lambda_.1} parent=1 // pred_fallthru
      _
    // Predicated region
    $region50: #{_lambda_.1} parent=1 // pred_check
      _
    $region51: #{_lambda_.1} parent=1 // pred_check_branch
      %3955 = sbr.rel (0) target = $region53
    $region52: #{_lambda_.1} parent=1 // pred_region
      _
    $region53: #{_lambda_.1} parent=1 // pred_fallthru
      _
    %3956 = vsyncpa [#allocation3], 1

</llo_original>
